<compile_context>
chip_gen: v7x
topology: tpu7x:2x2x1
jax: 0.10.0
libtpu: 0.0.40
codegen_flags: <defaults>
</compile_context>

<pallas_src>
import math
from functools import partial

import jax
import jax.numpy as jnp
from jax import lax
from jax.experimental import pallas as pl
from jax.experimental.pallas import tpu as pltpu

EPS = 1e-5
NEG_INF = -1e30                      # large finite negative (robust masking)


def _vmem_limit_bytes():
    """Generation-aware scoped-VMEM budget (leave headroom below physical)."""
    cap = 128 * 1024 * 1024
    try:
        info = pltpu.get_tpu_info()
        cap = int(getattr(info, "vmem_capacity_bytes", cap) or cap)
    except Exception:
        pass
    # ~75% of physical, capped: ~48 MiB on v7x (64 MiB VMEM), ~96 MiB on v5e/v6e.
    return max(32 * 1024 * 1024, min(int(cap * 3 // 4), 96 * 1024 * 1024))


VMEM_LIMIT = _vmem_limit_bytes()


# ----------------------------------------------------------------------------
# small helpers
# ----------------------------------------------------------------------------
def _rmsnorm(x, w):
    # x: (T, D) f32, w: (D,) f32   --  x / sqrt(mean(x^2) + eps) * w
    ms = jnp.mean(x * x, axis=-1, keepdims=True)
    return x * lax.rsqrt(ms + EPS) * w


def _gelu(x):
    return x * 0.5 * (1.0 + lax.erf(x * (1.0 / math.sqrt(2.0))))


def _lane_tile(dim, target):
    """Tile size along a lane (last) dim: multiple of 128 dividing dim, else full."""
    if dim % 128 == 0 and dim > target:
        t = max(128, (min(target, dim) // 128) * 128)
        while dim % t:
            t -= 128
        return t
    return dim


def _sub_tile(dim, target):
    """Tile size along a sublane (2nd-minor) dim: multiple of 8 dividing dim, else full."""
    if dim % 8 == 0 and dim > target:
        t = max(8, (min(target, dim) // 8) * 8)
        while dim % t:
            t -= 8
        return t
    return dim


def _head_block(num_heads):
    """Heads batched per flash-attention grid step (largest divisor of H <= 8)."""
    hb = 1
    for c in range(1, min(num_heads, 8) + 1):
        if num_heads % c == 0:
            hb = c
    return hb


def _params(*semantics):
    return pltpu.CompilerParams(dimension_semantics=semantics,
                                vmem_limit_bytes=VMEM_LIMIT)


# ----------------------------------------------------------------------------
# 0) RMSnorm -> bf16 normalized activations (used for ln1 and ln_final)
# ----------------------------------------------------------------------------
def rmsnorm_kernel(x_ref, g_ref, o_ref):
    o_ref[0] = _rmsnorm(x_ref[0], g_ref[0]).astype(o_ref.dtype)


def run_rmsnorm(x, gain, *, ts):
    B, S, D = x.shape
    return pl.pallas_call(
        rmsnorm_kernel,
        out_shape=jax.ShapeDtypeStruct((B, S, D), jnp.bfloat16),
        grid_spec=pltpu.PrefetchScalarGridSpec(
            num_scalar_prefetch=0,
            grid=(B, S // ts),
            in_specs=[pl.BlockSpec((1, ts, D), lambda b, s: (b, s, 0)),
                      pl.BlockSpec((1, D), lambda b, s: (0, 0))],
            out_specs=pl.BlockSpec((1, ts, D), lambda b, s: (b, s, 0)),
        ),
        compiler_params=_params("parallel", "parallel"),
        cost_estimate=pl.CostEstimate(
            flops=3 * B * S * D,
            transcendentals=B * S,
            bytes_accessed=4 * B * S * D + 2 * B * S * D + 4 * D),
    )(x, gain)


# ----------------------------------------------------------------------------
# 1) Q/K/V projections on pre-normalized bf16 input, weight axis OUTERMOST
#    (each weight tile is streamed from HBM exactly once)
# ----------------------------------------------------------------------------
def qkv_kernel(h_ref, wq_ref, wk_ref, wv_ref, q_ref, k_ref, v_ref):
    h = h_ref[0]                                                      # (ts, D) bf16
    q_ref[0] = jnp.dot(h, wq_ref[...],
                       preferred_element_type=jnp.float32).astype(q_ref.dtype)
    k_ref[0] = jnp.dot(h, wk_ref[...],
                       preferred_element_type=jnp.float32).astype(k_ref.dtype)
    v_ref[0] = jnp.dot(h, wv_ref[...],
                       preferred_element_type=jnp.float32).astype(v_ref.dtype)


def run_qkv(h, wq, wk, wv, *, ts, td):
    B, S, D = h.shape
    grid = (D // td, B, S // ts)                       # weight axis outermost
    w_spec = pl.BlockSpec((D, td), lambda f, b, s: (0, f))
    x_spec = pl.BlockSpec((1, ts, D), lambda f, b, s: (b, s, 0))
    out_spec = pl.BlockSpec((1, ts, td), lambda f, b, s: (b, s, f))
    return pl.pallas_call(
        qkv_kernel,
        out_shape=tuple(jax.ShapeDtypeStruct((B, S, D), jnp.bfloat16) for _ in range(3)),
        grid_spec=pltpu.PrefetchScalarGridSpec(
            num_scalar_prefetch=0,
            grid=grid,
            in_specs=[x_spec, w_spec, w_spec, w_spec],
            out_specs=[out_spec, out_spec, out_spec],
        ),
        compiler_params=_params("parallel", "parallel", "parallel"),
        cost_estimate=pl.CostEstimate(
            flops=6 * B * S * D * D,
            transcendentals=0,
            bytes_accessed=2 * B * S * D * (D // td) + 6 * D * D + 6 * B * S * D),
    )(h, wq, wk, wv)


# ----------------------------------------------------------------------------
# 2) causal flash attention (online softmax, hb heads batched per grid step)
# ----------------------------------------------------------------------------
def flash_attn_kernel(q_ref, k_ref, v_ref, o_ref, m_sc, l_sc, acc_sc):
    q_blk = pl.program_id(2)
    kv_blk = pl.program_id(3)
    tq = q_ref.shape[2]
    tk = k_ref.shape[2]

    @pl.when(kv_blk == 0)
    def _():
        m_sc[...] = jnp.full(m_sc.shape, -jnp.inf, m_sc.dtype)
        l_sc[...] = jnp.zeros(l_sc.shape, l_sc.dtype)
        acc_sc[...] = jnp.zeros(acc_sc.shape, acc_sc.dtype)

    def _update(masked):
        q = q_ref[0]                                   # (hb, tq, dk) bf16 (Q pre-scaled)
        k = k_ref[0]                                   # (hb, tk, dk) bf16
        v = v_ref[0]
        s = jnp.einsum("hqd,hkd->hqk", q, k, preferred_element_type=jnp.float32)
        if masked:                                     # only the diagonal block needs it
            q_pos = q_blk * tq + lax.broadcasted_iota(jnp.int32, s.shape, 1)
            k_pos = kv_blk * tk + lax.broadcasted_iota(jnp.int32, s.shape, 2)
            s = jnp.where(k_pos > q_pos, NEG_INF, s)   # triu(diag=1) mask
        m_prev = m_sc[...]
        m_new = jnp.maximum(m_prev, jnp.max(s, axis=-1, keepdims=True))
        alpha = jnp.exp(m_prev - m_new)
        p = jnp.exp(s - m_new)
        l_sc[...] = alpha * l_sc[...] + jnp.sum(p, axis=-1, keepdims=True)
        acc_sc[...] = alpha * acc_sc[...] + jnp.einsum(
            "hqk,hkd->hqd", p.astype(jnp.bfloat16), v,
            preferred_element_type=jnp.float32)
        m_sc[...] = m_new

    # strictly-below-diagonal kv blocks: no mask needed
    @pl.when(kv_blk < q_blk)
    def _():
        _update(masked=False)

    # the diagonal block (tq == tk): apply the causal mask
    @pl.when(kv_blk == q_blk)
    def _():
        _update(masked=True)

    # kv blocks strictly above the diagonal are skipped entirely (and their DMA is
    # avoided by the clamped kv index_map below).

    @pl.when(kv_blk == pl.num_programs(3) - 1)
    def _():
        o_ref[0] = (acc_sc[...] * pl.reciprocal(l_sc[...], approx=True)
                    ).astype(o_ref.dtype)


def run_flash_attention(q, k, v, *, tq, tk, hb):
    B, H, S, dk = q.shape
    # diagonal-block guarantee (every query row sees >=1 unmasked key) needs tq == tk
    assert tq == tk, "flash attention requires tq == tk"
    assert H % hb == 0
    grid = (B, H // hb, S // tq, S // tk)
    q_spec = pl.BlockSpec((1, hb, tq, dk), lambda b, h, i, j: (b, h, i, 0))
    # clamp j -> min(j, i): above-diagonal steps alias the previous block, so the
    # (unused) K/V tiles are not re-fetched from HBM.
    kv_spec = pl.BlockSpec((1, hb, tk, dk),
                           lambda b, h, i, j: (b, h, jnp.minimum(j, i), 0))
    o_spec = pl.BlockSpec((1, hb, tq, dk), lambda b, h, i, j: (b, h, i, 0))
    kv_passes = max(1, (S // tq + 1) // 2)             # causal: ~half the q-block passes
    return pl.pallas_call(
        flash_attn_kernel,
        out_shape=jax.ShapeDtypeStruct((B, H, S, dk), jnp.bfloat16),
        grid_spec=pltpu.PrefetchScalarGridSpec(
            num_scalar_prefetch=0,
            grid=grid,
            in_specs=[q_spec, kv_spec, kv_spec],
            out_specs=o_spec,
            scratch_shapes=[
                pltpu.VMEM((hb, tq, 1), jnp.float32),   # running max
                pltpu.VMEM((hb, tq, 1), jnp.float32),   # running denom
                pltpu.VMEM((hb, tq, dk), jnp.float32),  # running context
            ],
        ),
        compiler_params=_params("parallel", "parallel", "parallel", "arbitrary"),
        cost_estimate=pl.CostEstimate(
            flops=2 * B * H * S * S * dk,               # causal => ~half of dense
            transcendentals=B * H * S * S // 2,
            bytes_accessed=4 * B * H * S * dk + 4 * B * H * S * dk * kv_passes),
    )(q, k, v)


# ----------------------------------------------------------------------------
# 3) output projection + residual + RMSnorm + GELU FFN + residual
#    (FFN weights tiled over d_ff; output block doubles as the accumulator)
# ----------------------------------------------------------------------------
def post_kernel(x_ref, ctx_ref, ln2_ref, wo_ref, w1_ref, w2_ref, o_ref, h2_sc):
    # TODO(synk): at very large d_model the resident (D, D) W_o (plus double-buffered
    # FFN tiles) can exceed v7x's 64 MiB VMEM; at that scale W_o needs its own
    # K-tiled contraction axis (or a separate weight-outermost projection kernel).
    @pl.when(pl.program_id(2) == 0)
    def _():
        attn_out = jnp.dot(ctx_ref[0], wo_ref[...], preferred_element_type=jnp.float32)
        x1 = x_ref[0] + attn_out                                # residual 1 (dropout p=0)
        h2_sc[...] = _rmsnorm(x1, ln2_ref[0]).astype(jnp.bfloat16)
        o_ref[0] = x1

    up = jnp.dot(h2_sc[...], w1_ref[...], preferred_element_type=jnp.float32)  # (ts, tff)
    g = _gelu(up).astype(jnp.bfloat16)
    o_ref[0] = o_ref[0] + jnp.dot(g, w2_ref[...], preferred_element_type=jnp.float32)


def run_post(x, ctx, ln2, wo, w1, w2, *, ts, tff):
    B, S, D = x.shape
    d_ff = w1.shape[1]
    grid = (B, S // ts, d_ff // tff)
    return pl.pallas_call(
        post_kernel,
        out_shape=jax.ShapeDtypeStruct((B, S, D), jnp.float32),
        grid_spec=pltpu.PrefetchScalarGridSpec(
            num_scalar_prefetch=0,
            grid=grid,
            in_specs=[
                pl.BlockSpec((1, ts, D), lambda b, s, f: (b, s, 0)),   # residual x
                pl.BlockSpec((1, ts, D), lambda b, s, f: (b, s, 0)),   # attention ctx
                pl.BlockSpec((1, D), lambda b, s, f: (0, 0)),          # ln2 gain
                pl.BlockSpec((D, D), lambda b, s, f: (0, 0)),          # W_o^T
                pl.BlockSpec((D, tff), lambda b, s, f: (0, f)),        # W_1^T block
                pl.BlockSpec((tff, D), lambda b, s, f: (f, 0)),        # W_2^T block
            ],
            out_specs=pl.BlockSpec((1, ts, D), lambda b, s, f: (b, s, 0)),
            scratch_shapes=[pltpu.VMEM((ts, D), jnp.bfloat16)],        # cached rmsnorm(x1)
        ),
        compiler_params=_params("parallel", "parallel", "arbitrary"),
        cost_estimate=pl.CostEstimate(
            flops=2 * B * S * D * D + 4 * B * S * D * d_ff,
            transcendentals=B * S * d_ff + B * S,
            bytes_accessed=(10 * B * S * D
                            + (2 * D * D + 4 * D * d_ff) * (B * (S // ts)))),
    )(x, ctx, ln2, wo, w1, w2)


# ----------------------------------------------------------------------------
# 4) LM head on pre-normalized bf16 activations, vocab (weight) axis OUTERMOST
# ----------------------------------------------------------------------------
def lm_head_kernel(h_ref, wh_ref, o_ref):
    o_ref[0] = jnp.dot(h_ref[0], wh_ref[...],
                       preferred_element_type=jnp.float32).astype(o_ref.dtype)


def run_lm_head(h, w_head, *, ts, tv):
    B, S, D = h.shape
    V = w_head.shape[1]
    grid = (V // tv, B, S // ts)                       # vocab/weight axis outermost
    return pl.pallas_call(
        lm_head_kernel,
        out_shape=jax.ShapeDtypeStruct((B, S, V), jnp.float32),
        grid_spec=pltpu.PrefetchScalarGridSpec(
            num_scalar_prefetch=0,
            grid=grid,
            in_specs=[
                pl.BlockSpec((1, ts, D), lambda v, b, s: (b, s, 0)),
                pl.BlockSpec((D, tv), lambda v, b, s: (0, v)),
            ],
            out_specs=pl.BlockSpec((1, ts, tv), lambda v, b, s: (b, s, v)),
        ),
        compiler_params=_params("parallel", "parallel", "parallel"),
        cost_estimate=pl.CostEstimate(
            flops=2 * B * S * D * V,
            transcendentals=0,
            bytes_accessed=2 * B * S * D * (V // tv) + 2 * D * V + 4 * B * S * V),
    )(h, w_head)


# ----------------------------------------------------------------------------
# parameters (weights stored pre-transposed, bf16; 1/sqrt(d_k) folded into W_q)
# ----------------------------------------------------------------------------
def init_params(key, vocab_size, context_length, d_model, num_layers, num_heads, d_ff):
    keys = jax.random.split(key, 3 + 6 * num_layers)
    std = 0.02
    scale = 1.0 / math.sqrt(d_model // num_heads)

    def w(k, shape, col_scale=1.0):  # bf16, (in, out) layout == torch weight.T
        return (col_scale * std * jax.random.normal(k, shape, jnp.float32)
                ).astype(jnp.bfloat16)

    params = {
        "tok_emb": std * jax.random.normal(keys[0], (vocab_size, d_model), jnp.float32),
        "pos_emb": std * jax.random.normal(keys[1], (context_length, d_model), jnp.float32),
        "lm_head": w(keys[2], (d_model, vocab_size)),        # == lm_head.weight.T
        "ln_final": jnp.ones((1, d_model), jnp.float32),
        "layers": [],
    }
    ki = 3
    for _ in range(num_layers):
        params["layers"].append({
            "ln1": jnp.ones((1, d_model), jnp.float32),
            "ln2": jnp.ones((1, d_model), jnp.float32),
            # W_q carries the 1/sqrt(d_k) softmax scale (folded at prep time).
            "wq": w(keys[ki + 0], (d_model, d_model), col_scale=scale),
            "wk": w(keys[ki + 1], (d_model, d_model)),
            "wv": w(keys[ki + 2], (d_model, d_model)),
            "wo": w(keys[ki + 3], (d_model, d_model)),
            "w1": w(keys[ki + 4], (d_model, d_ff)),          # == ffn.w1.weight.T
            "w2": w(keys[ki + 5], (d_ff, d_model)),          # == ffn.w2.weight.T
        })
        ki += 6
    return params


def transformer_lm_forward(params, token_ids, num_heads):
    B, S = token_ids.shape
    D = params["tok_emb"].shape[1]
    assert D % num_heads == 0, "d_model must be divisible by num_heads"
    d_k = D // num_heads
    d_ff = params["layers"][0]["w1"].shape[1]
    V = params["lm_head"].shape[1]

    # tile sizes: degenerate to full dims at tiny shapes, (8,128)-aligned otherwise
    ts = _sub_tile(S, 256)        # sequence tile for token-parallel kernels
    tq = _sub_tile(S, 512)        # flash query tile
    tk = tq                       # flash kv tile (must equal tq for causal clamp)
    td = _lane_tile(D, 512)       # qkv projection output-column tile
    tff = _lane_tile(d_ff, 512)   # ffn hidden tile
    tv = _lane_tile(V, 2048)      # lm-head vocab tile
    hb = _head_block(num_heads)   # heads batched per flash grid step

    # embedding gathers stay in plain JAX (glue); dropout p=0 => identity
    x = jnp.take(params["tok_emb"], token_ids, axis=0)
    x = x + params["pos_emb"][:S][None]

    for layer in params["layers"]:
        h1 = run_rmsnorm(x, layer["ln1"], ts=ts)
        q, k, v = run_qkv(h1, layer["wq"], layer["wk"], layer["wv"], ts=ts, td=td)
        # TODO(synk): head split/merge still uses XLA transposes (~4 (B,S,D) copies per
        # layer); emitting (B, H, S, d_k) directly from run_qkv would remove them but
        # needs an in-kernel (ts, hb, d_k) -> (hb, ts, d_k) relayout.
        to_heads = lambda t: t.reshape(B, S, num_heads, d_k).transpose(0, 2, 1, 3)
        ctx = run_flash_attention(to_heads(q), to_heads(k), to_heads(v),
                                  tq=tq, tk=tk, hb=hb)
        ctx = ctx.transpose(0, 2, 1, 3).reshape(B, S, D)
        x = run_post(x, ctx, layer["ln2"], layer["wo"], layer["w1"], layer["w2"],
                     ts=ts, tff=tff)

    h_final = run_rmsnorm(x, params["ln_final"], ts=ts)
    return run_lm_head(h_final, params["lm_head"], ts=ts, tv=tv)


if __name__ == "__main__":
    vocab_size = 64
    context_length = 16
    d_model = 32
    num_layers = 2
    num_heads = 4
    d_ff = 64
    batch, seq = 2, 8

    key = jax.random.PRNGKey(0)
    pkey, dkey = jax.random.split(key)
    params = init_params(pkey, vocab_size, context_length, d_model,
                         num_layers, num_heads, d_ff)
    token_ids = jax.random.randint(dkey, (batch, seq), 0, vocab_size, dtype=jnp.int32)

    fwd = jax.jit(partial(transformer_lm_forward, num_heads=num_heads))
    logits = fwd(params, token_ids)
    jax.block_until_ready(logits)
    assert logits.shape == (batch, seq, vocab_size)
    assert logits.dtype == jnp.float32
    print("KERNEL_OK")
</pallas_src>

<mosaic_0001>
module attributes {stable_mosaic.version = 11 : i64} {
  func.func @rmsnorm_kernel(%arg0: i32, %arg1: i32, %arg2: memref<1x8x32xf32, #tpu.memory_space<vmem>>, %arg3: memref<1x32xf32, #tpu.memory_space<vmem>>, %arg4: memref<1x8x32xbf16, #tpu.memory_space<vmem>>) attributes {dimension_semantics = [#tpu.dimension_semantics<parallel>, #tpu.dimension_semantics<parallel>], iteration_bounds = array<i64: 2, 1>, scalar_prefetch = 0 : i64, scratch_operands = 0 : i64, tpu.core_type = #tpu.core_type<tc>, window_params = [{transform_indices = @transform_0, window_bounds = array<i64: 1, 8, 32>}, {pipeline_mode = #tpu.pipeline_mode<synchronous>, transform_indices = @transform_1, window_bounds = array<i64: 1, 32>}, {transform_indices = @transform_2, window_bounds = array<i64: 1, 8, 32>}]} {
    %c0 = arith.constant 0 : index
    %c0_0 = arith.constant 0 : index
    %c0_1 = arith.constant 0 : index
    %0 = vector.load %arg2[%c0, %c0_0, %c0_1] : memref<1x8x32xf32, #tpu.memory_space<vmem>>, vector<1x8x32xf32>
    %1 = vector.shape_cast %0 : vector<1x8x32xf32> to vector<8x32xf32>
    %c0_2 = arith.constant 0 : index
    %c0_3 = arith.constant 0 : index
    %2 = vector.load %arg3[%c0_2, %c0_3] : memref<1x32xf32, #tpu.memory_space<vmem>>, vector<1x32xf32>
    %3 = vector.shape_cast %2 : vector<1x32xf32> to vector<32xf32>
    %4 = arith.mulf %1, %1 : vector<8x32xf32>
    %cst = arith.constant dense<0.000000e+00> : vector<8xf32>
    %5 = vector.multi_reduction <add>, %4, %cst [1] : vector<8x32xf32> to vector<8xf32>
    %6 = vector.shape_cast %5 : vector<8xf32> to vector<8x1xf32>
    %cst_4 = arith.constant 3.200000e+01 : f32
    %7 = vector.broadcast %cst_4 : f32 to vector<8x1xf32>
    %8 = arith.divf %6, %7 : vector<8x1xf32>
    %cst_5 = arith.constant 9.99999974E-6 : f32
    %9 = vector.broadcast %cst_5 : f32 to vector<8x1xf32>
    %10 = arith.addf %8, %9 : vector<8x1xf32>
    %11 = math.rsqrt %10 : vector<8x1xf32>
    %12 = vector.broadcast %11 : vector<8x1xf32> to vector<8x32xf32>
    %13 = arith.mulf %1, %12 : vector<8x32xf32>
    %14 = vector.shape_cast %3 : vector<32xf32> to vector<1x32xf32>
    %15 = vector.broadcast %14 : vector<1x32xf32> to vector<8x32xf32>
    %16 = arith.mulf %13, %15 : vector<8x32xf32>
    %17 = arith.truncf %16 : vector<8x32xf32> to vector<8x32xbf16>
    %c0_6 = arith.constant 0 : index
    %c0_7 = arith.constant 0 : index
    %c0_8 = arith.constant 0 : index
    %18 = vector.load %arg4[%c0_6, %c0_7, %c0_8] : memref<1x8x32xbf16, #tpu.memory_space<vmem>>, vector<1x8x32xbf16>
    %19 = vector.shape_cast %18 : vector<1x8x32xbf16> to vector<8x32xbf16>
    %20 = vector.shape_cast %17 : vector<8x32xbf16> to vector<1x8x32xbf16>
    tpu.vector_store %arg4[%c0_6, %c0_7, %c0_8], %20 {strides = array<i32>} : memref<1x8x32xbf16, #tpu.memory_space<vmem>>, vector<1x8x32xbf16>,
    return
  }
  func.func @transform_0(%arg0: i32, %arg1: i32) -> (i32, i32, i32) {
    %c0_i32 = arith.constant 0 : i32
    %c0_i32_0 = arith.constant 0 : i32
    return %arg0, %arg1, %c0_i32 : i32, i32, i32
  }
  func.func @transform_1(%arg0: i32, %arg1: i32) -> (i32, i32) {
    %c0_i32 = arith.constant 0 : i32
    %c0_i32_0 = arith.constant 0 : i32
    %c0_i32_1 = arith.constant 0 : i32
    return %c0_i32, %c0_i32_0 : i32, i32
  }
  func.func @transform_2(%arg0: i32, %arg1: i32) -> (i32, i32, i32) {
    %c0_i32 = arith.constant 0 : i32
    %c0_i32_0 = arith.constant 0 : i32
    return %arg0, %arg1, %c0_i32 : i32, i32, i32
  }
}

module attributes {stable_mosaic.version = 11 : i64} {
  func.func @qkv_kernel(%arg0: i32, %arg1: i32, %arg2: i32, %arg3: memref<1x8x32xbf16, #tpu.memory_space<vmem>>, %arg4: memref<32x32xbf16, #tpu.memory_space<vmem>>, %arg5: memref<32x32xbf16, #tpu.memory_space<vmem>>, %arg6: memref<32x32xbf16, #tpu.memory_space<vmem>>, %arg7: memref<1x8x32xbf16, #tpu.memory_space<vmem>>, %arg8: memref<1x8x32xbf16, #tpu.memory_space<vmem>>, %arg9: memref<1x8x32xbf16, #tpu.memory_space<vmem>>) attributes {dimension_semantics = [#tpu.dimension_semantics<parallel>, #tpu.dimension_semantics<parallel>, #tpu.dimension_semantics<parallel>], iteration_bounds = array<i64: 1, 2, 1>, scalar_prefetch = 0 : i64, scratch_operands = 0 : i64, tpu.core_type = #tpu.core_type<tc>, window_params = [{transform_indices = @transform_0, window_bounds = array<i64: 1, 8, 32>}, {transform_indices = @transform_1, window_bounds = array<i64: 32, 32>}, {transform_indices = @transform_2, window_bounds = array<i64: 32, 32>}, {transform_indices = @transform_3, window_bounds = array<i64: 32, 32>}, {transform_indices = @transform_4, window_bounds = array<i64: 1, 8, 32>}, {transform_indices = @transform_5, window_bounds = array<i64: 1, 8, 32>}, {transform_indices = @transform_6, window_bounds = array<i64: 1, 8, 32>}]} {
    %c0 = arith.constant 0 : index
    %c0_0 = arith.constant 0 : index
    %c0_1 = arith.constant 0 : index
    %0 = vector.load %arg3[%c0, %c0_0, %c0_1] : memref<1x8x32xbf16, #tpu.memory_space<vmem>>, vector<1x8x32xbf16>
    %1 = vector.shape_cast %0 : vector<1x8x32xbf16> to vector<8x32xbf16>
    %c0_2 = arith.constant 0 : index
    %c0_3 = arith.constant 0 : index
    %2 = vector.load %arg4[%c0_2, %c0_3] : memref<32x32xbf16, #tpu.memory_space<vmem>>, vector<32x32xbf16>
    %cst = arith.constant dense<0.000000e+00> : vector<8x32xf32>
    %3 = tpu.matmul %1, %2, %cst {dimension_numbers = #tpu.dot_dimension_numbers<[1], [0], [0], [1], [0, 0, 1, 1], [], []>} : vector<8x32xbf16>, vector<32x32xbf16>, vector<8x32xf32> -> vector<8x32xf32>
    %4 = arith.truncf %3 : vector<8x32xf32> to vector<8x32xbf16>
    %c0_4 = arith.constant 0 : index
    %c0_5 = arith.constant 0 : index
    %c0_6 = arith.constant 0 : index
    %5 = vector.load %arg7[%c0_4, %c0_5, %c0_6] : memref<1x8x32xbf16, #tpu.memory_space<vmem>>, vector<1x8x32xbf16>
    %6 = vector.shape_cast %5 : vector<1x8x32xbf16> to vector<8x32xbf16>
    %7 = vector.shape_cast %4 : vector<8x32xbf16> to vector<1x8x32xbf16>
    tpu.vector_store %arg7[%c0_4, %c0_5, %c0_6], %7 {strides = array<i32>} : memref<1x8x32xbf16, #tpu.memory_space<vmem>>, vector<1x8x32xbf16>,
    %c0_7 = arith.constant 0 : index
    %c0_8 = arith.constant 0 : index
    %8 = vector.load %arg5[%c0_7, %c0_8] : memref<32x32xbf16, #tpu.memory_space<vmem>>, vector<32x32xbf16>
    %cst_9 = arith.constant dense<0.000000e+00> : vector<8x32xf32>
    %9 = tpu.matmul %1, %8, %cst_9 {dimension_numbers = #tpu.dot_dimension_numbers<[1], [0], [0], [1], [0, 0, 1, 1], [], []>} : vector<8x32xbf16>, vector<32x32xbf16>, vector<8x32xf32> -> vector<8x32xf32>
    %10 = arith.truncf %9 : vector<8x32xf32> to vector<8x32xbf16>
    %c0_10 = arith.constant 0 : index
    %c0_11 = arith.constant 0 : index
    %c0_12 = arith.constant 0 : index
    %11 = vector.load %arg8[%c0_10, %c0_11, %c0_12] : memref<1x8x32xbf16, #tpu.memory_space<vmem>>, vector<1x8x32xbf16>
    %12 = vector.shape_cast %11 : vector<1x8x32xbf16> to vector<8x32xbf16>
    %13 = vector.shape_cast %10 : vector<8x32xbf16> to vector<1x8x32xbf16>
    tpu.vector_store %arg8[%c0_10, %c0_11, %c0_12], %13 {strides = array<i32>} : memref<1x8x32xbf16, #tpu.memory_space<vmem>>, vector<1x8x32xbf16>,
    %c0_13 = arith.constant 0 : index
    %c0_14 = arith.constant 0 : index
    %14 = vector.load %arg6[%c0_13, %c0_14] : memref<32x32xbf16, #tpu.memory_space<vmem>>, vector<32x32xbf16>
    %cst_15 = arith.constant dense<0.000000e+00> : vector<8x32xf32>
    %15 = tpu.matmul %1, %14, %cst_15 {dimension_numbers = #tpu.dot_dimension_numbers<[1], [0], [0], [1], [0, 0, 1, 1], [], []>} : vector<8x32xbf16>, vector<32x32xbf16>, vector<8x32xf32> -> vector<8x32xf32>
    %16 = arith.truncf %15 : vector<8x32xf32> to vector<8x32xbf16>
    %c0_16 = arith.constant 0 : index
    %c0_17 = arith.constant 0 : index
    %c0_18 = arith.constant 0 : index
    %17 = vector.load %arg9[%c0_16, %c0_17, %c0_18] : memref<1x8x32xbf16, #tpu.memory_space<vmem>>, vector<1x8x32xbf16>
    %18 = vector.shape_cast %17 : vector<1x8x32xbf16> to vector<8x32xbf16>
    %19 = vector.shape_cast %16 : vector<8x32xbf16> to vector<1x8x32xbf16>
    tpu.vector_store %arg9[%c0_16, %c0_17, %c0_18], %19 {strides = array<i32>} : memref<1x8x32xbf16, #tpu.memory_space<vmem>>, vector<1x8x32xbf16>,
    return
  }
  func.func @transform_0(%arg0: i32, %arg1: i32, %arg2: i32) -> (i32, i32, i32) {
    %c0_i32 = arith.constant 0 : i32
    %c0_i32_0 = arith.constant 0 : i32
    return %arg1, %arg2, %c0_i32 : i32, i32, i32
  }
  func.func @transform_1(%arg0: i32, %arg1: i32, %arg2: i32) -> (i32, i32) {
    %c0_i32 = arith.constant 0 : i32
    %c0_i32_0 = arith.constant 0 : i32
    return %c0_i32, %arg0 : i32, i32
  }
  func.func @transform_2(%arg0: i32, %arg1: i32, %arg2: i32) -> (i32, i32) {
    %c0_i32 = arith.constant 0 : i32
    %c0_i32_0 = arith.constant 0 : i32
    return %c0_i32, %arg0 : i32, i32
  }
  func.func @transform_3(%arg0: i32, %arg1: i32, %arg2: i32) -> (i32, i32) {
    %c0_i32 = arith.constant 0 : i32
    %c0_i32_0 = arith.constant 0 : i32
    return %c0_i32, %arg0 : i32, i32
  }
  func.func @transform_4(%arg0: i32, %arg1: i32, %arg2: i32) -> (i32, i32, i32) {
    %c0_i32 = arith.constant 0 : i32
    return %arg1, %arg2, %arg0 : i32, i32, i32
  }
  func.func @transform_5(%arg0: i32, %arg1: i32, %arg2: i32) -> (i32, i32, i32) {
    %c0_i32 = arith.constant 0 : i32
    return %arg1, %arg2, %arg0 : i32, i32, i32
  }
  func.func @transform_6(%arg0: i32, %arg1: i32, %arg2: i32) -> (i32, i32, i32) {
    %c0_i32 = arith.constant 0 : i32
    return %arg1, %arg2, %arg0 : i32, i32, i32
  }
}

module attributes {stable_mosaic.version = 11 : i64} {
  func.func @flash_attn_kernel(%arg0: i32, %arg1: i32, %arg2: i32, %arg3: i32, %arg4: memref<1x4x8x8xbf16, #tpu.memory_space<vmem>>, %arg5: memref<1x4x8x8xbf16, #tpu.memory_space<vmem>>, %arg6: memref<1x4x8x8xbf16, #tpu.memory_space<vmem>>, %arg7: memref<1x4x8x8xbf16, #tpu.memory_space<vmem>>, %arg8: memref<4x8x1xf32, #tpu.memory_space<vmem>>, %arg9: memref<4x8x1xf32, #tpu.memory_space<vmem>>, %arg10: memref<4x8x8xf32, #tpu.memory_space<vmem>>) attributes {dimension_semantics = [#tpu.dimension_semantics<parallel>, #tpu.dimension_semantics<parallel>, #tpu.dimension_semantics<parallel>, #tpu.dimension_semantics<arbitrary>], iteration_bounds = array<i64: 2, 1, 1, 1>, scalar_prefetch = 0 : i64, scratch_operands = 3 : i64, tpu.core_type = #tpu.core_type<tc>, window_params = [{transform_indices = @transform_0, window_bounds = array<i64: 1, 4, 8, 8>}, {transform_indices = @transform_1, window_bounds = array<i64: 1, 4, 8, 8>}, {transform_indices = @transform_2, window_bounds = array<i64: 1, 4, 8, 8>}, {transform_indices = @transform_3, window_bounds = array<i64: 1, 4, 8, 8>}]} {
    %c0_i32 = arith.constant 0 : i32
    %0 = arith.cmpi eq, %arg3, %c0_i32 : i32
    %1 = arith.extui %0 : i1 to i32
    %c0_i32_0 = arith.constant 0 : i32
    %2 = arith.cmpi ne, %1, %c0_i32_0 : i32
    scf.if %2 {
      %cst = arith.constant 0xFF800000 : f32
      %12 = vector.broadcast %cst : f32 to vector<4x8x1xf32>
      %c0 = arith.constant 0 : index
      %c0_5 = arith.constant 0 : index
      %c0_6 = arith.constant 0 : index
      %13 = vector.load %arg8[%c0, %c0_5, %c0_6] : memref<4x8x1xf32, #tpu.memory_space<vmem>>, vector<4x8x1xf32>
      tpu.vector_store %arg8[%c0, %c0_5, %c0_6], %12 {strides = array<i32>} : memref<4x8x1xf32, #tpu.memory_space<vmem>>, vector<4x8x1xf32>,
      %cst_7 = arith.constant 0.000000e+00 : f32
      %14 = vector.broadcast %cst_7 : f32 to vector<4x8x1xf32>
      %c0_8 = arith.constant 0 : index
      %c0_9 = arith.constant 0 : index
      %c0_10 = arith.constant 0 : index
      %15 = vector.load %arg9[%c0_8, %c0_9, %c0_10] : memref<4x8x1xf32, #tpu.memory_space<vmem>>, vector<4x8x1xf32>
      tpu.vector_store %arg9[%c0_8, %c0_9, %c0_10], %14 {strides = array<i32>} : memref<4x8x1xf32, #tpu.memory_space<vmem>>, vector<4x8x1xf32>,
      %cst_11 = arith.constant 0.000000e+00 : f32
      %16 = vector.broadcast %cst_11 : f32 to vector<4x8x8xf32>
      %c0_12 = arith.constant 0 : index
      %c0_13 = arith.constant 0 : index
      %c0_14 = arith.constant 0 : index
      %17 = vector.load %arg10[%c0_12, %c0_13, %c0_14] : memref<4x8x8xf32, #tpu.memory_space<vmem>>, vector<4x8x8xf32>
      tpu.vector_store %arg10[%c0_12, %c0_13, %c0_14], %16 {strides = array<i32>} : memref<4x8x8xf32, #tpu.memory_space<vmem>>, vector<4x8x8xf32>,
    } else {
    }
    %3 = arith.cmpi slt, %arg3, %arg2 : i32
    %4 = arith.extui %3 : i1 to i32
    %c0_i32_1 = arith.constant 0 : i32
    %5 = arith.cmpi ne, %4, %c0_i32_1 : i32
    scf.if %5 {
      %c0 = arith.constant 0 : index
      %c0_5 = arith.constant 0 : index
      %c0_6 = arith.constant 0 : index
      %c0_7 = arith.constant 0 : index
      %12 = vector.load %arg4[%c0, %c0_5, %c0_6, %c0_7] : memref<1x4x8x8xbf16, #tpu.memory_space<vmem>>, vector<1x4x8x8xbf16>
      %13 = vector.shape_cast %12 : vector<1x4x8x8xbf16> to vector<4x8x8xbf16>
      %c0_8 = arith.constant 0 : index
      %c0_9 = arith.constant 0 : index
      %c0_10 = arith.constant 0 : index
      %c0_11 = arith.constant 0 : index
      %14 = vector.load %arg5[%c0_8, %c0_9, %c0_10, %c0_11] : memref<1x4x8x8xbf16, #tpu.memory_space<vmem>>, vector<1x4x8x8xbf16>
      %15 = vector.shape_cast %14 : vector<1x4x8x8xbf16> to vector<4x8x8xbf16>
      %c0_12 = arith.constant 0 : index
      %c0_13 = arith.constant 0 : index
      %c0_14 = arith.constant 0 : index
      %c0_15 = arith.constant 0 : index
      %16 = vector.load %arg6[%c0_12, %c0_13, %c0_14, %c0_15] : memref<1x4x8x8xbf16, #tpu.memory_space<vmem>>, vector<1x4x8x8xbf16>
      %17 = vector.shape_cast %16 : vector<1x4x8x8xbf16> to vector<4x8x8xbf16>
      "tpu.trace_start"() <{level = 10 : i32, message = "hqd,hkd->hqk"}> : () -> ()
      %cst = arith.constant dense<0.000000e+00> : vector<4x8x8xf32>
      %18 = tpu.matmul %13, %15, %cst {dimension_numbers = #tpu.dot_dimension_numbers<[2], [2], [1], [1], [0, 0, 0, 1, 1, 1], [0], [0]>} : vector<4x8x8xbf16>, vector<4x8x8xbf16>, vector<4x8x8xf32> -> vector<4x8x8xf32>
      "tpu.trace_stop"() : () -> ()
      %c0_16 = arith.constant 0 : index
      %c0_17 = arith.constant 0 : index
      %c0_18 = arith.constant 0 : index
      %19 = vector.load %arg8[%c0_16, %c0_17, %c0_18] : memref<4x8x1xf32, #tpu.memory_space<vmem>>, vector<4x8x1xf32>
      %cst_19 = arith.constant dense<0xFF800000> : vector<4x8xf32>
      %20 = vector.multi_reduction <maximumf>, %18, %cst_19 [2] : vector<4x8x8xf32> to vector<4x8xf32>
      %21 = vector.shape_cast %20 : vector<4x8xf32> to vector<4x8x1xf32>
      %22 = arith.maximumf %19, %21 : vector<4x8x1xf32>
      %23 = arith.subf %19, %22 : vector<4x8x1xf32>
      %24 = math.exp %23 : vector<4x8x1xf32>
      %25 = vector.broadcast %22 : vector<4x8x1xf32> to vector<4x8x8xf32>
      %26 = arith.subf %18, %25 : vector<4x8x8xf32>
      %27 = math.exp %26 : vector<4x8x8xf32>
      %c0_20 = arith.constant 0 : index
      %c0_21 = arith.constant 0 : index
      %c0_22 = arith.constant 0 : index
      %28 = vector.load %arg9[%c0_20, %c0_21, %c0_22] : memref<4x8x1xf32, #tpu.memory_space<vmem>>, vector<4x8x1xf32>
      %29 = arith.mulf %24, %28 : vector<4x8x1xf32>
      %cst_23 = arith.constant dense<0.000000e+00> : vector<4x8xf32>
      %30 = vector.multi_reduction <add>, %27, %cst_23 [2] : vector<4x8x8xf32> to vector<4x8xf32>
      %31 = vector.shape_cast %30 : vector<4x8xf32> to vector<4x8x1xf32>
      %32 = arith.addf %29, %31 : vector<4x8x1xf32>
      %c0_24 = arith.constant 0 : index
      %c0_25 = arith.constant 0 : index
      %c0_26 = arith.constant 0 : index
      %33 = vector.load %arg9[%c0_24, %c0_25, %c0_26] : memref<4x8x1xf32, #tpu.memory_space<vmem>>, vector<4x8x1xf32>
      tpu.vector_store %arg9[%c0_24, %c0_25, %c0_26], %32 {strides = array<i32>} : memref<4x8x1xf32, #tpu.memory_space<vmem>>, vector<4x8x1xf32>,
      %c0_27 = arith.constant 0 : index
      %c0_28 = arith.constant 0 : index
      %c0_29 = arith.constant 0 : index
      %34 = vector.load %arg10[%c0_27, %c0_28, %c0_29] : memref<4x8x8xf32, #tpu.memory_space<vmem>>, vector<4x8x8xf32>
      %35 = vector.broadcast %24 : vector<4x8x1xf32> to vector<4x8x8xf32>
      %36 = arith.mulf %35, %34 : vector<4x8x8xf32>
      %37 = arith.truncf %27 : vector<4x8x8xf32> to vector<4x8x8xbf16>
      "tpu.trace_start"() <{level = 10 : i32, message = "hqk,hkd->hqd"}> : () -> ()
      %cst_30 = arith.constant dense<0.000000e+00> : vector<4x8x8xf32>
      %38 = tpu.matmul %37, %17, %cst_30 {dimension_numbers = #tpu.dot_dimension_numbers<[2], [1], [1], [2], [0, 0, 0, 1, 1, 2], [0], [0]>} : vector<4x8x8xbf16>, vector<4x8x8xbf16>, vector<4x8x8xf32> -> vector<4x8x8xf32>
      "tpu.trace_stop"() : () -> ()
      %39 = arith.addf %36, %38 : vector<4x8x8xf32>
      %c0_31 = arith.constant 0 : index
      %c0_32 = arith.constant 0 : index
      %c0_33 = arith.constant 0 : index
      %40 = vector.load %arg10[%c0_31, %c0_32, %c0_33] : memref<4x8x8xf32, #tpu.memory_space<vmem>>, vector<4x8x8xf32>
      tpu.vector_store %arg10[%c0_31, %c0_32, %c0_33], %39 {strides = array<i32>} : memref<4x8x8xf32, #tpu.memory_space<vmem>>, vector<4x8x8xf32>,
      %c0_34 = arith.constant 0 : index
      %c0_35 = arith.constant 0 : index
      %c0_36 = arith.constant 0 : index
      %41 = vector.load %arg8[%c0_34, %c0_35, %c0_36] : memref<4x8x1xf32, #tpu.memory_space<vmem>>, vector<4x8x1xf32>
      tpu.vector_store %arg8[%c0_34, %c0_35, %c0_36], %22 {strides = array<i32>} : memref<4x8x1xf32, #tpu.memory_space<vmem>>, vector<4x8x1xf32>,
    } else {
    }
    %6 = arith.cmpi eq, %arg3, %arg2 : i32
    %7 = arith.extui %6 : i1 to i32
    %c0_i32_2 = arith.constant 0 : i32
    %8 = arith.cmpi ne, %7, %c0_i32_2 : i32
    scf.if %8 {
      %c0 = arith.constant 0 : index
      %c0_5 = arith.constant 0 : index
      %c0_6 = arith.constant 0 : index
      %c0_7 = arith.constant 0 : index
      %12 = vector.load %arg4[%c0, %c0_5, %c0_6, %c0_7] : memref<1x4x8x8xbf16, #tpu.memory_space<vmem>>, vector<1x4x8x8xbf16>
      %13 = vector.shape_cast %12 : vector<1x4x8x8xbf16> to vector<4x8x8xbf16>
      %c0_8 = arith.constant 0 : index
      %c0_9 = arith.constant 0 : index
      %c0_10 = arith.constant 0 : index
      %c0_11 = arith.constant 0 : index
      %14 = vector.load %arg5[%c0_8, %c0_9, %c0_10, %c0_11] : memref<1x4x8x8xbf16, #tpu.memory_space<vmem>>, vector<1x4x8x8xbf16>
      %15 = vector.shape_cast %14 : vector<1x4x8x8xbf16> to vector<4x8x8xbf16>
      %c0_12 = arith.constant 0 : index
      %c0_13 = arith.constant 0 : index
      %c0_14 = arith.constant 0 : index
      %c0_15 = arith.constant 0 : index
      %16 = vector.load %arg6[%c0_12, %c0_13, %c0_14, %c0_15] : memref<1x4x8x8xbf16, #tpu.memory_space<vmem>>, vector<1x4x8x8xbf16>
      %17 = vector.shape_cast %16 : vector<1x4x8x8xbf16> to vector<4x8x8xbf16>
      "tpu.trace_start"() <{level = 10 : i32, message = "hqd,hkd->hqk"}> : () -> ()
      %cst = arith.constant dense<0.000000e+00> : vector<4x8x8xf32>
      %18 = tpu.matmul %13, %15, %cst {dimension_numbers = #tpu.dot_dimension_numbers<[2], [2], [1], [1], [0, 0, 0, 1, 1, 1], [0], [0]>} : vector<4x8x8xbf16>, vector<4x8x8xbf16>, vector<4x8x8xf32> -> vector<4x8x8xf32>
      "tpu.trace_stop"() : () -> ()
      %c8_i32 = arith.constant 8 : i32
      %19 = arith.muli %arg2, %c8_i32 : i32
      %20 = tpu.iota {dimensions = array<i32: 1>} : vector<4x8x8xi32>
      %21 = vector.broadcast %19 : i32 to vector<4x8x8xi32>
      %22 = arith.addi %21, %20 : vector<4x8x8xi32>
      %c8_i32_16 = arith.constant 8 : i32
      %23 = arith.muli %arg3, %c8_i32_16 : i32
      %24 = tpu.iota {dimensions = array<i32: 2>} : vector<4x8x8xi32>
      %25 = vector.broadcast %23 : i32 to vector<4x8x8xi32>
      %26 = arith.addi %25, %24 : vector<4x8x8xi32>
      %27 = arith.cmpi sgt, %26, %22 : vector<4x8x8xi32>
      %cst_17 = arith.constant -1.000000e+30 : f32
      %28 = vector.broadcast %cst_17 : f32 to vector<4x8x8xf32>
      %29 = arith.select %27, %28, %18 : vector<4x8x8xi1>, vector<4x8x8xf32>
      %c0_18 = arith.constant 0 : index
      %c0_19 = arith.constant 0 : index
      %c0_20 = arith.constant 0 : index
      %30 = vector.load %arg8[%c0_18, %c0_19, %c0_20] : memref<4x8x1xf32, #tpu.memory_space<vmem>>, vector<4x8x1xf32>
      %cst_21 = arith.constant dense<0xFF800000> : vector<4x8xf32>
      %31 = vector.multi_reduction <maximumf>, %29, %cst_21 [2] : vector<4x8x8xf32> to vector<4x8xf32>
      %32 = vector.shape_cast %31 : vector<4x8xf32> to vector<4x8x1xf32>
      %33 = arith.maximumf %30, %32 : vector<4x8x1xf32>
      %34 = arith.subf %30, %33 : vector<4x8x1xf32>
      %35 = math.exp %34 : vector<4x8x1xf32>
      %36 = vector.broadcast %33 : vector<4x8x1xf32> to vector<4x8x8xf32>
      %37 = arith.subf %29, %36 : vector<4x8x8xf32>
      %38 = math.exp %37 : vector<4x8x8xf32>
      %c0_22 = arith.constant 0 : index
      %c0_23 = arith.constant 0 : index
      %c0_24 = arith.constant 0 : index
      %39 = vector.load %arg9[%c0_22, %c0_23, %c0_24] : memref<4x8x1xf32, #tpu.memory_space<vmem>>, vector<4x8x1xf32>
      %40 = arith.mulf %35, %39 : vector<4x8x1xf32>
      %cst_25 = arith.constant dense<0.000000e+00> : vector<4x8xf32>
      %41 = vector.multi_reduction <add>, %38, %cst_25 [2] : vector<4x8x8xf32> to vector<4x8xf32>
      %42 = vector.shape_cast %41 : vector<4x8xf32> to vector<4x8x1xf32>
      %43 = arith.addf %40, %42 : vector<4x8x1xf32>
      %c0_26 = arith.constant 0 : index
      %c0_27 = arith.constant 0 : index
      %c0_28 = arith.constant 0 : index
      %44 = vector.load %arg9[%c0_26, %c0_27, %c0_28] : memref<4x8x1xf32, #tpu.memory_space<vmem>>, vector<4x8x1xf32>
      tpu.vector_store %arg9[%c0_26, %c0_27, %c0_28], %43 {strides = array<i32>} : memref<4x8x1xf32, #tpu.memory_space<vmem>>, vector<4x8x1xf32>,
      %c0_29 = arith.constant 0 : index
      %c0_30 = arith.constant 0 : index
      %c0_31 = arith.constant 0 : index
      %45 = vector.load %arg10[%c0_29, %c0_30, %c0_31] : memref<4x8x8xf32, #tpu.memory_space<vmem>>, vector<4x8x8xf32>
      %46 = vector.broadcast %35 : vector<4x8x1xf32> to vector<4x8x8xf32>
      %47 = arith.mulf %46, %45 : vector<4x8x8xf32>
      %48 = arith.truncf %38 : vector<4x8x8xf32> to vector<4x8x8xbf16>
      "tpu.trace_start"() <{level = 10 : i32, message = "hqk,hkd->hqd"}> : () -> ()
      %cst_32 = arith.constant dense<0.000000e+00> : vector<4x8x8xf32>
      %49 = tpu.matmul %48, %17, %cst_32 {dimension_numbers = #tpu.dot_dimension_numbers<[2], [1], [1], [2], [0, 0, 0, 1, 1, 2], [0], [0]>} : vector<4x8x8xbf16>, vector<4x8x8xbf16>, vector<4x8x8xf32> -> vector<4x8x8xf32>
      "tpu.trace_stop"() : () -> ()
      %50 = arith.addf %47, %49 : vector<4x8x8xf32>
      %c0_33 = arith.constant 0 : index
      %c0_34 = arith.constant 0 : index
      %c0_35 = arith.constant 0 : index
      %51 = vector.load %arg10[%c0_33, %c0_34, %c0_35] : memref<4x8x8xf32, #tpu.memory_space<vmem>>, vector<4x8x8xf32>
      tpu.vector_store %arg10[%c0_33, %c0_34, %c0_35], %50 {strides = array<i32>} : memref<4x8x8xf32, #tpu.memory_space<vmem>>, vector<4x8x8xf32>,
      %c0_36 = arith.constant 0 : index
      %c0_37 = arith.constant 0 : index
      %c0_38 = arith.constant 0 : index
      %52 = vector.load %arg8[%c0_36, %c0_37, %c0_38] : memref<4x8x1xf32, #tpu.memory_space<vmem>>, vector<4x8x1xf32>
      tpu.vector_store %arg8[%c0_36, %c0_37, %c0_38], %33 {strides = array<i32>} : memref<4x8x1xf32, #tpu.memory_space<vmem>>, vector<4x8x1xf32>,
    } else {
    }
    %c0_i32_3 = arith.constant 0 : i32
    %9 = arith.cmpi eq, %arg3, %c0_i32_3 : i32
    %10 = arith.extui %9 : i1 to i32
    %c0_i32_4 = arith.constant 0 : i32
    %11 = arith.cmpi ne, %10, %c0_i32_4 : i32
    scf.if %11 {
      %c0 = arith.constant 0 : index
      %c0_5 = arith.constant 0 : index
      %c0_6 = arith.constant 0 : index
      %12 = vector.load %arg10[%c0, %c0_5, %c0_6] : memref<4x8x8xf32, #tpu.memory_space<vmem>>, vector<4x8x8xf32>
      %c0_7 = arith.constant 0 : index
      %c0_8 = arith.constant 0 : index
      %c0_9 = arith.constant 0 : index
      %13 = vector.load %arg9[%c0_7, %c0_8, %c0_9] : memref<4x8x1xf32, #tpu.memory_space<vmem>>, vector<4x8x1xf32>
      %14 = tpu.reciprocal %13 {approx = true} : vector<4x8x1xf32> -> vector<4x8x1xf32>
      %15 = vector.broadcast %14 : vector<4x8x1xf32> to vector<4x8x8xf32>
      %16 = arith.mulf %12, %15 : vector<4x8x8xf32>
      %17 = arith.truncf %16 : vector<4x8x8xf32> to vector<4x8x8xbf16>
      %c0_10 = arith.constant 0 : index
      %c0_11 = arith.constant 0 : index
      %c0_12 = arith.constant 0 : index
      %c0_13 = arith.constant 0 : index
      %18 = vector.load %arg7[%c0_10, %c0_11, %c0_12, %c0_13] : memref<1x4x8x8xbf16, #tpu.memory_space<vmem>>, vector<1x4x8x8xbf16>
      %19 = vector.shape_cast %18 : vector<1x4x8x8xbf16> to vector<4x8x8xbf16>
      %20 = vector.shape_cast %17 : vector<4x8x8xbf16> to vector<1x4x8x8xbf16>
      tpu.vector_store %arg7[%c0_10, %c0_11, %c0_12, %c0_13], %20 {strides = array<i32>} : memref<1x4x8x8xbf16, #tpu.memory_space<vmem>>, vector<1x4x8x8xbf16>,
    } else {
    }
    return
  }
  func.func @transform_0(%arg0: i32, %arg1: i32, %arg2: i32, %arg3: i32) -> (i32, i32, i32, i32) {
    %c0_i32 = arith.constant 0 : i32
    %c0_i32_0 = arith.constant 0 : i32
    return %arg0, %arg1, %arg2, %c0_i32 : i32, i32, i32, i32
  }
  func.func @transform_1(%arg0: i32, %arg1: i32, %arg2: i32, %arg3: i32) -> (i32, i32, i32, i32) {
    %0 = arith.minsi %arg3, %arg2 : i32
    %c0_i32 = arith.constant 0 : i32
    %c0_i32_0 = arith.constant 0 : i32
    return %arg0, %arg1, %0, %c0_i32 : i32, i32, i32, i32
  }
  func.func @transform_2(%arg0: i32, %arg1: i32, %arg2: i32, %arg3: i32) -> (i32, i32, i32, i32) {
    %0 = arith.minsi %arg3, %arg2 : i32
    %c0_i32 = arith.constant 0 : i32
    %c0_i32_0 = arith.constant 0 : i32
    return %arg0, %arg1, %0, %c0_i32 : i32, i32, i32, i32
  }
  func.func @transform_3(%arg0: i32, %arg1: i32, %arg2: i32, %arg3: i32) -> (i32, i32, i32, i32) {
    %c0_i32 = arith.constant 0 : i32
    %c0_i32_0 = arith.constant 0 : i32
    return %arg0, %arg1, %arg2, %c0_i32 : i32, i32, i32, i32
  }
}

module attributes {stable_mosaic.version = 11 : i64} {
  func.func @post_kernel(%arg0: i32, %arg1: i32, %arg2: i32, %arg3: memref<1x8x32xf32, #tpu.memory_space<vmem>>, %arg4: memref<1x8x32xbf16, #tpu.memory_space<vmem>>, %arg5: memref<1x32xf32, #tpu.memory_space<vmem>>, %arg6: memref<32x32xbf16, #tpu.memory_space<vmem>>, %arg7: memref<32x64xbf16, #tpu.memory_space<vmem>>, %arg8: memref<64x32xbf16, #tpu.memory_space<vmem>>, %arg9: memref<1x8x32xf32, #tpu.memory_space<vmem>>, %arg10: memref<8x32xbf16, #tpu.memory_space<vmem>>) attributes {dimension_semantics = [#tpu.dimension_semantics<parallel>, #tpu.dimension_semantics<parallel>, #tpu.dimension_semantics<arbitrary>], iteration_bounds = array<i64: 2, 1, 1>, scalar_prefetch = 0 : i64, scratch_operands = 1 : i64, tpu.core_type = #tpu.core_type<tc>, window_params = [{transform_indices = @transform_0, window_bounds = array<i64: 1, 8, 32>}, {transform_indices = @transform_1, window_bounds = array<i64: 1, 8, 32>}, {pipeline_mode = #tpu.pipeline_mode<synchronous>, transform_indices = @transform_2, window_bounds = array<i64: 1, 32>}, {pipeline_mode = #tpu.pipeline_mode<synchronous>, transform_indices = @transform_3, window_bounds = array<i64: 32, 32>}, {transform_indices = @transform_4, window_bounds = array<i64: 32, 64>}, {transform_indices = @transform_5, window_bounds = array<i64: 64, 32>}, {transform_indices = @transform_6, window_bounds = array<i64: 1, 8, 32>}]} {
    %c0_i32 = arith.constant 0 : i32
    %0 = arith.cmpi eq, %arg2, %c0_i32 : i32
    %1 = arith.extui %0 : i1 to i32
    %c0_i32_0 = arith.constant 0 : i32
    %2 = arith.cmpi ne, %1, %c0_i32_0 : i32
    scf.if %2 {
      %c0_16 = arith.constant 0 : index
      %c0_17 = arith.constant 0 : index
      %c0_18 = arith.constant 0 : index
      %23 = vector.load %arg4[%c0_16, %c0_17, %c0_18] : memref<1x8x32xbf16, #tpu.memory_space<vmem>>, vector<1x8x32xbf16>
      %24 = vector.shape_cast %23 : vector<1x8x32xbf16> to vector<8x32xbf16>
      %c0_19 = arith.constant 0 : index
      %c0_20 = arith.constant 0 : index
      %25 = vector.load %arg6[%c0_19, %c0_20] : memref<32x32xbf16, #tpu.memory_space<vmem>>, vector<32x32xbf16>
      %cst_21 = arith.constant dense<0.000000e+00> : vector<8x32xf32>
      %26 = tpu.matmul %24, %25, %cst_21 {dimension_numbers = #tpu.dot_dimension_numbers<[1], [0], [0], [1], [0, 0, 1, 1], [], []>} : vector<8x32xbf16>, vector<32x32xbf16>, vector<8x32xf32> -> vector<8x32xf32>
      %c0_22 = arith.constant 0 : index
      %c0_23 = arith.constant 0 : index
      %c0_24 = arith.constant 0 : index
      %27 = vector.load %arg3[%c0_22, %c0_23, %c0_24] : memref<1x8x32xf32, #tpu.memory_space<vmem>>, vector<1x8x32xf32>
      %28 = vector.shape_cast %27 : vector<1x8x32xf32> to vector<8x32xf32>
      %29 = arith.addf %28, %26 : vector<8x32xf32>
      %c0_25 = arith.constant 0 : index
      %c0_26 = arith.constant 0 : index
      %30 = vector.load %arg5[%c0_25, %c0_26] : memref<1x32xf32, #tpu.memory_space<vmem>>, vector<1x32xf32>
      %31 = vector.shape_cast %30 : vector<1x32xf32> to vector<32xf32>
      %32 = arith.mulf %29, %29 : vector<8x32xf32>
      %cst_27 = arith.constant dense<0.000000e+00> : vector<8xf32>
      %33 = vector.multi_reduction <add>, %32, %cst_27 [1] : vector<8x32xf32> to vector<8xf32>
      %34 = vector.shape_cast %33 : vector<8xf32> to vector<8x1xf32>
      %cst_28 = arith.constant 3.200000e+01 : f32
      %35 = vector.broadcast %cst_28 : f32 to vector<8x1xf32>
      %36 = arith.divf %34, %35 : vector<8x1xf32>
      %cst_29 = arith.constant 9.99999974E-6 : f32
      %37 = vector.broadcast %cst_29 : f32 to vector<8x1xf32>
      %38 = arith.addf %36, %37 : vector<8x1xf32>
      %39 = math.rsqrt %38 : vector<8x1xf32>
      %40 = vector.broadcast %39 : vector<8x1xf32> to vector<8x32xf32>
      %41 = arith.mulf %29, %40 : vector<8x32xf32>
      %42 = vector.shape_cast %31 : vector<32xf32> to vector<1x32xf32>
      %43 = vector.broadcast %42 : vector<1x32xf32> to vector<8x32xf32>
      %44 = arith.mulf %41, %43 : vector<8x32xf32>
      %45 = arith.truncf %44 : vector<8x32xf32> to vector<8x32xbf16>
      %c0_30 = arith.constant 0 : index
      %c0_31 = arith.constant 0 : index
      %46 = vector.load %arg10[%c0_30, %c0_31] : memref<8x32xbf16, #tpu.memory_space<vmem>>, vector<8x32xbf16>
      tpu.vector_store %arg10[%c0_30, %c0_31], %45 {strides = array<i32>} : memref<8x32xbf16, #tpu.memory_space<vmem>>, vector<8x32xbf16>,
      %c0_32 = arith.constant 0 : index
      %c0_33 = arith.constant 0 : index
      %c0_34 = arith.constant 0 : index
      %47 = vector.load %arg9[%c0_32, %c0_33, %c0_34] : memref<1x8x32xf32, #tpu.memory_space<vmem>>, vector<1x8x32xf32>
      %48 = vector.shape_cast %47 : vector<1x8x32xf32> to vector<8x32xf32>
      %49 = vector.shape_cast %29 : vector<8x32xf32> to vector<1x8x32xf32>
      tpu.vector_store %arg9[%c0_32, %c0_33, %c0_34], %49 {strides = array<i32>} : memref<1x8x32xf32, #tpu.memory_space<vmem>>, vector<1x8x32xf32>,
    } else {
    }
    %c0 = arith.constant 0 : index
    %c0_1 = arith.constant 0 : index
    %3 = vector.load %arg10[%c0, %c0_1] : memref<8x32xbf16, #tpu.memory_space<vmem>>, vector<8x32xbf16>
    %c0_2 = arith.constant 0 : index
    %c0_3 = arith.constant 0 : index
    %4 = vector.load %arg7[%c0_2, %c0_3] : memref<32x64xbf16, #tpu.memory_space<vmem>>, vector<32x64xbf16>
    %cst = arith.constant dense<0.000000e+00> : vector<8x64xf32>
    %5 = tpu.matmul %3, %4, %cst {dimension_numbers = #tpu.dot_dimension_numbers<[1], [0], [0], [1], [0, 0, 1, 1], [], []>} : vector<8x32xbf16>, vector<32x64xbf16>, vector<8x64xf32> -> vector<8x64xf32>
    %cst_4 = arith.constant 5.000000e-01 : f32
    %6 = vector.broadcast %cst_4 : f32 to vector<8x64xf32>
    %7 = arith.mulf %5, %6 : vector<8x64xf32>
    %cst_5 = arith.constant 0.707106769 : f32
    %8 = vector.broadcast %cst_5 : f32 to vector<8x64xf32>
    %9 = arith.mulf %5, %8 : vector<8x64xf32>
    %10 = math.erf %9 : vector<8x64xf32>
    %cst_6 = arith.constant 1.000000e+00 : f32
    %11 = vector.broadcast %cst_6 : f32 to vector<8x64xf32>
    %12 = arith.addf %11, %10 : vector<8x64xf32>
    %13 = arith.mulf %7, %12 : vector<8x64xf32>
    %14 = arith.truncf %13 : vector<8x64xf32> to vector<8x64xbf16>
    %c0_7 = arith.constant 0 : index
    %c0_8 = arith.constant 0 : index
    %c0_9 = arith.constant 0 : index
    %15 = vector.load %arg9[%c0_7, %c0_8, %c0_9] : memref<1x8x32xf32, #tpu.memory_space<vmem>>, vector<1x8x32xf32>
    %16 = vector.shape_cast %15 : vector<1x8x32xf32> to vector<8x32xf32>
    %c0_10 = arith.constant 0 : index
    %c0_11 = arith.constant 0 : index
    %17 = vector.load %arg8[%c0_10, %c0_11] : memref<64x32xbf16, #tpu.memory_space<vmem>>, vector<64x32xbf16>
    %cst_12 = arith.constant dense<0.000000e+00> : vector<8x32xf32>
    %18 = tpu.matmul %14, %17, %cst_12 {dimension_numbers = #tpu.dot_dimension_numbers<[1], [0], [0], [1], [0, 0, 1, 1], [], []>} : vector<8x64xbf16>, vector<64x32xbf16>, vector<8x32xf32> -> vector<8x32xf32>
    %19 = arith.addf %16, %18 : vector<8x32xf32>
    %c0_13 = arith.constant 0 : index
    %c0_14 = arith.constant 0 : index
    %c0_15 = arith.constant 0 : index
    %20 = vector.load %arg9[%c0_13, %c0_14, %c0_15] : memref<1x8x32xf32, #tpu.memory_space<vmem>>, vector<1x8x32xf32>
    %21 = vector.shape_cast %20 : vector<1x8x32xf32> to vector<8x32xf32>
    %22 = vector.shape_cast %19 : vector<8x32xf32> to vector<1x8x32xf32>
    tpu.vector_store %arg9[%c0_13, %c0_14, %c0_15], %22 {strides = array<i32>} : memref<1x8x32xf32, #tpu.memory_space<vmem>>, vector<1x8x32xf32>,
    return
  }
  func.func @transform_0(%arg0: i32, %arg1: i32, %arg2: i32) -> (i32, i32, i32) {
    %c0_i32 = arith.constant 0 : i32
    %c0_i32_0 = arith.constant 0 : i32
    return %arg0, %arg1, %c0_i32 : i32, i32, i32
  }
  func.func @transform_1(%arg0: i32, %arg1: i32, %arg2: i32) -> (i32, i32, i32) {
    %c0_i32 = arith.constant 0 : i32
    %c0_i32_0 = arith.constant 0 : i32
    return %arg0, %arg1, %c0_i32 : i32, i32, i32
  }
  func.func @transform_2(%arg0: i32, %arg1: i32, %arg2: i32) -> (i32, i32) {
    %c0_i32 = arith.constant 0 : i32
    %c0_i32_0 = arith.constant 0 : i32
    %c0_i32_1 = arith.constant 0 : i32
    return %c0_i32, %c0_i32_0 : i32, i32
  }
  func.func @transform_3(%arg0: i32, %arg1: i32, %arg2: i32) -> (i32, i32) {
    %c0_i32 = arith.constant 0 : i32
    %c0_i32_0 = arith.constant 0 : i32
    %c0_i32_1 = arith.constant 0 : i32
    return %c0_i32, %c0_i32_0 : i32, i32
  }
  func.func @transform_4(%arg0: i32, %arg1: i32, %arg2: i32) -> (i32, i32) {
    %c0_i32 = arith.constant 0 : i32
    %c0_i32_0 = arith.constant 0 : i32
    return %c0_i32, %arg2 : i32, i32
  }
  func.func @transform_5(%arg0: i32, %arg1: i32, %arg2: i32) -> (i32, i32) {
    %c0_i32 = arith.constant 0 : i32
    %c0_i32_0 = arith.constant 0 : i32
    return %arg2, %c0_i32 : i32, i32
  }
  func.func @transform_6(%arg0: i32, %arg1: i32, %arg2: i32) -> (i32, i32, i32) {
    %c0_i32 = arith.constant 0 : i32
    %c0_i32_0 = arith.constant 0 : i32
    return %arg0, %arg1, %c0_i32 : i32, i32, i32
  }
}

module attributes {stable_mosaic.version = 11 : i64} {
  func.func @lm_head_kernel(%arg0: i32, %arg1: i32, %arg2: i32, %arg3: memref<1x8x32xbf16, #tpu.memory_space<vmem>>, %arg4: memref<32x64xbf16, #tpu.memory_space<vmem>>, %arg5: memref<1x8x64xf32, #tpu.memory_space<vmem>>) attributes {dimension_semantics = [#tpu.dimension_semantics<parallel>, #tpu.dimension_semantics<parallel>, #tpu.dimension_semantics<parallel>], iteration_bounds = array<i64: 1, 2, 1>, scalar_prefetch = 0 : i64, scratch_operands = 0 : i64, tpu.core_type = #tpu.core_type<tc>, window_params = [{transform_indices = @transform_0, window_bounds = array<i64: 1, 8, 32>}, {transform_indices = @transform_1, window_bounds = array<i64: 32, 64>}, {transform_indices = @transform_2, window_bounds = array<i64: 1, 8, 64>}]} {
    %c0 = arith.constant 0 : index
    %c0_0 = arith.constant 0 : index
    %c0_1 = arith.constant 0 : index
    %0 = vector.load %arg3[%c0, %c0_0, %c0_1] : memref<1x8x32xbf16, #tpu.memory_space<vmem>>, vector<1x8x32xbf16>
    %1 = vector.shape_cast %0 : vector<1x8x32xbf16> to vector<8x32xbf16>
    %c0_2 = arith.constant 0 : index
    %c0_3 = arith.constant 0 : index
    %2 = vector.load %arg4[%c0_2, %c0_3] : memref<32x64xbf16, #tpu.memory_space<vmem>>, vector<32x64xbf16>
    %cst = arith.constant dense<0.000000e+00> : vector<8x64xf32>
    %3 = tpu.matmul %1, %2, %cst {dimension_numbers = #tpu.dot_dimension_numbers<[1], [0], [0], [1], [0, 0, 1, 1], [], []>} : vector<8x32xbf16>, vector<32x64xbf16>, vector<8x64xf32> -> vector<8x64xf32>
    %c0_4 = arith.constant 0 : index
    %c0_5 = arith.constant 0 : index
    %c0_6 = arith.constant 0 : index
    %4 = vector.load %arg5[%c0_4, %c0_5, %c0_6] : memref<1x8x64xf32, #tpu.memory_space<vmem>>, vector<1x8x64xf32>
    %5 = vector.shape_cast %4 : vector<1x8x64xf32> to vector<8x64xf32>
    %6 = vector.shape_cast %3 : vector<8x64xf32> to vector<1x8x64xf32>
    tpu.vector_store %arg5[%c0_4, %c0_5, %c0_6], %6 {strides = array<i32>} : memref<1x8x64xf32, #tpu.memory_space<vmem>>, vector<1x8x64xf32>,
    return
  }
  func.func @transform_0(%arg0: i32, %arg1: i32, %arg2: i32) -> (i32, i32, i32) {
    %c0_i32 = arith.constant 0 : i32
    %c0_i32_0 = arith.constant 0 : i32
    return %arg1, %arg2, %c0_i32 : i32, i32, i32
  }
  func.func @transform_1(%arg0: i32, %arg1: i32, %arg2: i32) -> (i32, i32) {
    %c0_i32 = arith.constant 0 : i32
    %c0_i32_0 = arith.constant 0 : i32
    return %c0_i32, %arg0 : i32, i32
  }
  func.func @transform_2(%arg0: i32, %arg1: i32, %arg2: i32) -> (i32, i32, i32) {
    %c0_i32 = arith.constant 0 : i32
    return %arg1, %arg2, %arg0 : i32, i32, i32
  }
}

</mosaic_0001>

<llo_original>
// kernel: transformer_lm_forward.10
$region0: #{transformer_lm_forward.10}
  #allocation0 [shape = 'u32[]', space=smem, size = 0x4, offset = 0x4, fixed_abs, tag = 'smem constant byte address 0x4 - core index']
  #allocation1 [shape = 'u32[144,128]{1,0:T(1,128)}', space=vmem, size = 0x12000, scoped, tag = 'internal scratch']
  %s0 = inlined_call_operand.hbm [shape: f32[2,8,32], index: 0, kind: input, shape index: {}]
  %s1 = inlined_call_operand.hbm [shape: f32[1,32], index: 1, kind: input, shape index: {}]
  %s2 = inlined_call_operand.hbm [shape: bf16[2,8,32], index: 2, kind: output, shape index: {}]
  %s3 = sld [smem:[#allocation0]]
  $region49: #{transformer_lm_forward.10} parent=0
    _
  %s5 = ssub.s32 1, %s3
  %s6 = scalar_select 0, %s5, %s3
  $region1: #{transformer_lm_forward.10} parent=0
    #allocation2 [shape = 'u8[8192]{0}', space=vmem, size = 0x2000, scoped, tag = 'input window, operand 0']
    #allocation3 [shape = 's32[2]{0}', space=sflag, size = 0x8, scoped, tag = 'scoped memory for transformer_lm_forward.10']
    #allocation4 [shape = 's32[2]{0}', space=sflag, size = 0x8, scoped, tag = 'scoped memory for transformer_lm_forward.10']
    #allocation5 [shape = 'u8[512]{0}', space=vmem, size = 0x400, scoped, tag = 'input window, operand 1, single buffered']
    #allocation6 [shape = 's32[1]{0}', space=sflag, size = 0x4, scoped, tag = 'scoped memory for transformer_lm_forward.10']
    #allocation7 [shape = 'u8[4096]{0}', space=vmem, size = 0x1000, scoped, tag = 'output window, operand 0']
    %7 = vsyncpa [#allocation3], 0
    %s8 = scalar_lea.sflag [#allocation3], 1
    %9 = vsyncpa %s8, 0
    %10 = vsyncpa [#allocation6], 0
    %11 = vsyncpa [#allocation4], 0
    %s12 = scalar_lea.sflag [#allocation4], 1
    %13 = vsyncpa %s12, 0
    loop: start=0, step=1, limit=4
    $region2: #{transformer_lm_forward.10} parent=1 // loop_pre_header
      _
    $region3: #{transformer_lm_forward.10} parent=1 // loop_header
      %s15 = sphi 0, %s19
      %p16 = scmp.ge.s32.totalorder %s15, 4
      %s22 = sphi 0, %s34
      %s23 = sphi 0, %s30
      %s24 = sphi 0, %s22
      %s25 = sphi 0, %s23
      %s26 = sphi 0, %s24
      %s27 = sphi 0, %s25
      %s39 = sphi 0, %s41
      %s42 = sphi 0, %s39
      %s43 = sphi 0, %s42
      %s59 = sphi 0, %s43
      %s63 = sphi 0, %s63
      %s65 = sphi 0, %s63
      %s66 = sphi 0, %s65
      %s80 = sphi 0, %s66
      %s88 = sphi 0, %s90
      %s91 = sphi 0, %s88
      %s92 = sphi 0, %s91
      %s108 = sphi 0, %s92
    $region4: #{transformer_lm_forward.10} parent=1 // loop_header_branch
      %18 = sbr.rel (%p16) target = $region8
    $region5: #{transformer_lm_forward.10} parent=1 // loop_body
      %s20 = ssub.s32 %s15, 1
      %s21 = ssub.s32 %s15, 2
      %s28 = sadd.s32 1, %s23
      %p29 = scmp.ge.s32.totalorder %s28, 1
      %s30 = scalar_select %p29, 0, %s28
      %s31 = sadd.s32 1, %s22
      %s32 = scalar_select %p29, %s31, %s22
      %p33 = scmp.ge.s32.totalorder %s32, 2
      %s34 = scalar_select %p33, 0, %s32
      %s35 = ssub.s32 %s22, %s34
      %s36 = ssub.s32 %s23, %s30
      %s37 = sor.u32 %s35, %s36
      %p38 = scmp.eq.s32.totalorder %s37, 0
      %s40 = sadd.s32 %s39, 1
      %s41 = scalar_select %p38, %s39, %s40
      %p44 = pneg %p38
      %p45 = scmp.eq.s32.totalorder %s15, 1
      %p46 = por %p44, %p45
      %p47 = scmp.ne.s32.totalorder %s39, %s42
      %p48 = scmp.eq.s32.totalorder %s15, 0
      %p49 = por %p47, %p48
      %p50 = scmp.ne.s32.totalorder %s39, %s42
      %p51 = scmp.eq.s32.totalorder %s20, 1
      %p52 = por %p50, %p51
      %p53 = scmp.ne.s32.totalorder %s42, %s43
      %p54 = scmp.eq.s32.totalorder %s20, 0
      %p55 = por %p53, %p54
      %p56 = scmp.ne.s32.totalorder %s42, %s43
      %p57 = scmp.eq.s32.totalorder %s21, 1
      %p58 = por %p56, %p57
      %p60 = scmp.ne.s32.totalorder %s43, %s59
      %p61 = scmp.eq.s32.totalorder %s21, 0
      %p62 = por %p60, %p61
      %s64 = sadd.s32 %s63, 1
      %p67 = scmp.eq.s32.totalorder %s15, 1
      %p68 = scmp.ne.s32.totalorder %s63, %s65
      %p69 = scmp.eq.s32.totalorder %s15, 0
      %p70 = por %p68, %p69
      %p71 = scmp.ne.s32.totalorder %s63, %s65
      %p72 = scmp.eq.s32.totalorder %s20, 1
      %p73 = por %p71, %p72
      %p74 = scmp.ne.s32.totalorder %s65, %s66
      %p75 = scmp.eq.s32.totalorder %s20, 0
      %p76 = por %p74, %p75
      %p77 = scmp.ne.s32.totalorder %s65, %s66
      %p78 = scmp.eq.s32.totalorder %s21, 1
      %p79 = por %p77, %p78
      %p81 = scmp.ne.s32.totalorder %s66, %s80
      %p82 = scmp.eq.s32.totalorder %s21, 0
      %p83 = por %p81, %p82
      %s84 = ssub.s32 %s22, %s34
      %s85 = ssub.s32 %s23, %s30
      %s86 = sor.u32 %s84, %s85
      %p87 = scmp.eq.s32.totalorder %s86, 0
      %s89 = sadd.s32 %s88, 1
      %s90 = scalar_select %p87, %s88, %s89
      %p93 = pneg %p87
      %p94 = scmp.eq.s32.totalorder %s15, 1
      %p95 = por %p93, %p94
      %p96 = scmp.ne.s32.totalorder %s88, %s91
      %p97 = scmp.eq.s32.totalorder %s15, 0
      %p98 = por %p96, %p97
      %p99 = scmp.ne.s32.totalorder %s88, %s91
      %p100 = scmp.eq.s32.totalorder %s20, 1
      %p101 = por %p99, %p100
      %p102 = scmp.ne.s32.totalorder %s91, %s92
      %p103 = scmp.eq.s32.totalorder %s20, 0
      %p104 = por %p102, %p103
      %p105 = scmp.ne.s32.totalorder %s91, %s92
      %p106 = scmp.eq.s32.totalorder %s21, 1
      %p107 = por %p105, %p106
      %p109 = scmp.ne.s32.totalorder %s92, %s108
      %p110 = scmp.eq.s32.totalorder %s21, 0
      %p111 = por %p109, %p110
      %p112 = scmp.le.s32.totalorder 1, %s15
      %p113 = scmp.lt.s32.totalorder %s15, 3
      %p114 = pnand %p112, %p113
      %p115 = pneg %p114
      // Predicated region
      $region9: #{transformer_lm_forward.10} parent=5 // pred_check
        _
      $region10: #{transformer_lm_forward.10} parent=5 // pred_check_branch
        %117 = sbr.rel (%p114) target = $region12
      $region11: #{transformer_lm_forward.10} parent=5 // pred_region
        %s118 = ssub.s32 %s15, 1
        // Predicated region
        $region13: #{transformer_lm_forward.10} parent=11 // pred_check
          %p119 = pneg %p76
        $region14: #{transformer_lm_forward.10} parent=11 // pred_check_branch
          %121 = sbr.rel (%p119) target = $region16
        $region15: #{transformer_lm_forward.10} parent=11 // pred_region
          %s123 = ssub.s32 16, 16
          %124 = vsyncadd [#allocation6], %s123
          %s126 = sshll.u32 [#allocation5], 4
          %s127 = int_to_ptr.vmem [resolvable:$true] %s126
          %129 = dma.hbm_to_vmem [thread:$0]  %s1, 16, %s127, [#allocation6]
        $region16: #{transformer_lm_forward.10} parent=11 // pred_fallthru
          _
      $region12: #{transformer_lm_forward.10} parent=5 // pred_fallthru
        _
      %p130 = scmp.lt.s32.totalorder %s15, 2
      // Predicated region
      $region17: #{transformer_lm_forward.10} parent=5 // pred_check
        %p131 = pneg %p130
      $region18: #{transformer_lm_forward.10} parent=5 // pred_check_branch
        %133 = sbr.rel (%p131) target = $region20
      $region19: #{transformer_lm_forward.10} parent=5 // pred_region
        // Predicated region
        $region21: #{transformer_lm_forward.10} parent=19 // pred_check
          %p134 = pneg %p49
        $region22: #{transformer_lm_forward.10} parent=19 // pred_check_branch
          %136 = sbr.rel (%p134) target = $region24
        $region23: #{transformer_lm_forward.10} parent=19 // pred_region
          %s137 = sand.u32 %s39, 1
          %s138 = scalar_lea.sflag [#allocation3], %s137
          %s139 = sand.u32 %s39, 1
          %s140 = smul.addr %s139, 8
          %s141 = scalar_lea.vmem [#allocation2], %s140
          %s143 = ssub.s32 128, 128
          %144 = vsyncadd %s138, %s143
          %s145 = sadd.s32 %s23, %s22
          %s146 = smul.addr %s145, 128
          %s147 = scalar_lea.hbm %s0, %s146
          %s149 = sshll.u32 %s141, 4
          %s150 = int_to_ptr.vmem [resolvable:$true] %s149
          %152 = dma.hbm_to_vmem [thread:$0]  %s147, 128, %s150, %s138
        $region24: #{transformer_lm_forward.10} parent=19 // pred_fallthru
          _
      $region20: #{transformer_lm_forward.10} parent=5 // pred_fallthru
        _
      %p153 = scmp.le.s32.totalorder 1, %s15
      %p154 = scmp.lt.s32.totalorder %s15, 3
      %p155 = pnand %p153, %p154
      %p156 = pneg %p155
      // Predicated region
      $region25: #{transformer_lm_forward.10} parent=5 // pred_check
        _
      $region26: #{transformer_lm_forward.10} parent=5 // pred_check_branch
        %158 = sbr.rel (%p155) target = $region28
      $region27: #{transformer_lm_forward.10} parent=5 // pred_region
        %s159 = ssub.s32 %s15, 1
        %s160 = sand.u32 %s42, 1
        %s161 = scalar_lea.sflag [#allocation3], %s160
        %s162 = sand.u32 %s42, 1
        %s163 = smul.addr %s162, 8
        %s164 = scalar_lea.vmem [#allocation2], %s163
        // Predicated region
        $region29: #{transformer_lm_forward.10} parent=27 // pred_check
          %p165 = pneg %p55
        $region30: #{transformer_lm_forward.10} parent=27 // pred_check_branch
          %167 = sbr.rel (%p165) target = $region32
        $region31: #{transformer_lm_forward.10} parent=27 // pred_region
          %168 = dma.done %s161, 128
        $region32: #{transformer_lm_forward.10} parent=27 // pred_fallthru
          _
        // Predicated region
        $region33: #{transformer_lm_forward.10} parent=27 // pred_check
          %p169 = pneg %p76
        $region34: #{transformer_lm_forward.10} parent=27 // pred_check_branch
          %171 = sbr.rel (%p169) target = $region36
        $region35: #{transformer_lm_forward.10} parent=27 // pred_region
          %172 = dma.done [#allocation6], 16
        $region36: #{transformer_lm_forward.10} parent=27 // pred_fallthru
          _
        %s173 = sand.u32 %s42, 1
        %s174 = scalar_lea.sflag [#allocation3], %s173
        %s175 = sand.u32 %s42, 1
        %s176 = smul.addr %s175, 8
        %s177 = scalar_lea.vmem [#allocation2], %s176
        %p178 = pneg %p55
        %p179 = pneg %p52
        %p180 = pneg %p76
        %p181 = pneg %p73
        %p182 = pneg %p104
        %p183 = pneg %p101
        %s184 = sand.u32 %s91, 1
        %s185 = scalar_lea.sflag [#allocation4], %s184
        %s186 = sand.u32 %s91, 1
        %s187 = smul.addr %s186, 4
        %s188 = scalar_lea.vmem [#allocation7], %s187
        %v189 = vld [vmem:[%s164] sm:$0xff]
        %v190 = vld [vmem:[#allocation5] sm:$0x1]
        %v191 = vmul.f32 %v189, %v189
        %vm192 = vcmask 261120
        %v193 = vsel %vm192, %v191, 0.0
        %194 = vadd.xlane.f32.xlu0 %v193
        %v195 = vpop.xlane.xlu0 %194
        %v196 = vrcp.pop 32.0
        %v197 = vmul.f32 %v195, %v196
        %v198 = vadd.f32 %v197, 1e-05
        %v199 = vrsqrt.pop %v198
        %v200 = vmul.f32 %v189, %v199
        %v202 = vlaneseq
        %v203 = vshrl.u32 %v202, 7
        %v204 = vsub.s32 0, %v203
        %v205 = vrot.slane %v190, %v204
        %v207 = vmul.f32 %v200, %v205
        %v208 = vpack.c.bf16 %v207, %v207
        %vm209 = vcmask 257024
        %210 = vst.msk [vmem:[%s188] sm:$0xf] %vm209, %v208
        %s211 = sand.u32 %s91, 1
        %s212 = scalar_lea.sflag [#allocation4], %s211
        %s213 = sand.u32 %s91, 1
        %s214 = smul.addr %s213, 4
        %s215 = scalar_lea.vmem [#allocation7], %s214
        // Predicated region
        $region37: #{transformer_lm_forward.10} parent=27 // pred_check
          %p216 = pneg %p101
        $region38: #{transformer_lm_forward.10} parent=27 // pred_check_branch
          %218 = sbr.rel (%p216) target = $region40
        $region39: #{transformer_lm_forward.10} parent=27 // pred_region
          %s220 = ssub.s32 64, 64
          %221 = vsyncadd %s212, %s220
          %s222 = sadd.s32 %s25, %s24
          %s223 = smul.addr %s222, 64
          %s224 = scalar_lea.hbm %s2, %s223
          %s226 = sshll.u32 %s215, 4
          %s227 = int_to_ptr.vmem [resolvable:$true] %s226
          %229 = dma.vmem_to_hbm [thread:$0]  %s227, 64, %s224, %s212
        $region40: #{transformer_lm_forward.10} parent=27 // pred_fallthru
          _
      $region28: #{transformer_lm_forward.10} parent=5 // pred_fallthru
        _
      %p230 = scmp.le.s32.totalorder 2, %s15
      // Predicated region
      $region41: #{transformer_lm_forward.10} parent=5 // pred_check
        %p231 = pneg %p230
      $region42: #{transformer_lm_forward.10} parent=5 // pred_check_branch
        %233 = sbr.rel (%p231) target = $region44
      $region43: #{transformer_lm_forward.10} parent=5 // pred_region
        %s234 = ssub.s32 %s15, 2
        // Predicated region
        $region45: #{transformer_lm_forward.10} parent=43 // pred_check
          %p235 = pneg %p107
        $region46: #{transformer_lm_forward.10} parent=43 // pred_check_branch
          %237 = sbr.rel (%p235) target = $region48
        $region47: #{transformer_lm_forward.10} parent=43 // pred_region
          %s238 = sand.u32 %s92, 1
          %s239 = scalar_lea.sflag [#allocation4], %s238
          %s240 = sand.u32 %s92, 1
          %s241 = smul.addr %s240, 4
          %s242 = scalar_lea.vmem [#allocation7], %s241
          %243 = dma.done %s239, 64
        $region48: #{transformer_lm_forward.10} parent=43 // pred_fallthru
          _
      $region44: #{transformer_lm_forward.10} parent=5 // pred_fallthru
        _
    $region6: #{transformer_lm_forward.10} parent=1 // loop_footer
      %s19 = sadd.s32 1, %s15
    $region7: #{transformer_lm_forward.10} parent=1 // loop_footer_branch
      %14 = sbr.rel target = $region3
    $region8: #{transformer_lm_forward.10} parent=1 // loop_exit
      _
    %244 = vsyncpa [#allocation3], 1
    %s245 = scalar_lea.sflag [#allocation3], 1
    %246 = vsyncpa %s245, 1
    %247 = vsyncpa [#allocation6], 1
    %248 = vsyncpa [#allocation4], 1
    %s249 = scalar_lea.sflag [#allocation4], 1
    %250 = vsyncpa %s249, 1

// kernel: transformer_lm_forward.11
$region0: #{transformer_lm_forward.11}
  #allocation0 [shape = 'u32[]', space=smem, size = 0x4, offset = 0x4, fixed_abs, tag = 'smem constant byte address 0x4 - core index']
  #allocation1 [shape = 'u32[144,128]{1,0:T(1,128)}', space=vmem, size = 0x12000, scoped, tag = 'internal scratch']
  %s0 = inlined_call_operand.hbm [shape: bf16[2,8,32], index: 0, kind: input, shape index: {}]
  %s1 = inlined_call_operand.hbm [shape: bf16[32,32], index: 1, kind: input, shape index: {}]
  %s2 = inlined_call_operand.hbm [shape: bf16[32,32], index: 2, kind: input, shape index: {}]
  %s3 = inlined_call_operand.hbm [shape: bf16[32,32], index: 3, kind: input, shape index: {}]
  %s4 = inlined_call_operand.hbm [shape: bf16[2,8,32], index: 4, kind: output, shape index: {0}]
  %s5 = inlined_call_operand.hbm [shape: bf16[2,8,32], index: 5, kind: output, shape index: {1}]
  %s6 = inlined_call_operand.hbm [shape: bf16[2,8,32], index: 6, kind: output, shape index: {2}]
  %7 = xla_tuple %s4, %s5, %s6
  %s8 = sld [smem:[#allocation0]]
  $region81: #{transformer_lm_forward.11} parent=0
    _
  %s10 = ssub.s32 1, %s8
  %s11 = scalar_select 0, %s10, %s8
  $region1: #{transformer_lm_forward.11} parent=0
    #allocation2 [shape = 'u8[4096]{0}', space=vmem, size = 0x1000, scoped, tag = 'input window, operand 0']
    #allocation3 [shape = 's32[2]{0}', space=sflag, size = 0x8, scoped, tag = 'scoped memory for transformer_lm_forward.11']
    #allocation4 [shape = 's32[2]{0}', space=sflag, size = 0x8, scoped, tag = 'scoped memory for transformer_lm_forward.11']
    #allocation5 [shape = 'u8[8192]{0}', space=vmem, size = 0x2000, scoped, tag = 'input window, operand 1, single buffered']
    #allocation6 [shape = 's32[1]{0}', space=sflag, size = 0x4, scoped, tag = 'scoped memory for transformer_lm_forward.11']
    #allocation7 [shape = 'u8[8192]{0}', space=vmem, size = 0x2000, scoped, tag = 'input window, operand 2, single buffered']
    #allocation8 [shape = 'u8[8192]{0}', space=vmem, size = 0x2000, scoped, tag = 'input window, operand 3, single buffered']
    #allocation9 [shape = 's32[1]{0}', space=sflag, size = 0x4, scoped, tag = 'scoped memory for transformer_lm_forward.11']
    #allocation10 [shape = 'u8[4096]{0}', space=vmem, size = 0x1000, scoped, tag = 'output window, operand 0']
    #allocation11 [shape = 'u8[4096]{0}', space=vmem, size = 0x1000, scoped, tag = 'output window, operand 1']
    #allocation12 [shape = 's32[2]{0}', space=sflag, size = 0x8, scoped, tag = 'scoped memory for transformer_lm_forward.11']
    #allocation13 [shape = 'u8[4096]{0}', space=vmem, size = 0x1000, scoped, tag = 'output window, operand 2']
    %12 = vsyncpa [#allocation3], 0
    %s13 = scalar_lea.sflag [#allocation3], 1
    %14 = vsyncpa %s13, 0
    %15 = vsyncpa [#allocation6], 0
    %16 = vsyncpa [#allocation9], 0
    %17 = vsyncpa [#allocation4], 0
    %s18 = scalar_lea.sflag [#allocation4], 1
    %19 = vsyncpa %s18, 0
    %20 = vsyncpa [#allocation12], 0
    %s21 = scalar_lea.sflag [#allocation12], 1
    %22 = vsyncpa %s21, 0
    loop: start=0, step=1, limit=4
    $region2: #{transformer_lm_forward.11} parent=1 // loop_pre_header
      _
    $region3: #{transformer_lm_forward.11} parent=1 // loop_header
      %s24 = sphi 0, %s28
      %p25 = scmp.ge.s32.totalorder %s24, 4
      %s31 = sphi 0, %s50
      %s32 = sphi 0, %s46
      %s33 = sphi 0, %s42
      %s34 = sphi 0, %s31
      %s35 = sphi 0, %s32
      %s36 = sphi 0, %s33
      %s37 = sphi 0, %s34
      %s38 = sphi 0, %s35
      %s39 = sphi 0, %s36
      %s55 = sphi 0, %s57
      %s58 = sphi 0, %s55
      %s59 = sphi 0, %s58
      %s75 = sphi 0, %s59
      %s81 = sphi 0, %s83
      %s84 = sphi 0, %s81
      %s85 = sphi 0, %s84
      %s101 = sphi 0, %s85
      %s107 = sphi 0, %s109
      %s110 = sphi 0, %s107
      %s111 = sphi 0, %s110
      %s127 = sphi 0, %s111
      %s133 = sphi 0, %s135
      %s136 = sphi 0, %s133
      %s137 = sphi 0, %s136
      %s153 = sphi 0, %s137
      %s163 = sphi 0, %s165
      %s166 = sphi 0, %s163
      %s167 = sphi 0, %s166
      %s183 = sphi 0, %s167
      %s193 = sphi 0, %s195
      %s196 = sphi 0, %s193
      %s197 = sphi 0, %s196
      %s213 = sphi 0, %s197
      %s223 = sphi 0, %s225
      %s226 = sphi 0, %s223
      %s227 = sphi 0, %s226
      %s243 = sphi 0, %s227
    $region4: #{transformer_lm_forward.11} parent=1 // loop_header_branch
      %27 = sbr.rel (%p25) target = $region8
    $region5: #{transformer_lm_forward.11} parent=1 // loop_body
      %s29 = ssub.s32 %s24, 1
      %s30 = ssub.s32 %s24, 2
      %s40 = sadd.s32 1, %s33
      %p41 = scmp.ge.s32.totalorder %s40, 1
      %s42 = scalar_select %p41, 0, %s40
      %s43 = sadd.s32 1, %s32
      %s44 = scalar_select %p41, %s43, %s32
      %p45 = scmp.ge.s32.totalorder %s44, 2
      %s46 = scalar_select %p45, 0, %s44
      %s47 = sadd.s32 1, %s31
      %s48 = scalar_select %p45, %s47, %s31
      %p49 = scmp.ge.s32.totalorder %s48, 1
      %s50 = scalar_select %p49, 0, %s48
      %s51 = ssub.s32 %s32, %s46
      %s52 = ssub.s32 %s33, %s42
      %s53 = sor.u32 %s51, %s52
      %p54 = scmp.eq.s32.totalorder %s53, 0
      %s56 = sadd.s32 %s55, 1
      %s57 = scalar_select %p54, %s55, %s56
      %p60 = pneg %p54
      %p61 = scmp.eq.s32.totalorder %s24, 1
      %p62 = por %p60, %p61
      %p63 = scmp.ne.s32.totalorder %s55, %s58
      %p64 = scmp.eq.s32.totalorder %s24, 0
      %p65 = por %p63, %p64
      %p66 = scmp.ne.s32.totalorder %s55, %s58
      %p67 = scmp.eq.s32.totalorder %s29, 1
      %p68 = por %p66, %p67
      %p69 = scmp.ne.s32.totalorder %s58, %s59
      %p70 = scmp.eq.s32.totalorder %s29, 0
      %p71 = por %p69, %p70
      %p72 = scmp.ne.s32.totalorder %s58, %s59
      %p73 = scmp.eq.s32.totalorder %s30, 1
      %p74 = por %p72, %p73
      %p76 = scmp.ne.s32.totalorder %s59, %s75
      %p77 = scmp.eq.s32.totalorder %s30, 0
      %p78 = por %p76, %p77
      %s79 = ssub.s32 %s31, %s50
      %p80 = scmp.eq.s32.totalorder %s79, 0
      %s82 = sadd.s32 %s81, 1
      %s83 = scalar_select %p80, %s81, %s82
      %p86 = pneg %p80
      %p87 = scmp.eq.s32.totalorder %s24, 1
      %p88 = por %p86, %p87
      %p89 = scmp.ne.s32.totalorder %s81, %s84
      %p90 = scmp.eq.s32.totalorder %s24, 0
      %p91 = por %p89, %p90
      %p92 = scmp.ne.s32.totalorder %s81, %s84
      %p93 = scmp.eq.s32.totalorder %s29, 1
      %p94 = por %p92, %p93
      %p95 = scmp.ne.s32.totalorder %s84, %s85
      %p96 = scmp.eq.s32.totalorder %s29, 0
      %p97 = por %p95, %p96
      %p98 = scmp.ne.s32.totalorder %s84, %s85
      %p99 = scmp.eq.s32.totalorder %s30, 1
      %p100 = por %p98, %p99
      %p102 = scmp.ne.s32.totalorder %s85, %s101
      %p103 = scmp.eq.s32.totalorder %s30, 0
      %p104 = por %p102, %p103
      %s105 = ssub.s32 %s31, %s50
      %p106 = scmp.eq.s32.totalorder %s105, 0
      %s108 = sadd.s32 %s107, 1
      %s109 = scalar_select %p106, %s107, %s108
      %p112 = pneg %p106
      %p113 = scmp.eq.s32.totalorder %s24, 1
      %p114 = por %p112, %p113
      %p115 = scmp.ne.s32.totalorder %s107, %s110
      %p116 = scmp.eq.s32.totalorder %s24, 0
      %p117 = por %p115, %p116
      %p118 = scmp.ne.s32.totalorder %s107, %s110
      %p119 = scmp.eq.s32.totalorder %s29, 1
      %p120 = por %p118, %p119
      %p121 = scmp.ne.s32.totalorder %s110, %s111
      %p122 = scmp.eq.s32.totalorder %s29, 0
      %p123 = por %p121, %p122
      %p124 = scmp.ne.s32.totalorder %s110, %s111
      %p125 = scmp.eq.s32.totalorder %s30, 1
      %p126 = por %p124, %p125
      %p128 = scmp.ne.s32.totalorder %s111, %s127
      %p129 = scmp.eq.s32.totalorder %s30, 0
      %p130 = por %p128, %p129
      %s131 = ssub.s32 %s31, %s50
      %p132 = scmp.eq.s32.totalorder %s131, 0
      %s134 = sadd.s32 %s133, 1
      %s135 = scalar_select %p132, %s133, %s134
      %p138 = pneg %p132
      %p139 = scmp.eq.s32.totalorder %s24, 1
      %p140 = por %p138, %p139
      %p141 = scmp.ne.s32.totalorder %s133, %s136
      %p142 = scmp.eq.s32.totalorder %s24, 0
      %p143 = por %p141, %p142
      %p144 = scmp.ne.s32.totalorder %s133, %s136
      %p145 = scmp.eq.s32.totalorder %s29, 1
      %p146 = por %p144, %p145
      %p147 = scmp.ne.s32.totalorder %s136, %s137
      %p148 = scmp.eq.s32.totalorder %s29, 0
      %p149 = por %p147, %p148
      %p150 = scmp.ne.s32.totalorder %s136, %s137
      %p151 = scmp.eq.s32.totalorder %s30, 1
      %p152 = por %p150, %p151
      %p154 = scmp.ne.s32.totalorder %s137, %s153
      %p155 = scmp.eq.s32.totalorder %s30, 0
      %p156 = por %p154, %p155
      %s157 = ssub.s32 %s32, %s46
      %s158 = ssub.s32 %s33, %s42
      %s159 = sor.u32 %s157, %s158
      %s160 = ssub.s32 %s31, %s50
      %s161 = sor.u32 %s159, %s160
      %p162 = scmp.eq.s32.totalorder %s161, 0
      %s164 = sadd.s32 %s163, 1
      %s165 = scalar_select %p162, %s163, %s164
      %p168 = pneg %p162
      %p169 = scmp.eq.s32.totalorder %s24, 1
      %p170 = por %p168, %p169
      %p171 = scmp.ne.s32.totalorder %s163, %s166
      %p172 = scmp.eq.s32.totalorder %s24, 0
      %p173 = por %p171, %p172
      %p174 = scmp.ne.s32.totalorder %s163, %s166
      %p175 = scmp.eq.s32.totalorder %s29, 1
      %p176 = por %p174, %p175
      %p177 = scmp.ne.s32.totalorder %s166, %s167
      %p178 = scmp.eq.s32.totalorder %s29, 0
      %p179 = por %p177, %p178
      %p180 = scmp.ne.s32.totalorder %s166, %s167
      %p181 = scmp.eq.s32.totalorder %s30, 1
      %p182 = por %p180, %p181
      %p184 = scmp.ne.s32.totalorder %s167, %s183
      %p185 = scmp.eq.s32.totalorder %s30, 0
      %p186 = por %p184, %p185
      %s187 = ssub.s32 %s32, %s46
      %s188 = ssub.s32 %s33, %s42
      %s189 = sor.u32 %s187, %s188
      %s190 = ssub.s32 %s31, %s50
      %s191 = sor.u32 %s189, %s190
      %p192 = scmp.eq.s32.totalorder %s191, 0
      %s194 = sadd.s32 %s193, 1
      %s195 = scalar_select %p192, %s193, %s194
      %p198 = pneg %p192
      %p199 = scmp.eq.s32.totalorder %s24, 1
      %p200 = por %p198, %p199
      %p201 = scmp.ne.s32.totalorder %s193, %s196
      %p202 = scmp.eq.s32.totalorder %s24, 0
      %p203 = por %p201, %p202
      %p204 = scmp.ne.s32.totalorder %s193, %s196
      %p205 = scmp.eq.s32.totalorder %s29, 1
      %p206 = por %p204, %p205
      %p207 = scmp.ne.s32.totalorder %s196, %s197
      %p208 = scmp.eq.s32.totalorder %s29, 0
      %p209 = por %p207, %p208
      %p210 = scmp.ne.s32.totalorder %s196, %s197
      %p211 = scmp.eq.s32.totalorder %s30, 1
      %p212 = por %p210, %p211
      %p214 = scmp.ne.s32.totalorder %s197, %s213
      %p215 = scmp.eq.s32.totalorder %s30, 0
      %p216 = por %p214, %p215
      %s217 = ssub.s32 %s32, %s46
      %s218 = ssub.s32 %s33, %s42
      %s219 = sor.u32 %s217, %s218
      %s220 = ssub.s32 %s31, %s50
      %s221 = sor.u32 %s219, %s220
      %p222 = scmp.eq.s32.totalorder %s221, 0
      %s224 = sadd.s32 %s223, 1
      %s225 = scalar_select %p222, %s223, %s224
      %p228 = pneg %p222
      %p229 = scmp.eq.s32.totalorder %s24, 1
      %p230 = por %p228, %p229
      %p231 = scmp.ne.s32.totalorder %s223, %s226
      %p232 = scmp.eq.s32.totalorder %s24, 0
      %p233 = por %p231, %p232
      %p234 = scmp.ne.s32.totalorder %s223, %s226
      %p235 = scmp.eq.s32.totalorder %s29, 1
      %p236 = por %p234, %p235
      %p237 = scmp.ne.s32.totalorder %s226, %s227
      %p238 = scmp.eq.s32.totalorder %s29, 0
      %p239 = por %p237, %p238
      %p240 = scmp.ne.s32.totalorder %s226, %s227
      %p241 = scmp.eq.s32.totalorder %s30, 1
      %p242 = por %p240, %p241
      %p244 = scmp.ne.s32.totalorder %s227, %s243
      %p245 = scmp.eq.s32.totalorder %s30, 0
      %p246 = por %p244, %p245
      %p247 = scmp.le.s32.totalorder 1, %s24
      %p248 = scmp.lt.s32.totalorder %s24, 3
      %p249 = pnand %p247, %p248
      %p250 = pneg %p249
      // Predicated region
      $region9: #{transformer_lm_forward.11} parent=5 // pred_check
        _
      $region10: #{transformer_lm_forward.11} parent=5 // pred_check_branch
        %252 = sbr.rel (%p249) target = $region12
      $region11: #{transformer_lm_forward.11} parent=5 // pred_region
        %s253 = ssub.s32 %s24, 1
        // Predicated region
        $region13: #{transformer_lm_forward.11} parent=11 // pred_check
          %p254 = pneg %p97
        $region14: #{transformer_lm_forward.11} parent=11 // pred_check_branch
          %256 = sbr.rel (%p254) target = $region16
        $region15: #{transformer_lm_forward.11} parent=11 // pred_region
          %s258 = ssub.s32 256, 256
          %259 = vsyncadd [#allocation6], %s258
          %s260 = smul.addr %s34, 64
          %s261 = scalar_lea.hbm %s1, %s260
          %s262 = sshll.u32 [#allocation5], 4
          %s263 = int_to_ptr.vmem [resolvable:$true] %s262
          %268 = dma.hbm_to_vmem [thread:$0]  %s261, 256, %s263, [#allocation6], 64, 64, 4
        $region16: #{transformer_lm_forward.11} parent=11 // pred_fallthru
          _
        // Predicated region
        $region17: #{transformer_lm_forward.11} parent=11 // pred_check
          %p269 = pneg %p123
        $region18: #{transformer_lm_forward.11} parent=11 // pred_check_branch
          %271 = sbr.rel (%p269) target = $region20
        $region19: #{transformer_lm_forward.11} parent=11 // pred_region
          %s273 = ssub.s32 256, 256
          %274 = vsyncadd [#allocation6], %s273
          %s275 = smul.addr %s34, 64
          %s276 = scalar_lea.hbm %s2, %s275
          %s277 = sshll.u32 [#allocation7], 4
          %s278 = int_to_ptr.vmem [resolvable:$true] %s277
          %283 = dma.hbm_to_vmem [thread:$0]  %s276, 256, %s278, [#allocation6], 64, 64, 4
        $region20: #{transformer_lm_forward.11} parent=11 // pred_fallthru
          _
        // Predicated region
        $region21: #{transformer_lm_forward.11} parent=11 // pred_check
          %p284 = pneg %p149
        $region22: #{transformer_lm_forward.11} parent=11 // pred_check_branch
          %286 = sbr.rel (%p284) target = $region24
        $region23: #{transformer_lm_forward.11} parent=11 // pred_region
          %s288 = ssub.s32 256, 256
          %289 = vsyncadd [#allocation9], %s288
          %s290 = smul.addr %s34, 64
          %s291 = scalar_lea.hbm %s3, %s290
          %s292 = sshll.u32 [#allocation8], 4
          %s293 = int_to_ptr.vmem [resolvable:$true] %s292
          %298 = dma.hbm_to_vmem [thread:$0]  %s291, 256, %s293, [#allocation9], 64, 64, 4
        $region24: #{transformer_lm_forward.11} parent=11 // pred_fallthru
          _
      $region12: #{transformer_lm_forward.11} parent=5 // pred_fallthru
        _
      %p299 = scmp.lt.s32.totalorder %s24, 2
      // Predicated region
      $region25: #{transformer_lm_forward.11} parent=5 // pred_check
        %p300 = pneg %p299
      $region26: #{transformer_lm_forward.11} parent=5 // pred_check_branch
        %302 = sbr.rel (%p300) target = $region28
      $region27: #{transformer_lm_forward.11} parent=5 // pred_region
        // Predicated region
        $region29: #{transformer_lm_forward.11} parent=27 // pred_check
          %p303 = pneg %p65
        $region30: #{transformer_lm_forward.11} parent=27 // pred_check_branch
          %305 = sbr.rel (%p303) target = $region32
        $region31: #{transformer_lm_forward.11} parent=27 // pred_region
          %s306 = sand.u32 %s55, 1
          %s307 = scalar_lea.sflag [#allocation3], %s306
          %s308 = sand.u32 %s55, 1
          %s309 = smul.addr %s308, 4
          %s310 = scalar_lea.vmem [#allocation2], %s309
          %s312 = ssub.s32 64, 64
          %313 = vsyncadd %s307, %s312
          %s314 = sadd.s32 %s33, %s32
          %s315 = smul.addr %s314, 64
          %s316 = scalar_lea.hbm %s0, %s315
          %s318 = sshll.u32 %s310, 4
          %s319 = int_to_ptr.vmem [resolvable:$true] %s318
          %321 = dma.hbm_to_vmem [thread:$0]  %s316, 64, %s319, %s307
        $region32: #{transformer_lm_forward.11} parent=27 // pred_fallthru
          _
      $region28: #{transformer_lm_forward.11} parent=5 // pred_fallthru
        _
      %p322 = scmp.le.s32.totalorder 1, %s24
      %p323 = scmp.lt.s32.totalorder %s24, 3
      %p324 = pnand %p322, %p323
      %p325 = pneg %p324
      // Predicated region
      $region33: #{transformer_lm_forward.11} parent=5 // pred_check
        _
      $region34: #{transformer_lm_forward.11} parent=5 // pred_check_branch
        %327 = sbr.rel (%p324) target = $region36
      $region35: #{transformer_lm_forward.11} parent=5 // pred_region
        %s328 = ssub.s32 %s24, 1
        %s329 = sand.u32 %s58, 1
        %s330 = scalar_lea.sflag [#allocation3], %s329
        %s331 = sand.u32 %s58, 1
        %s332 = smul.addr %s331, 4
        %s333 = scalar_lea.vmem [#allocation2], %s332
        // Predicated region
        $region37: #{transformer_lm_forward.11} parent=35 // pred_check
          %p334 = pneg %p71
        $region38: #{transformer_lm_forward.11} parent=35 // pred_check_branch
          %336 = sbr.rel (%p334) target = $region40
        $region39: #{transformer_lm_forward.11} parent=35 // pred_region
          %337 = dma.done %s330, 64
        $region40: #{transformer_lm_forward.11} parent=35 // pred_fallthru
          _
        // Predicated region
        $region41: #{transformer_lm_forward.11} parent=35 // pred_check
          %p338 = pneg %p97
        $region42: #{transformer_lm_forward.11} parent=35 // pred_check_branch
          %340 = sbr.rel (%p338) target = $region44
        $region43: #{transformer_lm_forward.11} parent=35 // pred_region
          %341 = dma.done [#allocation6], 256
        $region44: #{transformer_lm_forward.11} parent=35 // pred_fallthru
          _
        // Predicated region
        $region45: #{transformer_lm_forward.11} parent=35 // pred_check
          %p342 = pneg %p123
        $region46: #{transformer_lm_forward.11} parent=35 // pred_check_branch
          %344 = sbr.rel (%p342) target = $region48
        $region47: #{transformer_lm_forward.11} parent=35 // pred_region
          %345 = dma.done [#allocation6], 256
        $region48: #{transformer_lm_forward.11} parent=35 // pred_fallthru
          _
        // Predicated region
        $region49: #{transformer_lm_forward.11} parent=35 // pred_check
          %p346 = pneg %p149
        $region50: #{transformer_lm_forward.11} parent=35 // pred_check_branch
          %348 = sbr.rel (%p346) target = $region52
        $region51: #{transformer_lm_forward.11} parent=35 // pred_region
          %349 = dma.done [#allocation9], 256
        $region52: #{transformer_lm_forward.11} parent=35 // pred_fallthru
          _
        %s350 = sand.u32 %s58, 1
        %s351 = scalar_lea.sflag [#allocation3], %s350
        %s352 = sand.u32 %s58, 1
        %s353 = smul.addr %s352, 4
        %s354 = scalar_lea.vmem [#allocation2], %s353
        %p355 = pneg %p71
        %p356 = pneg %p68
        %p357 = pneg %p97
        %p358 = pneg %p94
        %p359 = pneg %p123
        %p360 = pneg %p120
        %p361 = pneg %p149
        %p362 = pneg %p146
        %p363 = pneg %p179
        %p364 = pneg %p176
        %s365 = sand.u32 %s166, 1
        %s366 = scalar_lea.sflag [#allocation4], %s365
        %s367 = sand.u32 %s166, 1
        %s368 = smul.addr %s367, 4
        %s369 = scalar_lea.vmem [#allocation10], %s368
        %p370 = pneg %p209
        %p371 = pneg %p206
        %s372 = sand.u32 %s29, 1
        %s373 = scalar_lea.sflag [#allocation12], %s372
        %s374 = sand.u32 %s196, 1
        %s375 = smul.addr %s374, 4
        %s376 = scalar_lea.vmem [#allocation11], %s375
        %p377 = pneg %p239
        %p378 = pneg %p236
        %s379 = sand.u32 %s29, 1
        %s380 = scalar_lea.sflag [#allocation12], %s379
        %s381 = sand.u32 %s226, 1
        %s382 = smul.addr %s381, 4
        %s383 = scalar_lea.vmem [#allocation13], %s382
        %v385 = vld [vmem:[%s333] sm:$0xf]
        %v386 = vld [vmem:[#allocation5] sm:$0xf]
        %v387 = vld [vmem:[#allocation5 + $0x4] sm:$0xf]
        %v388 = vld [vmem:[#allocation5 + $0x8] sm:$0xf]
        %v389 = vld [vmem:[#allocation5 + $0xc] sm:$0xf]
        %v394 = vunpack.c.l.b16 %v386
        %v395 = vunpack.c.l.b16 %v387
        %v396 = vunpack.c.l.b16 %v388
        %v397 = vunpack.c.l.b16 %v389
        %v398 = vpack.c.b16 %v395, %v394
        %v399 = vpack.c.b16 %v397, %v396
        %vm402 = vcmask 261120
        %v404 = vsel %vm402, %v385, 0
        %406 = vmatprep.subr.bf16.mxu0 0
        %407 = vmatpush1.bf16.msra.mxu0 %v398
        %408 = vmatprep.subr.bf16.mxu0 0
        %409 = vmatpush1.bf16.msra.mxu0 %v399
        %410 = vmatprep.subr.bf16.mxu0 0
        %411 = vmatpush1.bf16.msra.mxu0 0
        %412 = vmatprep.subr.bf16.mxu0 0
        %413 = vmatpush1.bf16.msra.mxu0 0
        %414 = vmatprep.subr.bf16.mxu0 0
        %415 = vmatpush1.bf16.msra.mxu0 0
        %416 = vmatprep.subr.bf16.mxu0 0
        %417 = vmatpush1.bf16.msra.mxu0 0
        %418 = vmatprep.subr.bf16.mxu0 0
        %419 = vmatpush1.bf16.msra.mxu0 0
        %420 = vmatprep.subr.bf16.mxu0 0
        %421 = vmatpush1.bf16.msra.mxu0 0
        %422 = vmatprep.subr.bf16.mxu0 0
        %423 = vmatpush1.bf16.msra.mxu0 0
        %424 = vmatprep.subr.bf16.mxu0 0
        %425 = vmatpush1.bf16.msra.mxu0 0
        %426 = vmatprep.subr.bf16.mxu0 0
        %427 = vmatpush1.bf16.msra.mxu0 0
        %428 = vmatprep.subr.bf16.mxu0 0
        %429 = vmatpush1.bf16.msra.mxu0 0
        %430 = vmatprep.subr.bf16.mxu0 0
        %431 = vmatpush1.bf16.msra.mxu0 0
        %432 = vmatprep.subr.bf16.mxu0 0
        %433 = vmatpush1.bf16.msra.mxu0 0
        %434 = vmatprep.subr.bf16.mxu0 0
        %435 = vmatpush1.bf16.msra.mxu0 0
        %436 = vmatprep.subr.bf16.mxu0 0
        %437 = vmatpush1.bf16.msra.mxu0 0
        %438 = vmatprep.mubr.bf16.mxu0 0
        %439 = vmatmul.mubr.bf16.gmra.mrb[0].mxu0 %v404
        %v440 = vpop.f32.mrb[0].mxu0
        %v441 = vadd.f32 0.0, %v440
        %v442 = vpop.f32.mrb[0].mxu0
        %v443 = vpop.f32.mrb[0].mxu0
        %v444 = vpop.f32.mrb[0].mxu0
        %445 = vdwg.mxu0
        %v446 = vpack.c.bf16 %v441, %v441
        %vm447 = vcmask 257024
        %448 = vst.msk [vmem:[%s369] sm:$0xf] %vm447, %v446
        %v449 = vld [vmem:[#allocation7] sm:$0xf]
        %v450 = vld [vmem:[#allocation7 + $0x4] sm:$0xf]
        %v451 = vld [vmem:[#allocation7 + $0x8] sm:$0xf]
        %v452 = vld [vmem:[#allocation7 + $0xc] sm:$0xf]
        %v457 = vunpack.c.l.b16 %v449
        %v458 = vunpack.c.l.b16 %v450
        %v459 = vunpack.c.l.b16 %v451
        %v460 = vunpack.c.l.b16 %v452
        %v461 = vpack.c.b16 %v458, %v457
        %v462 = vpack.c.b16 %v460, %v459
        %465 = vmatprep.subr.bf16.mxu0 0
        %466 = vmatpush1.bf16.msra.mxu0 %v461
        %467 = vmatprep.subr.bf16.mxu0 0
        %468 = vmatpush1.bf16.msra.mxu0 %v462
        %469 = vmatprep.subr.bf16.mxu0 0
        %470 = vmatpush1.bf16.msra.mxu0 0
        %471 = vmatprep.subr.bf16.mxu0 0
        %472 = vmatpush1.bf16.msra.mxu0 0
        %473 = vmatprep.subr.bf16.mxu0 0
        %474 = vmatpush1.bf16.msra.mxu0 0
        %475 = vmatprep.subr.bf16.mxu0 0
        %476 = vmatpush1.bf16.msra.mxu0 0
        %477 = vmatprep.subr.bf16.mxu0 0
        %478 = vmatpush1.bf16.msra.mxu0 0
        %479 = vmatprep.subr.bf16.mxu0 0
        %480 = vmatpush1.bf16.msra.mxu0 0
        %481 = vmatprep.subr.bf16.mxu0 0
        %482 = vmatpush1.bf16.msra.mxu0 0
        %483 = vmatprep.subr.bf16.mxu0 0
        %484 = vmatpush1.bf16.msra.mxu0 0
        %485 = vmatprep.subr.bf16.mxu0 0
        %486 = vmatpush1.bf16.msra.mxu0 0
        %487 = vmatprep.subr.bf16.mxu0 0
        %488 = vmatpush1.bf16.msra.mxu0 0
        %489 = vmatprep.subr.bf16.mxu0 0
        %490 = vmatpush1.bf16.msra.mxu0 0
        %491 = vmatprep.subr.bf16.mxu0 0
        %492 = vmatpush1.bf16.msra.mxu0 0
        %493 = vmatprep.subr.bf16.mxu0 0
        %494 = vmatpush1.bf16.msra.mxu0 0
        %495 = vmatprep.subr.bf16.mxu0 0
        %496 = vmatpush1.bf16.msra.mxu0 0
        %497 = vmatprep.mubr.bf16.mxu0 0
        %498 = vmatmul.mubr.bf16.gmra.mrb[0].mxu0 %v404
        %v499 = vpop.f32.mrb[0].mxu0
        %v500 = vadd.f32 0.0, %v499
        %v501 = vpop.f32.mrb[0].mxu0
        %v502 = vpop.f32.mrb[0].mxu0
        %v503 = vpop.f32.mrb[0].mxu0
        %504 = vdwg.mxu0
        %v505 = vpack.c.bf16 %v500, %v500
        %506 = vst.msk [vmem:[%s376] sm:$0xf] %vm447, %v505
        %v507 = vld [vmem:[#allocation8] sm:$0xf]
        %v508 = vld [vmem:[#allocation8 + $0x4] sm:$0xf]
        %v509 = vld [vmem:[#allocation8 + $0x8] sm:$0xf]
        %v510 = vld [vmem:[#allocation8 + $0xc] sm:$0xf]
        %v515 = vunpack.c.l.b16 %v507
        %v516 = vunpack.c.l.b16 %v508
        %v517 = vunpack.c.l.b16 %v509
        %v518 = vunpack.c.l.b16 %v510
        %v519 = vpack.c.b16 %v516, %v515
        %v520 = vpack.c.b16 %v518, %v517
        %523 = vmatprep.subr.bf16.mxu0 0
        %524 = vmatpush1.bf16.msra.mxu0 %v519
        %525 = vmatprep.subr.bf16.mxu0 0
        %526 = vmatpush1.bf16.msra.mxu0 %v520
        %527 = vmatprep.subr.bf16.mxu0 0
        %528 = vmatpush1.bf16.msra.mxu0 0
        %529 = vmatprep.subr.bf16.mxu0 0
        %530 = vmatpush1.bf16.msra.mxu0 0
        %531 = vmatprep.subr.bf16.mxu0 0
        %532 = vmatpush1.bf16.msra.mxu0 0
        %533 = vmatprep.subr.bf16.mxu0 0
        %534 = vmatpush1.bf16.msra.mxu0 0
        %535 = vmatprep.subr.bf16.mxu0 0
        %536 = vmatpush1.bf16.msra.mxu0 0
        %537 = vmatprep.subr.bf16.mxu0 0
        %538 = vmatpush1.bf16.msra.mxu0 0
        %539 = vmatprep.subr.bf16.mxu0 0
        %540 = vmatpush1.bf16.msra.mxu0 0
        %541 = vmatprep.subr.bf16.mxu0 0
        %542 = vmatpush1.bf16.msra.mxu0 0
        %543 = vmatprep.subr.bf16.mxu0 0
        %544 = vmatpush1.bf16.msra.mxu0 0
        %545 = vmatprep.subr.bf16.mxu0 0
        %546 = vmatpush1.bf16.msra.mxu0 0
        %547 = vmatprep.subr.bf16.mxu0 0
        %548 = vmatpush1.bf16.msra.mxu0 0
        %549 = vmatprep.subr.bf16.mxu0 0
        %550 = vmatpush1.bf16.msra.mxu0 0
        %551 = vmatprep.subr.bf16.mxu0 0
        %552 = vmatpush1.bf16.msra.mxu0 0
        %553 = vmatprep.subr.bf16.mxu0 0
        %554 = vmatpush1.bf16.msra.mxu0 0
        %555 = vmatprep.mubr.bf16.mxu0 0
        %556 = vmatmul.mubr.bf16.gmra.mrb[0].mxu0 %v404
        %v557 = vpop.f32.mrb[0].mxu0
        %v558 = vadd.f32 0.0, %v557
        %v559 = vpop.f32.mrb[0].mxu0
        %v560 = vpop.f32.mrb[0].mxu0
        %v561 = vpop.f32.mrb[0].mxu0
        %562 = vdwg.mxu0
        %v563 = vpack.c.bf16 %v558, %v558
        %564 = vst.msk [vmem:[%s383] sm:$0xf] %vm447, %v563
        %s565 = sand.u32 %s166, 1
        %s566 = scalar_lea.sflag [#allocation4], %s565
        %s567 = sand.u32 %s166, 1
        %s568 = smul.addr %s567, 4
        %s569 = scalar_lea.vmem [#allocation10], %s568
        %s570 = sand.u32 %s29, 1
        %s571 = scalar_lea.sflag [#allocation12], %s570
        %s572 = sand.u32 %s196, 1
        %s573 = smul.addr %s572, 4
        %s574 = scalar_lea.vmem [#allocation11], %s573
        %s575 = sand.u32 %s29, 1
        %s576 = scalar_lea.sflag [#allocation12], %s575
        %s577 = sand.u32 %s226, 1
        %s578 = smul.addr %s577, 4
        %s579 = scalar_lea.vmem [#allocation13], %s578
        // Predicated region
        $region53: #{transformer_lm_forward.11} parent=35 // pred_check
          %p580 = pneg %p176
        $region54: #{transformer_lm_forward.11} parent=35 // pred_check_branch
          %582 = sbr.rel (%p580) target = $region56
        $region55: #{transformer_lm_forward.11} parent=35 // pred_region
          %s584 = ssub.s32 64, 64
          %585 = vsyncadd %s566, %s584
          %s586 = sadd.s32 %s34, %s36
          %s587 = sadd.s32 %s586, %s35
          %s588 = smul.addr %s587, 64
          %s589 = scalar_lea.hbm %s4, %s588
          %s591 = sshll.u32 %s569, 4
          %s592 = int_to_ptr.vmem [resolvable:$true] %s591
          %594 = dma.vmem_to_hbm [thread:$0]  %s592, 64, %s589, %s566
        $region56: #{transformer_lm_forward.11} parent=35 // pred_fallthru
          _
        // Predicated region
        $region57: #{transformer_lm_forward.11} parent=35 // pred_check
          %p595 = pneg %p206
        $region58: #{transformer_lm_forward.11} parent=35 // pred_check_branch
          %597 = sbr.rel (%p595) target = $region60
        $region59: #{transformer_lm_forward.11} parent=35 // pred_region
          %s599 = ssub.s32 64, 64
          %600 = vsyncadd %s571, %s599
          %s601 = sadd.s32 %s34, %s36
          %s602 = sadd.s32 %s601, %s35
          %s603 = smul.addr %s602, 64
          %s604 = scalar_lea.hbm %s5, %s603
          %s606 = sshll.u32 %s574, 4
          %s607 = int_to_ptr.vmem [resolvable:$true] %s606
          %609 = dma.vmem_to_hbm [thread:$0]  %s607, 64, %s604, %s571
        $region60: #{transformer_lm_forward.11} parent=35 // pred_fallthru
          _
        // Predicated region
        $region61: #{transformer_lm_forward.11} parent=35 // pred_check
          %p610 = pneg %p236
        $region62: #{transformer_lm_forward.11} parent=35 // pred_check_branch
          %612 = sbr.rel (%p610) target = $region64
        $region63: #{transformer_lm_forward.11} parent=35 // pred_region
          %s614 = ssub.s32 64, 64
          %615 = vsyncadd %s576, %s614
          %s616 = sadd.s32 %s34, %s36
          %s617 = sadd.s32 %s616, %s35
          %s618 = smul.addr %s617, 64
          %s619 = scalar_lea.hbm %s6, %s618
          %s621 = sshll.u32 %s579, 4
          %s622 = int_to_ptr.vmem [resolvable:$true] %s621
          %624 = dma.vmem_to_hbm [thread:$0]  %s622, 64, %s619, %s576
        $region64: #{transformer_lm_forward.11} parent=35 // pred_fallthru
          _
      $region36: #{transformer_lm_forward.11} parent=5 // pred_fallthru
        _
      %p625 = scmp.le.s32.totalorder 2, %s24
      // Predicated region
      $region65: #{transformer_lm_forward.11} parent=5 // pred_check
        %p626 = pneg %p625
      $region66: #{transformer_lm_forward.11} parent=5 // pred_check_branch
        %628 = sbr.rel (%p626) target = $region68
      $region67: #{transformer_lm_forward.11} parent=5 // pred_region
        %s629 = ssub.s32 %s24, 2
        // Predicated region
        $region69: #{transformer_lm_forward.11} parent=67 // pred_check
          %p630 = pneg %p182
        $region70: #{transformer_lm_forward.11} parent=67 // pred_check_branch
          %632 = sbr.rel (%p630) target = $region72
        $region71: #{transformer_lm_forward.11} parent=67 // pred_region
          %s633 = sand.u32 %s167, 1
          %s634 = scalar_lea.sflag [#allocation4], %s633
          %s635 = sand.u32 %s167, 1
          %s636 = smul.addr %s635, 4
          %s637 = scalar_lea.vmem [#allocation10], %s636
          %638 = dma.done %s634, 64
        $region72: #{transformer_lm_forward.11} parent=67 // pred_fallthru
          _
        // Predicated region
        $region73: #{transformer_lm_forward.11} parent=67 // pred_check
          %p639 = pneg %p212
        $region74: #{transformer_lm_forward.11} parent=67 // pred_check_branch
          %641 = sbr.rel (%p639) target = $region76
        $region75: #{transformer_lm_forward.11} parent=67 // pred_region
          %s642 = sand.u32 %s30, 1
          %s643 = scalar_lea.sflag [#allocation12], %s642
          %s644 = sand.u32 %s197, 1
          %s645 = smul.addr %s644, 4
          %s646 = scalar_lea.vmem [#allocation11], %s645
          %647 = dma.done %s643, 64
        $region76: #{transformer_lm_forward.11} parent=67 // pred_fallthru
          _
        // Predicated region
        $region77: #{transformer_lm_forward.11} parent=67 // pred_check
          %p648 = pneg %p242
        $region78: #{transformer_lm_forward.11} parent=67 // pred_check_branch
          %650 = sbr.rel (%p648) target = $region80
        $region79: #{transformer_lm_forward.11} parent=67 // pred_region
          %s651 = sand.u32 %s30, 1
          %s652 = scalar_lea.sflag [#allocation12], %s651
          %s653 = sand.u32 %s227, 1
          %s654 = smul.addr %s653, 4
          %s655 = scalar_lea.vmem [#allocation13], %s654
          %656 = dma.done %s652, 64
        $region80: #{transformer_lm_forward.11} parent=67 // pred_fallthru
          _
      $region68: #{transformer_lm_forward.11} parent=5 // pred_fallthru
        _
    $region6: #{transformer_lm_forward.11} parent=1 // loop_footer
      %s28 = sadd.s32 1, %s24
    $region7: #{transformer_lm_forward.11} parent=1 // loop_footer_branch
      %23 = sbr.rel target = $region3
    $region8: #{transformer_lm_forward.11} parent=1 // loop_exit
      _
    %657 = vsyncpa [#allocation3], 1
    %s658 = scalar_lea.sflag [#allocation3], 1
    %659 = vsyncpa %s658, 1
    %660 = vsyncpa [#allocation6], 1
    %661 = vsyncpa [#allocation9], 1
    %662 = vsyncpa [#allocation4], 1
    %s663 = scalar_lea.sflag [#allocation4], 1
    %664 = vsyncpa %s663, 1
    %665 = vsyncpa [#allocation12], 1
    %s666 = scalar_lea.sflag [#allocation12], 1
    %667 = vsyncpa %s666, 1

// kernel: transformer_lm_forward.13
$region0: #{transformer_lm_forward.13}
  #allocation0 [shape = 'u32[]', space=smem, size = 0x4, offset = 0x4, fixed_abs, tag = 'smem constant byte address 0x4 - core index']
  #allocation1 [shape = 'u32[144,128]{1,0:T(1,128)}', space=vmem, size = 0x12000, scoped, tag = 'internal scratch']
  #allocation2 [shape = 'bf16[8,32]{1,0:T(8,128)(2,1)}', space=vmem, size = 0x800, scoped, tag = 'scratch operand']
  %s0 = inlined_call_operand.hbm [shape: f32[2,8,32], index: 0, kind: input, shape index: {}]
  %s1 = inlined_call_operand.hbm [shape: bf16[2,8,32], index: 1, kind: input, shape index: {}]
  %s2 = inlined_call_operand.hbm [shape: f32[1,32], index: 2, kind: input, shape index: {}]
  %s3 = inlined_call_operand.hbm [shape: bf16[32,32], index: 3, kind: input, shape index: {}]
  %s4 = inlined_call_operand.hbm [shape: bf16[32,64], index: 4, kind: input, shape index: {}]
  %s5 = inlined_call_operand.hbm [shape: bf16[64,32], index: 5, kind: input, shape index: {}]
  %s6 = inlined_call_operand.hbm [shape: f32[2,8,32], index: 6, kind: output, shape index: {}]
  %s7 = sld [smem:[#allocation0]]
  $region85: #{transformer_lm_forward.13} parent=0
    _
  %s9 = ssub.s32 1, %s7
  %s10 = scalar_select 0, %s9, %s7
  $region1: #{transformer_lm_forward.13} parent=0
    #allocation3 [shape = 'u8[8192]{0}', space=vmem, size = 0x2000, scoped, tag = 'input window, operand 0']
    #allocation4 [shape = 's32[2]{0}', space=sflag, size = 0x8, scoped, tag = 'scoped memory for transformer_lm_forward.13']
    #allocation5 [shape = 's32[2]{0}', space=sflag, size = 0x8, scoped, tag = 'scoped memory for transformer_lm_forward.13']
    #allocation6 [shape = 'u8[4096]{0}', space=vmem, size = 0x1000, scoped, tag = 'input window, operand 1']
    #allocation7 [shape = 's32[2]{0}', space=sflag, size = 0x8, scoped, tag = 'scoped memory for transformer_lm_forward.13']
    #allocation8 [shape = 'u8[512]{0}', space=vmem, size = 0x400, scoped, tag = 'input window, operand 2, single buffered']
    #allocation9 [shape = 'u8[8192]{0}', space=vmem, size = 0x2000, scoped, tag = 'input window, operand 3, single buffered']
    #allocation10 [shape = 's32[1]{0}', space=sflag, size = 0x4, scoped, tag = 'scoped memory for transformer_lm_forward.13']
    #allocation11 [shape = 'u8[8192]{0}', space=vmem, size = 0x2000, scoped, tag = 'input window, operand 4, single buffered']
    #allocation12 [shape = 'u8[16384]{0}', space=vmem, size = 0x4000, scoped, tag = 'input window, operand 5, single buffered']
    #allocation13 [shape = 's32[1]{0}', space=sflag, size = 0x4, scoped, tag = 'scoped memory for transformer_lm_forward.13']
    #allocation14 [shape = 'u8[8192]{0}', space=vmem, size = 0x2000, scoped, tag = 'output window, operand 0']
    %11 = vsyncpa [#allocation4], 0
    %s12 = scalar_lea.sflag [#allocation4], 1
    %13 = vsyncpa %s12, 0
    %14 = vsyncpa [#allocation7], 0
    %s15 = scalar_lea.sflag [#allocation7], 1
    %16 = vsyncpa %s15, 0
    %17 = vsyncpa [#allocation10], 0
    %18 = vsyncpa [#allocation13], 0
    %19 = vsyncpa [#allocation5], 0
    %s20 = scalar_lea.sflag [#allocation5], 1
    %21 = vsyncpa %s20, 0
    loop: start=0, step=1, limit=4
    $region2: #{transformer_lm_forward.13} parent=1 // loop_pre_header
      _
    $region3: #{transformer_lm_forward.13} parent=1 // loop_header
      %s23 = sphi 0, %s27
      %p24 = scmp.ge.s32.totalorder %s23, 4
      %s30 = sphi 0, %s49
      %s31 = sphi 0, %s45
      %s32 = sphi 0, %s41
      %s33 = sphi 0, %s30
      %s34 = sphi 0, %s31
      %s35 = sphi 0, %s32
      %s36 = sphi 0, %s33
      %s37 = sphi 0, %s34
      %s38 = sphi 0, %s35
      %s54 = sphi 0, %s56
      %s57 = sphi 0, %s54
      %s58 = sphi 0, %s57
      %s74 = sphi 0, %s58
      %s82 = sphi 0, %s84
      %s85 = sphi 0, %s82
      %s86 = sphi 0, %s85
      %s102 = sphi 0, %s86
      %s106 = sphi 0, %s106
      %s108 = sphi 0, %s106
      %s109 = sphi 0, %s108
      %s123 = sphi 0, %s109
      %s127 = sphi 0, %s127
      %s129 = sphi 0, %s127
      %s130 = sphi 0, %s129
      %s144 = sphi 0, %s130
      %s150 = sphi 0, %s152
      %s153 = sphi 0, %s150
      %s154 = sphi 0, %s153
      %s170 = sphi 0, %s154
      %s176 = sphi 0, %s178
      %s179 = sphi 0, %s176
      %s180 = sphi 0, %s179
      %s196 = sphi 0, %s180
      %s204 = sphi 0, %s206
      %s207 = sphi 0, %s204
      %s208 = sphi 0, %s207
      %s224 = sphi 0, %s208
    $region4: #{transformer_lm_forward.13} parent=1 // loop_header_branch
      %26 = sbr.rel (%p24) target = $region8
    $region5: #{transformer_lm_forward.13} parent=1 // loop_body
      %s28 = ssub.s32 %s23, 1
      %s29 = ssub.s32 %s23, 2
      %s39 = sadd.s32 1, %s32
      %p40 = scmp.ge.s32.totalorder %s39, 1
      %s41 = scalar_select %p40, 0, %s39
      %s42 = sadd.s32 1, %s31
      %s43 = scalar_select %p40, %s42, %s31
      %p44 = scmp.ge.s32.totalorder %s43, 1
      %s45 = scalar_select %p44, 0, %s43
      %s46 = sadd.s32 1, %s30
      %s47 = scalar_select %p44, %s46, %s30
      %p48 = scmp.ge.s32.totalorder %s47, 2
      %s49 = scalar_select %p48, 0, %s47
      %s50 = ssub.s32 %s30, %s49
      %s51 = ssub.s32 %s31, %s45
      %s52 = sor.u32 %s50, %s51
      %p53 = scmp.eq.s32.totalorder %s52, 0
      %s55 = sadd.s32 %s54, 1
      %s56 = scalar_select %p53, %s54, %s55
      %p59 = pneg %p53
      %p60 = scmp.eq.s32.totalorder %s23, 1
      %p61 = por %p59, %p60
      %p62 = scmp.ne.s32.totalorder %s54, %s57
      %p63 = scmp.eq.s32.totalorder %s23, 0
      %p64 = por %p62, %p63
      %p65 = scmp.ne.s32.totalorder %s54, %s57
      %p66 = scmp.eq.s32.totalorder %s28, 1
      %p67 = por %p65, %p66
      %p68 = scmp.ne.s32.totalorder %s57, %s58
      %p69 = scmp.eq.s32.totalorder %s28, 0
      %p70 = por %p68, %p69
      %p71 = scmp.ne.s32.totalorder %s57, %s58
      %p72 = scmp.eq.s32.totalorder %s29, 1
      %p73 = por %p71, %p72
      %p75 = scmp.ne.s32.totalorder %s58, %s74
      %p76 = scmp.eq.s32.totalorder %s29, 0
      %p77 = por %p75, %p76
      %s78 = ssub.s32 %s30, %s49
      %s79 = ssub.s32 %s31, %s45
      %s80 = sor.u32 %s78, %s79
      %p81 = scmp.eq.s32.totalorder %s80, 0
      %s83 = sadd.s32 %s82, 1
      %s84 = scalar_select %p81, %s82, %s83
      %p87 = pneg %p81
      %p88 = scmp.eq.s32.totalorder %s23, 1
      %p89 = por %p87, %p88
      %p90 = scmp.ne.s32.totalorder %s82, %s85
      %p91 = scmp.eq.s32.totalorder %s23, 0
      %p92 = por %p90, %p91
      %p93 = scmp.ne.s32.totalorder %s82, %s85
      %p94 = scmp.eq.s32.totalorder %s28, 1
      %p95 = por %p93, %p94
      %p96 = scmp.ne.s32.totalorder %s85, %s86
      %p97 = scmp.eq.s32.totalorder %s28, 0
      %p98 = por %p96, %p97
      %p99 = scmp.ne.s32.totalorder %s85, %s86
      %p100 = scmp.eq.s32.totalorder %s29, 1
      %p101 = por %p99, %p100
      %p103 = scmp.ne.s32.totalorder %s86, %s102
      %p104 = scmp.eq.s32.totalorder %s29, 0
      %p105 = por %p103, %p104
      %s107 = sadd.s32 %s106, 1
      %p110 = scmp.eq.s32.totalorder %s23, 1
      %p111 = scmp.ne.s32.totalorder %s106, %s108
      %p112 = scmp.eq.s32.totalorder %s23, 0
      %p113 = por %p111, %p112
      %p114 = scmp.ne.s32.totalorder %s106, %s108
      %p115 = scmp.eq.s32.totalorder %s28, 1
      %p116 = por %p114, %p115
      %p117 = scmp.ne.s32.totalorder %s108, %s109
      %p118 = scmp.eq.s32.totalorder %s28, 0
      %p119 = por %p117, %p118
      %p120 = scmp.ne.s32.totalorder %s108, %s109
      %p121 = scmp.eq.s32.totalorder %s29, 1
      %p122 = por %p120, %p121
      %p124 = scmp.ne.s32.totalorder %s109, %s123
      %p125 = scmp.eq.s32.totalorder %s29, 0
      %p126 = por %p124, %p125
      %s128 = sadd.s32 %s127, 1
      %p131 = scmp.eq.s32.totalorder %s23, 1
      %p132 = scmp.ne.s32.totalorder %s127, %s129
      %p133 = scmp.eq.s32.totalorder %s23, 0
      %p134 = por %p132, %p133
      %p135 = scmp.ne.s32.totalorder %s127, %s129
      %p136 = scmp.eq.s32.totalorder %s28, 1
      %p137 = por %p135, %p136
      %p138 = scmp.ne.s32.totalorder %s129, %s130
      %p139 = scmp.eq.s32.totalorder %s28, 0
      %p140 = por %p138, %p139
      %p141 = scmp.ne.s32.totalorder %s129, %s130
      %p142 = scmp.eq.s32.totalorder %s29, 1
      %p143 = por %p141, %p142
      %p145 = scmp.ne.s32.totalorder %s130, %s144
      %p146 = scmp.eq.s32.totalorder %s29, 0
      %p147 = por %p145, %p146
      %s148 = ssub.s32 %s32, %s41
      %p149 = scmp.eq.s32.totalorder %s148, 0
      %s151 = sadd.s32 %s150, 1
      %s152 = scalar_select %p149, %s150, %s151
      %p155 = pneg %p149
      %p156 = scmp.eq.s32.totalorder %s23, 1
      %p157 = por %p155, %p156
      %p158 = scmp.ne.s32.totalorder %s150, %s153
      %p159 = scmp.eq.s32.totalorder %s23, 0
      %p160 = por %p158, %p159
      %p161 = scmp.ne.s32.totalorder %s150, %s153
      %p162 = scmp.eq.s32.totalorder %s28, 1
      %p163 = por %p161, %p162
      %p164 = scmp.ne.s32.totalorder %s153, %s154
      %p165 = scmp.eq.s32.totalorder %s28, 0
      %p166 = por %p164, %p165
      %p167 = scmp.ne.s32.totalorder %s153, %s154
      %p168 = scmp.eq.s32.totalorder %s29, 1
      %p169 = por %p167, %p168
      %p171 = scmp.ne.s32.totalorder %s154, %s170
      %p172 = scmp.eq.s32.totalorder %s29, 0
      %p173 = por %p171, %p172
      %s174 = ssub.s32 %s32, %s41
      %p175 = scmp.eq.s32.totalorder %s174, 0
      %s177 = sadd.s32 %s176, 1
      %s178 = scalar_select %p175, %s176, %s177
      %p181 = pneg %p175
      %p182 = scmp.eq.s32.totalorder %s23, 1
      %p183 = por %p181, %p182
      %p184 = scmp.ne.s32.totalorder %s176, %s179
      %p185 = scmp.eq.s32.totalorder %s23, 0
      %p186 = por %p184, %p185
      %p187 = scmp.ne.s32.totalorder %s176, %s179
      %p188 = scmp.eq.s32.totalorder %s28, 1
      %p189 = por %p187, %p188
      %p190 = scmp.ne.s32.totalorder %s179, %s180
      %p191 = scmp.eq.s32.totalorder %s28, 0
      %p192 = por %p190, %p191
      %p193 = scmp.ne.s32.totalorder %s179, %s180
      %p194 = scmp.eq.s32.totalorder %s29, 1
      %p195 = por %p193, %p194
      %p197 = scmp.ne.s32.totalorder %s180, %s196
      %p198 = scmp.eq.s32.totalorder %s29, 0
      %p199 = por %p197, %p198
      %s200 = ssub.s32 %s30, %s49
      %s201 = ssub.s32 %s31, %s45
      %s202 = sor.u32 %s200, %s201
      %p203 = scmp.eq.s32.totalorder %s202, 0
      %s205 = sadd.s32 %s204, 1
      %s206 = scalar_select %p203, %s204, %s205
      %p209 = pneg %p203
      %p210 = scmp.eq.s32.totalorder %s23, 1
      %p211 = por %p209, %p210
      %p212 = scmp.ne.s32.totalorder %s204, %s207
      %p213 = scmp.eq.s32.totalorder %s23, 0
      %p214 = por %p212, %p213
      %p215 = scmp.ne.s32.totalorder %s204, %s207
      %p216 = scmp.eq.s32.totalorder %s28, 1
      %p217 = por %p215, %p216
      %p218 = scmp.ne.s32.totalorder %s207, %s208
      %p219 = scmp.eq.s32.totalorder %s28, 0
      %p220 = por %p218, %p219
      %p221 = scmp.ne.s32.totalorder %s207, %s208
      %p222 = scmp.eq.s32.totalorder %s29, 1
      %p223 = por %p221, %p222
      %p225 = scmp.ne.s32.totalorder %s208, %s224
      %p226 = scmp.eq.s32.totalorder %s29, 0
      %p227 = por %p225, %p226
      %p228 = scmp.le.s32.totalorder 1, %s23
      %p229 = scmp.lt.s32.totalorder %s23, 3
      %p230 = pnand %p228, %p229
      %p231 = pneg %p230
      // Predicated region
      $region9: #{transformer_lm_forward.13} parent=5 // pred_check
        _
      $region10: #{transformer_lm_forward.13} parent=5 // pred_check_branch
        %233 = sbr.rel (%p230) target = $region12
      $region11: #{transformer_lm_forward.13} parent=5 // pred_region
        %s234 = ssub.s32 %s23, 1
        // Predicated region
        $region13: #{transformer_lm_forward.13} parent=11 // pred_check
          %p235 = pneg %p119
        $region14: #{transformer_lm_forward.13} parent=11 // pred_check_branch
          %237 = sbr.rel (%p235) target = $region16
        $region15: #{transformer_lm_forward.13} parent=11 // pred_region
          %s239 = ssub.s32 16, 16
          %240 = vsyncadd [#allocation7], %s239
          %s242 = sshll.u32 [#allocation8], 4
          %s243 = int_to_ptr.vmem [resolvable:$true] %s242
          %245 = dma.hbm_to_vmem [thread:$0]  %s2, 16, %s243, [#allocation7]
        $region16: #{transformer_lm_forward.13} parent=11 // pred_fallthru
          _
        // Predicated region
        $region17: #{transformer_lm_forward.13} parent=11 // pred_check
          %p246 = pneg %p140
        $region18: #{transformer_lm_forward.13} parent=11 // pred_check_branch
          %248 = sbr.rel (%p246) target = $region20
        $region19: #{transformer_lm_forward.13} parent=11 // pred_region
          %s250 = ssub.s32 256, 256
          %251 = vsyncadd [#allocation10], %s250
          %s252 = sshll.u32 [#allocation9], 4
          %s253 = int_to_ptr.vmem [resolvable:$true] %s252
          %258 = dma.hbm_to_vmem [thread:$0]  %s3, 256, %s253, [#allocation10], 64, 64, 4
        $region20: #{transformer_lm_forward.13} parent=11 // pred_fallthru
          _
        // Predicated region
        $region21: #{transformer_lm_forward.13} parent=11 // pred_check
          %p259 = pneg %p166
        $region22: #{transformer_lm_forward.13} parent=11 // pred_check_branch
          %261 = sbr.rel (%p259) target = $region24
        $region23: #{transformer_lm_forward.13} parent=11 // pred_region
          %s263 = ssub.s32 256, 256
          %264 = vsyncadd [#allocation10], %s263
          %s265 = smul.addr %s35, 64
          %s266 = scalar_lea.hbm %s4, %s265
          %s267 = sshll.u32 [#allocation11], 4
          %s268 = int_to_ptr.vmem [resolvable:$true] %s267
          %273 = dma.hbm_to_vmem [thread:$0]  %s266, 256, %s268, [#allocation10], 64, 64, 4
        $region24: #{transformer_lm_forward.13} parent=11 // pred_fallthru
          _
        // Predicated region
        $region25: #{transformer_lm_forward.13} parent=11 // pred_check
          %p274 = pneg %p192
        $region26: #{transformer_lm_forward.13} parent=11 // pred_check_branch
          %276 = sbr.rel (%p274) target = $region28
        $region27: #{transformer_lm_forward.13} parent=11 // pred_region
          %s277 = smul.u32 8, %s35
          %s279 = ssub.s32 512, 512
          %280 = vsyncadd [#allocation13], %s279
          %s281 = smul.addr %s277, 64
          %s282 = scalar_lea.hbm %s5, %s281
          %s283 = sshll.u32 [#allocation12], 4
          %s284 = int_to_ptr.vmem [resolvable:$true] %s283
          %289 = dma.hbm_to_vmem [thread:$0]  %s282, 512, %s284, [#allocation13], 64, 64, 4
        $region28: #{transformer_lm_forward.13} parent=11 // pred_fallthru
          _
      $region12: #{transformer_lm_forward.13} parent=5 // pred_fallthru
        _
      %p290 = scmp.lt.s32.totalorder %s23, 2
      // Predicated region
      $region29: #{transformer_lm_forward.13} parent=5 // pred_check
        %p291 = pneg %p290
      $region30: #{transformer_lm_forward.13} parent=5 // pred_check_branch
        %293 = sbr.rel (%p291) target = $region32
      $region31: #{transformer_lm_forward.13} parent=5 // pred_region
        // Predicated region
        $region33: #{transformer_lm_forward.13} parent=31 // pred_check
          %p294 = pneg %p64
        $region34: #{transformer_lm_forward.13} parent=31 // pred_check_branch
          %296 = sbr.rel (%p294) target = $region36
        $region35: #{transformer_lm_forward.13} parent=31 // pred_region
          %s297 = sand.u32 %s54, 1
          %s298 = scalar_lea.sflag [#allocation4], %s297
          %s299 = sand.u32 %s54, 1
          %s300 = smul.addr %s299, 8
          %s301 = scalar_lea.vmem [#allocation3], %s300
          %s303 = ssub.s32 128, 128
          %304 = vsyncadd %s298, %s303
          %s305 = sadd.s32 %s31, %s30
          %s306 = smul.addr %s305, 128
          %s307 = scalar_lea.hbm %s0, %s306
          %s309 = sshll.u32 %s301, 4
          %s310 = int_to_ptr.vmem [resolvable:$true] %s309
          %312 = dma.hbm_to_vmem [thread:$0]  %s307, 128, %s310, %s298
        $region36: #{transformer_lm_forward.13} parent=31 // pred_fallthru
          _
        // Predicated region
        $region37: #{transformer_lm_forward.13} parent=31 // pred_check
          %p313 = pneg %p92
        $region38: #{transformer_lm_forward.13} parent=31 // pred_check_branch
          %315 = sbr.rel (%p313) target = $region40
        $region39: #{transformer_lm_forward.13} parent=31 // pred_region
          %s316 = sand.u32 %s23, 1
          %s317 = scalar_lea.sflag [#allocation7], %s316
          %s318 = sand.u32 %s82, 1
          %s319 = smul.addr %s318, 4
          %s320 = scalar_lea.vmem [#allocation6], %s319
          %s322 = ssub.s32 64, 64
          %323 = vsyncadd %s317, %s322
          %s324 = sadd.s32 %s31, %s30
          %s325 = smul.addr %s324, 64
          %s326 = scalar_lea.hbm %s1, %s325
          %s328 = sshll.u32 %s320, 4
          %s329 = int_to_ptr.vmem [resolvable:$true] %s328
          %331 = dma.hbm_to_vmem [thread:$0]  %s326, 64, %s329, %s317
        $region40: #{transformer_lm_forward.13} parent=31 // pred_fallthru
          _
      $region32: #{transformer_lm_forward.13} parent=5 // pred_fallthru
        _
      %p332 = scmp.le.s32.totalorder 1, %s23
      %p333 = scmp.lt.s32.totalorder %s23, 3
      %p334 = pnand %p332, %p333
      %p335 = pneg %p334
      // Predicated region
      $region41: #{transformer_lm_forward.13} parent=5 // pred_check
        _
      $region42: #{transformer_lm_forward.13} parent=5 // pred_check_branch
        %337 = sbr.rel (%p334) target = $region44
      $region43: #{transformer_lm_forward.13} parent=5 // pred_region
        %s338 = ssub.s32 %s23, 1
        %s339 = sand.u32 %s57, 1
        %s340 = scalar_lea.sflag [#allocation4], %s339
        %s341 = sand.u32 %s57, 1
        %s342 = smul.addr %s341, 8
        %s343 = scalar_lea.vmem [#allocation3], %s342
        // Predicated region
        $region45: #{transformer_lm_forward.13} parent=43 // pred_check
          %p344 = pneg %p70
        $region46: #{transformer_lm_forward.13} parent=43 // pred_check_branch
          %346 = sbr.rel (%p344) target = $region48
        $region47: #{transformer_lm_forward.13} parent=43 // pred_region
          %347 = dma.done %s340, 128
        $region48: #{transformer_lm_forward.13} parent=43 // pred_fallthru
          _
        %s348 = sand.u32 %s28, 1
        %s349 = scalar_lea.sflag [#allocation7], %s348
        %s350 = sand.u32 %s85, 1
        %s351 = smul.addr %s350, 4
        %s352 = scalar_lea.vmem [#allocation6], %s351
        // Predicated region
        $region49: #{transformer_lm_forward.13} parent=43 // pred_check
          %p353 = pneg %p98
        $region50: #{transformer_lm_forward.13} parent=43 // pred_check_branch
          %355 = sbr.rel (%p353) target = $region52
        $region51: #{transformer_lm_forward.13} parent=43 // pred_region
          %356 = dma.done %s349, 64
        $region52: #{transformer_lm_forward.13} parent=43 // pred_fallthru
          _
        // Predicated region
        $region53: #{transformer_lm_forward.13} parent=43 // pred_check
          %p357 = pneg %p119
        $region54: #{transformer_lm_forward.13} parent=43 // pred_check_branch
          %359 = sbr.rel (%p357) target = $region56
        $region55: #{transformer_lm_forward.13} parent=43 // pred_region
          %360 = dma.done [#allocation7], 16
        $region56: #{transformer_lm_forward.13} parent=43 // pred_fallthru
          _
        // Predicated region
        $region57: #{transformer_lm_forward.13} parent=43 // pred_check
          %p361 = pneg %p140
        $region58: #{transformer_lm_forward.13} parent=43 // pred_check_branch
          %363 = sbr.rel (%p361) target = $region60
        $region59: #{transformer_lm_forward.13} parent=43 // pred_region
          %364 = dma.done [#allocation10], 256
        $region60: #{transformer_lm_forward.13} parent=43 // pred_fallthru
          _
        // Predicated region
        $region61: #{transformer_lm_forward.13} parent=43 // pred_check
          %p365 = pneg %p166
        $region62: #{transformer_lm_forward.13} parent=43 // pred_check_branch
          %367 = sbr.rel (%p365) target = $region64
        $region63: #{transformer_lm_forward.13} parent=43 // pred_region
          %368 = dma.done [#allocation10], 256
        $region64: #{transformer_lm_forward.13} parent=43 // pred_fallthru
          _
        // Predicated region
        $region65: #{transformer_lm_forward.13} parent=43 // pred_check
          %p369 = pneg %p192
        $region66: #{transformer_lm_forward.13} parent=43 // pred_check_branch
          %371 = sbr.rel (%p369) target = $region68
        $region67: #{transformer_lm_forward.13} parent=43 // pred_region
          %372 = dma.done [#allocation13], 512
        $region68: #{transformer_lm_forward.13} parent=43 // pred_fallthru
          _
        %s373 = sand.u32 %s57, 1
        %s374 = scalar_lea.sflag [#allocation4], %s373
        %s375 = sand.u32 %s57, 1
        %s376 = smul.addr %s375, 8
        %s377 = scalar_lea.vmem [#allocation3], %s376
        %p378 = pneg %p70
        %p379 = pneg %p67
        %s380 = sand.u32 %s28, 1
        %s381 = scalar_lea.sflag [#allocation7], %s380
        %s382 = sand.u32 %s85, 1
        %s383 = smul.addr %s382, 4
        %s384 = scalar_lea.vmem [#allocation6], %s383
        %p385 = pneg %p98
        %p386 = pneg %p95
        %p387 = pneg %p119
        %p388 = pneg %p116
        %p389 = pneg %p140
        %p390 = pneg %p137
        %p391 = pneg %p166
        %p392 = pneg %p163
        %p393 = pneg %p192
        %p394 = pneg %p189
        %p395 = pneg %p220
        %p396 = pneg %p217
        %s397 = sand.u32 %s207, 1
        %s398 = scalar_lea.sflag [#allocation5], %s397
        %s399 = sand.u32 %s207, 1
        %s400 = smul.addr %s399, 8
        %s401 = scalar_lea.vmem [#allocation14], %s400
        %s402 = smul.u32 8, %s35
        %p404 = scmp.eq.s32.totalorder %s35, 0
        // Predicated region
        $region69: #{transformer_lm_forward.13} parent=43 // pred_check
          %p405 = pneg %p404
        $region70: #{transformer_lm_forward.13} parent=43 // pred_check_branch
          %407 = sbr.rel (%p405) target = $region72
        $region71: #{transformer_lm_forward.13} parent=43 // pred_region
          %v408 = vld [vmem:[%s352] sm:$0xf]
          %v409 = vld [vmem:[#allocation9] sm:$0xf]
          %v410 = vld [vmem:[#allocation9 + $0x4] sm:$0xf]
          %v411 = vld [vmem:[#allocation9 + $0x8] sm:$0xf]
          %v412 = vld [vmem:[#allocation9 + $0xc] sm:$0xf]
          %v417 = vunpack.c.l.b16 %v409
          %v418 = vunpack.c.l.b16 %v410
          %v419 = vunpack.c.l.b16 %v411
          %v420 = vunpack.c.l.b16 %v412
          %v421 = vpack.c.b16 %v418, %v417
          %v422 = vpack.c.b16 %v420, %v419
          %vm425 = vcmask 261120
          %v427 = vsel %vm425, %v408, 0
          %429 = vmatprep.subr.bf16.mxu0 0
          %430 = vmatpush1.bf16.msra.mxu0 %v421
          %431 = vmatprep.subr.bf16.mxu0 0
          %432 = vmatpush1.bf16.msra.mxu0 %v422
          %433 = vmatprep.subr.bf16.mxu0 0
          %434 = vmatpush1.bf16.msra.mxu0 0
          %435 = vmatprep.subr.bf16.mxu0 0
          %436 = vmatpush1.bf16.msra.mxu0 0
          %437 = vmatprep.subr.bf16.mxu0 0
          %438 = vmatpush1.bf16.msra.mxu0 0
          %439 = vmatprep.subr.bf16.mxu0 0
          %440 = vmatpush1.bf16.msra.mxu0 0
          %441 = vmatprep.subr.bf16.mxu0 0
          %442 = vmatpush1.bf16.msra.mxu0 0
          %443 = vmatprep.subr.bf16.mxu0 0
          %444 = vmatpush1.bf16.msra.mxu0 0
          %445 = vmatprep.subr.bf16.mxu0 0
          %446 = vmatpush1.bf16.msra.mxu0 0
          %447 = vmatprep.subr.bf16.mxu0 0
          %448 = vmatpush1.bf16.msra.mxu0 0
          %449 = vmatprep.subr.bf16.mxu0 0
          %450 = vmatpush1.bf16.msra.mxu0 0
          %451 = vmatprep.subr.bf16.mxu0 0
          %452 = vmatpush1.bf16.msra.mxu0 0
          %453 = vmatprep.subr.bf16.mxu0 0
          %454 = vmatpush1.bf16.msra.mxu0 0
          %455 = vmatprep.subr.bf16.mxu0 0
          %456 = vmatpush1.bf16.msra.mxu0 0
          %457 = vmatprep.subr.bf16.mxu0 0
          %458 = vmatpush1.bf16.msra.mxu0 0
          %459 = vmatprep.subr.bf16.mxu0 0
          %460 = vmatpush1.bf16.msra.mxu0 0
          %461 = vmatprep.mubr.bf16.mxu0 0
          %462 = vmatmul.mubr.bf16.gmra.mrb[0].mxu0 %v427
          %v463 = vpop.f32.mrb[0].mxu0
          %v464 = vadd.f32 0.0, %v463
          %v465 = vpop.f32.mrb[0].mxu0
          %v466 = vpop.f32.mrb[0].mxu0
          %v467 = vpop.f32.mrb[0].mxu0
          %468 = vdwg.mxu0
          %v469 = vld [vmem:[%s343] sm:$0xff]
          %v470 = vadd.f32 %v469, %v464
          %v471 = vld [vmem:[#allocation8] sm:$0x1]
          %v472 = vmul.f32 %v470, %v470
          %v473 = vsel %vm425, %v472, 0.0
          %474 = vadd.xlane.f32.xlu0 %v473
          %v475 = vpop.xlane.xlu0 %474
          %v476 = vrcp.pop 32.0
          %v477 = vmul.f32 %v475, %v476
          %v478 = vadd.f32 %v477, 1e-05
          %v479 = vrsqrt.pop %v478
          %v480 = vmul.f32 %v470, %v479
          %v482 = vlaneseq
          %v483 = vshrl.u32 %v482, 7
          %v484 = vsub.s32 0, %v483
          %v485 = vrot.slane %v471, %v484
          %v487 = vmul.f32 %v480, %v485
          %v488 = vpack.c.bf16 %v487, %v487
          %vm489 = vcmask 257024
          %490 = vst.msk [vmem:[#allocation2] sm:$0xf] %vm489, %v488
          %491 = vst.msk [vmem:[%s401] sm:$0xff] %vm425, %v470
        $region72: #{transformer_lm_forward.13} parent=43 // pred_fallthru
          _
        %v492 = vld [vmem:[#allocation2] sm:$0xf]
        %v493 = vld [vmem:[#allocation11] sm:$0xf]
        %v494 = vld [vmem:[#allocation11 + $0x4] sm:$0xf]
        %v495 = vld [vmem:[#allocation11 + $0x8] sm:$0xf]
        %v496 = vld [vmem:[#allocation11 + $0xc] sm:$0xf]
        %v501 = vunpack.c.l.b16 %v493
        %v502 = vunpack.c.l.b16 %v494
        %v503 = vunpack.c.l.b16 %v495
        %v504 = vunpack.c.l.b16 %v496
        %v505 = vpack.c.b16 %v502, %v501
        %v506 = vpack.c.b16 %v504, %v503
        %vm509 = vcmask 261120
        %v511 = vsel %vm509, %v492, 0
        %513 = vmatprep.subr.bf16.mxu0 0
        %514 = vmatpush1.bf16.msra.mxu0 %v505
        %515 = vmatprep.subr.bf16.mxu0 0
        %516 = vmatpush1.bf16.msra.mxu0 %v506
        %517 = vmatprep.subr.bf16.mxu0 0
        %518 = vmatpush1.bf16.msra.mxu0 0
        %519 = vmatprep.subr.bf16.mxu0 0
        %520 = vmatpush1.bf16.msra.mxu0 0
        %521 = vmatprep.subr.bf16.mxu0 0
        %522 = vmatpush1.bf16.msra.mxu0 0
        %523 = vmatprep.subr.bf16.mxu0 0
        %524 = vmatpush1.bf16.msra.mxu0 0
        %525 = vmatprep.subr.bf16.mxu0 0
        %526 = vmatpush1.bf16.msra.mxu0 0
        %527 = vmatprep.subr.bf16.mxu0 0
        %528 = vmatpush1.bf16.msra.mxu0 0
        %529 = vmatprep.subr.bf16.mxu0 0
        %530 = vmatpush1.bf16.msra.mxu0 0
        %531 = vmatprep.subr.bf16.mxu0 0
        %532 = vmatpush1.bf16.msra.mxu0 0
        %533 = vmatprep.subr.bf16.mxu0 0
        %534 = vmatpush1.bf16.msra.mxu0 0
        %535 = vmatprep.subr.bf16.mxu0 0
        %536 = vmatpush1.bf16.msra.mxu0 0
        %537 = vmatprep.subr.bf16.mxu0 0
        %538 = vmatpush1.bf16.msra.mxu0 0
        %539 = vmatprep.subr.bf16.mxu0 0
        %540 = vmatpush1.bf16.msra.mxu0 0
        %541 = vmatprep.subr.bf16.mxu0 0
        %542 = vmatpush1.bf16.msra.mxu0 0
        %543 = vmatprep.subr.bf16.mxu0 0
        %544 = vmatpush1.bf16.msra.mxu0 0
        %545 = vmatprep.mubr.bf16.mxu0 0
        %546 = vmatmul.mubr.bf16.gmra.mrb[0].mxu0 %v511
        %v547 = vpop.f32.mrb[0].mxu0
        %v548 = vadd.f32 0.0, %v547
        %v549 = vpop.f32.mrb[0].mxu0
        %v550 = vpop.f32.mrb[0].mxu0
        %v551 = vpop.f32.mrb[0].mxu0
        %552 = vdwg.mxu0
        %v553 = vmul.f32 %v548, 0.5
        %v554 = vmul.f32 %v548, 0.70710677
        %v555 = verf.f32.pop %v554
        %v556 = vadd.f32 %v555, 1.0
        %v557 = vmul.f32 %v553, %v556
        %v558 = vpack.c.bf16 %v557, %v557
        %v559 = vld [vmem:[%s401] sm:$0xff]
        %v560 = vld [vmem:[#allocation12] sm:$0xf]
        %v561 = vld [vmem:[#allocation12 + $0x4] sm:$0xf]
        %v562 = vld [vmem:[#allocation12 + $0x8] sm:$0xf]
        %v563 = vld [vmem:[#allocation12 + $0xc] sm:$0xf]
        %v564 = vld [vmem:[#allocation12 + $0x10] sm:$0xf]
        %v565 = vld [vmem:[#allocation12 + $0x14] sm:$0xf]
        %v566 = vld [vmem:[#allocation12 + $0x18] sm:$0xf]
        %v567 = vld [vmem:[#allocation12 + $0x1c] sm:$0xf]
        %v576 = vunpack.c.l.b16 %v560
        %v577 = vunpack.c.l.b16 %v561
        %v578 = vunpack.c.l.b16 %v562
        %v579 = vunpack.c.l.b16 %v563
        %v580 = vunpack.c.l.b16 %v564
        %v581 = vunpack.c.l.b16 %v565
        %v582 = vunpack.c.l.b16 %v566
        %v583 = vunpack.c.l.b16 %v567
        %v584 = vpack.c.b16 %v577, %v576
        %v585 = vpack.c.b16 %v579, %v578
        %v586 = vpack.c.b16 %v581, %v580
        %v587 = vpack.c.b16 %v583, %v582
        %vm592 = vcmask 523264
        %v594 = vsel %vm592, %v558, 0
        %596 = vmatprep.subr.bf16.mxu0 0
        %597 = vmatpush1.bf16.msra.mxu0 %v584
        %598 = vmatprep.subr.bf16.mxu0 0
        %599 = vmatpush1.bf16.msra.mxu0 %v585
        %600 = vmatprep.subr.bf16.mxu0 0
        %601 = vmatpush1.bf16.msra.mxu0 %v586
        %602 = vmatprep.subr.bf16.mxu0 0
        %603 = vmatpush1.bf16.msra.mxu0 %v587
        %604 = vmatprep.subr.bf16.mxu0 0
        %605 = vmatpush1.bf16.msra.mxu0 0
        %606 = vmatprep.subr.bf16.mxu0 0
        %607 = vmatpush1.bf16.msra.mxu0 0
        %608 = vmatprep.subr.bf16.mxu0 0
        %609 = vmatpush1.bf16.msra.mxu0 0
        %610 = vmatprep.subr.bf16.mxu0 0
        %611 = vmatpush1.bf16.msra.mxu0 0
        %612 = vmatprep.subr.bf16.mxu0 0
        %613 = vmatpush1.bf16.msra.mxu0 0
        %614 = vmatprep.subr.bf16.mxu0 0
        %615 = vmatpush1.bf16.msra.mxu0 0
        %616 = vmatprep.subr.bf16.mxu0 0
        %617 = vmatpush1.bf16.msra.mxu0 0
        %618 = vmatprep.subr.bf16.mxu0 0
        %619 = vmatpush1.bf16.msra.mxu0 0
        %620 = vmatprep.subr.bf16.mxu0 0
        %621 = vmatpush1.bf16.msra.mxu0 0
        %622 = vmatprep.subr.bf16.mxu0 0
        %623 = vmatpush1.bf16.msra.mxu0 0
        %624 = vmatprep.subr.bf16.mxu0 0
        %625 = vmatpush1.bf16.msra.mxu0 0
        %626 = vmatprep.subr.bf16.mxu0 0
        %627 = vmatpush1.bf16.msra.mxu0 0
        %628 = vmatprep.mubr.bf16.mxu0 0
        %629 = vmatmul.mubr.bf16.gmra.mrb[0].mxu0 %v594
        %v630 = vpop.f32.mrb[0].mxu0
        %v631 = vadd.f32 0.0, %v630
        %v632 = vpop.f32.mrb[0].mxu0
        %v633 = vpop.f32.mrb[0].mxu0
        %v634 = vpop.f32.mrb[0].mxu0
        %635 = vdwg.mxu0
        %v636 = vadd.f32 %v559, %v631
        %637 = vst.msk [vmem:[%s401] sm:$0xff] %vm509, %v636
        %s638 = sand.u32 %s207, 1
        %s639 = scalar_lea.sflag [#allocation5], %s638
        %s640 = sand.u32 %s207, 1
        %s641 = smul.addr %s640, 8
        %s642 = scalar_lea.vmem [#allocation14], %s641
        // Predicated region
        $region73: #{transformer_lm_forward.13} parent=43 // pred_check
          %p643 = pneg %p217
        $region74: #{transformer_lm_forward.13} parent=43 // pred_check_branch
          %645 = sbr.rel (%p643) target = $region76
        $region75: #{transformer_lm_forward.13} parent=43 // pred_region
          %s647 = ssub.s32 128, 128
          %648 = vsyncadd %s639, %s647
          %s649 = sadd.s32 %s34, %s33
          %s650 = smul.addr %s649, 128
          %s651 = scalar_lea.hbm %s6, %s650
          %s653 = sshll.u32 %s642, 4
          %s654 = int_to_ptr.vmem [resolvable:$true] %s653
          %656 = dma.vmem_to_hbm [thread:$0]  %s654, 128, %s651, %s639
        $region76: #{transformer_lm_forward.13} parent=43 // pred_fallthru
          _
      $region44: #{transformer_lm_forward.13} parent=5 // pred_fallthru
        _
      %p657 = scmp.le.s32.totalorder 2, %s23
      // Predicated region
      $region77: #{transformer_lm_forward.13} parent=5 // pred_check
        %p658 = pneg %p657
      $region78: #{transformer_lm_forward.13} parent=5 // pred_check_branch
        %660 = sbr.rel (%p658) target = $region80
      $region79: #{transformer_lm_forward.13} parent=5 // pred_region
        %s661 = ssub.s32 %s23, 2
        // Predicated region
        $region81: #{transformer_lm_forward.13} parent=79 // pred_check
          %p662 = pneg %p223
        $region82: #{transformer_lm_forward.13} parent=79 // pred_check_branch
          %664 = sbr.rel (%p662) target = $region84
        $region83: #{transformer_lm_forward.13} parent=79 // pred_region
          %s665 = sand.u32 %s208, 1
          %s666 = scalar_lea.sflag [#allocation5], %s665
          %s667 = sand.u32 %s208, 1
          %s668 = smul.addr %s667, 8
          %s669 = scalar_lea.vmem [#allocation14], %s668
          %670 = dma.done %s666, 128
        $region84: #{transformer_lm_forward.13} parent=79 // pred_fallthru
          _
      $region80: #{transformer_lm_forward.13} parent=5 // pred_fallthru
        _
    $region6: #{transformer_lm_forward.13} parent=1 // loop_footer
      %s27 = sadd.s32 1, %s23
    $region7: #{transformer_lm_forward.13} parent=1 // loop_footer_branch
      %22 = sbr.rel target = $region3
    $region8: #{transformer_lm_forward.13} parent=1 // loop_exit
      _
    %671 = vsyncpa [#allocation4], 1
    %s672 = scalar_lea.sflag [#allocation4], 1
    %673 = vsyncpa %s672, 1
    %674 = vsyncpa [#allocation7], 1
    %s675 = scalar_lea.sflag [#allocation7], 1
    %676 = vsyncpa %s675, 1
    %677 = vsyncpa [#allocation10], 1
    %678 = vsyncpa [#allocation13], 1
    %679 = vsyncpa [#allocation5], 1
    %s680 = scalar_lea.sflag [#allocation5], 1
    %681 = vsyncpa %s680, 1

// kernel: transformer_lm_forward.12
$region0: #{transformer_lm_forward.12}
  #allocation0 [shape = 'u32[]', space=smem, size = 0x4, offset = 0x4, fixed_abs, tag = 'smem constant byte address 0x4 - core index']
  #allocation1 [shape = 'u32[144,128]{1,0:T(1,128)}', space=vmem, size = 0x12000, scoped, tag = 'internal scratch']
  #allocation2 [shape = 'f32[4,8,1]{2,1,0:T(8,128)}', space=vmem, size = 0x4000, scoped, tag = 'scratch operand']
  #allocation3 [shape = 'f32[4,8,1]{2,1,0:T(8,128)}', space=vmem, size = 0x4000, scoped, tag = 'scratch operand']
  #allocation4 [shape = 'f32[4,8,8]{2,1,0:T(8,128)}', space=vmem, size = 0x4000, scoped, tag = 'scratch operand']
  %s0 = inlined_call_operand.hbm [shape: bf16[2,4,8,8], index: 0, kind: input, shape index: {}]
  %s1 = inlined_call_operand.hbm [shape: bf16[2,4,8,8], index: 1, kind: input, shape index: {}]
  %s2 = inlined_call_operand.hbm [shape: bf16[2,4,8,8], index: 2, kind: input, shape index: {}]
  %s3 = inlined_call_operand.hbm [shape: bf16[2,4,8,8], index: 3, kind: output, shape index: {}]
  %s4 = sld [smem:[#allocation0]]
  $region73: #{transformer_lm_forward.12} parent=0
    _
  %s6 = ssub.s32 1, %s4
  %s7 = scalar_select 0, %s6, %s4
  $region1: #{transformer_lm_forward.12} parent=0
    #allocation5 [shape = 'u8[16384]{0}', space=vmem, size = 0x4000, scoped, tag = 'input window, operand 0']
    #allocation6 [shape = 's32[2]{0}', space=sflag, size = 0x8, scoped, tag = 'scoped memory for transformer_lm_forward.12']
    #allocation7 [shape = 's32[2]{0}', space=sflag, size = 0x8, scoped, tag = 'scoped memory for transformer_lm_forward.12']
    #allocation8 [shape = 'u8[16384]{0}', space=vmem, size = 0x4000, scoped, tag = 'input window, operand 1']
    #allocation9 [shape = 's32[2]{0}', space=sflag, size = 0x8, scoped, tag = 'scoped memory for transformer_lm_forward.12']
    #allocation10 [shape = 'u8[16384]{0}', space=vmem, size = 0x4000, scoped, tag = 'input window, operand 2']
    #allocation11 [shape = 'u8[16384]{0}', space=vmem, size = 0x4000, scoped, tag = 'output window, operand 0']
    %8 = vsyncpa [#allocation6], 0
    %s9 = scalar_lea.sflag [#allocation6], 1
    %10 = vsyncpa %s9, 0
    %11 = vsyncpa [#allocation9], 0
    %s12 = scalar_lea.sflag [#allocation9], 1
    %13 = vsyncpa %s12, 0
    %14 = vsyncpa [#allocation7], 0
    %s15 = scalar_lea.sflag [#allocation7], 1
    %16 = vsyncpa %s15, 0
    loop: start=0, step=1, limit=4
    $region2: #{transformer_lm_forward.12} parent=1 // loop_pre_header
      _
    $region3: #{transformer_lm_forward.12} parent=1 // loop_header
      %s18 = sphi 0, %s22
      %p19 = scmp.ge.s32.totalorder %s18, 4
      %s25 = sphi 0, %s51
      %s26 = sphi 0, %s47
      %s27 = sphi 0, %s43
      %s28 = sphi 0, %s39
      %s29 = sphi 0, %s25
      %s30 = sphi 0, %s26
      %s31 = sphi 0, %s27
      %s32 = sphi 0, %s28
      %s33 = sphi 0, %s29
      %s34 = sphi 0, %s30
      %s35 = sphi 0, %s31
      %s36 = sphi 0, %s32
      %s58 = sphi 0, %s60
      %s61 = sphi 0, %s58
      %s62 = sphi 0, %s61
      %s78 = sphi 0, %s62
      %s92 = sphi 0, %s94
      %s95 = sphi 0, %s92
      %s96 = sphi 0, %s95
      %s112 = sphi 0, %s96
      %s126 = sphi 0, %s128
      %s129 = sphi 0, %s126
      %s130 = sphi 0, %s129
      %s146 = sphi 0, %s130
      %s156 = sphi 0, %s158
      %s159 = sphi 0, %s156
      %s160 = sphi 0, %s159
      %s176 = sphi 0, %s160
    $region4: #{transformer_lm_forward.12} parent=1 // loop_header_branch
      %21 = sbr.rel (%p19) target = $region8
    $region5: #{transformer_lm_forward.12} parent=1 // loop_body
      %s23 = ssub.s32 %s18, 1
      %s24 = ssub.s32 %s18, 2
      %s37 = sadd.s32 1, %s28
      %p38 = scmp.ge.s32.totalorder %s37, 1
      %s39 = scalar_select %p38, 0, %s37
      %s40 = sadd.s32 1, %s27
      %s41 = scalar_select %p38, %s40, %s27
      %p42 = scmp.ge.s32.totalorder %s41, 1
      %s43 = scalar_select %p42, 0, %s41
      %s44 = sadd.s32 1, %s26
      %s45 = scalar_select %p42, %s44, %s26
      %p46 = scmp.ge.s32.totalorder %s45, 1
      %s47 = scalar_select %p46, 0, %s45
      %s48 = sadd.s32 1, %s25
      %s49 = scalar_select %p46, %s48, %s25
      %p50 = scmp.ge.s32.totalorder %s49, 2
      %s51 = scalar_select %p50, 0, %s49
      %s52 = ssub.s32 %s25, %s51
      %s53 = ssub.s32 %s26, %s47
      %s54 = sor.u32 %s52, %s53
      %s55 = ssub.s32 %s27, %s43
      %s56 = sor.u32 %s54, %s55
      %p57 = scmp.eq.s32.totalorder %s56, 0
      %s59 = sadd.s32 %s58, 1
      %s60 = scalar_select %p57, %s58, %s59
      %p63 = pneg %p57
      %p64 = scmp.eq.s32.totalorder %s18, 1
      %p65 = por %p63, %p64
      %p66 = scmp.ne.s32.totalorder %s58, %s61
      %p67 = scmp.eq.s32.totalorder %s18, 0
      %p68 = por %p66, %p67
      %p69 = scmp.ne.s32.totalorder %s58, %s61
      %p70 = scmp.eq.s32.totalorder %s23, 1
      %p71 = por %p69, %p70
      %p72 = scmp.ne.s32.totalorder %s61, %s62
      %p73 = scmp.eq.s32.totalorder %s23, 0
      %p74 = por %p72, %p73
      %p75 = scmp.ne.s32.totalorder %s61, %s62
      %p76 = scmp.eq.s32.totalorder %s24, 1
      %p77 = por %p75, %p76
      %p79 = scmp.ne.s32.totalorder %s62, %s78
      %p80 = scmp.eq.s32.totalorder %s24, 0
      %p81 = por %p79, %p80
      %p82 = scmp.lt.s32.totalorder %s28, %s27
      %s83 = scalar_select %p82, %s28, %s27
      %p84 = scmp.lt.s32.totalorder %s39, %s43
      %s85 = scalar_select %p84, %s39, %s43
      %s86 = ssub.s32 %s25, %s51
      %s87 = ssub.s32 %s26, %s47
      %s88 = sor.u32 %s86, %s87
      %s89 = ssub.s32 %s83, %s85
      %s90 = sor.u32 %s88, %s89
      %p91 = scmp.eq.s32.totalorder %s90, 0
      %s93 = sadd.s32 %s92, 1
      %s94 = scalar_select %p91, %s92, %s93
      %p97 = pneg %p91
      %p98 = scmp.eq.s32.totalorder %s18, 1
      %p99 = por %p97, %p98
      %p100 = scmp.ne.s32.totalorder %s92, %s95
      %p101 = scmp.eq.s32.totalorder %s18, 0
      %p102 = por %p100, %p101
      %p103 = scmp.ne.s32.totalorder %s92, %s95
      %p104 = scmp.eq.s32.totalorder %s23, 1
      %p105 = por %p103, %p104
      %p106 = scmp.ne.s32.totalorder %s95, %s96
      %p107 = scmp.eq.s32.totalorder %s23, 0
      %p108 = por %p106, %p107
      %p109 = scmp.ne.s32.totalorder %s95, %s96
      %p110 = scmp.eq.s32.totalorder %s24, 1
      %p111 = por %p109, %p110
      %p113 = scmp.ne.s32.totalorder %s96, %s112
      %p114 = scmp.eq.s32.totalorder %s24, 0
      %p115 = por %p113, %p114
      %p116 = scmp.lt.s32.totalorder %s28, %s27
      %s117 = scalar_select %p116, %s28, %s27
      %p118 = scmp.lt.s32.totalorder %s39, %s43
      %s119 = scalar_select %p118, %s39, %s43
      %s120 = ssub.s32 %s25, %s51
      %s121 = ssub.s32 %s26, %s47
      %s122 = sor.u32 %s120, %s121
      %s123 = ssub.s32 %s117, %s119
      %s124 = sor.u32 %s122, %s123
      %p125 = scmp.eq.s32.totalorder %s124, 0
      %s127 = sadd.s32 %s126, 1
      %s128 = scalar_select %p125, %s126, %s127
      %p131 = pneg %p125
      %p132 = scmp.eq.s32.totalorder %s18, 1
      %p133 = por %p131, %p132
      %p134 = scmp.ne.s32.totalorder %s126, %s129
      %p135 = scmp.eq.s32.totalorder %s18, 0
      %p136 = por %p134, %p135
      %p137 = scmp.ne.s32.totalorder %s126, %s129
      %p138 = scmp.eq.s32.totalorder %s23, 1
      %p139 = por %p137, %p138
      %p140 = scmp.ne.s32.totalorder %s129, %s130
      %p141 = scmp.eq.s32.totalorder %s23, 0
      %p142 = por %p140, %p141
      %p143 = scmp.ne.s32.totalorder %s129, %s130
      %p144 = scmp.eq.s32.totalorder %s24, 1
      %p145 = por %p143, %p144
      %p147 = scmp.ne.s32.totalorder %s130, %s146
      %p148 = scmp.eq.s32.totalorder %s24, 0
      %p149 = por %p147, %p148
      %s150 = ssub.s32 %s25, %s51
      %s151 = ssub.s32 %s26, %s47
      %s152 = sor.u32 %s150, %s151
      %s153 = ssub.s32 %s27, %s43
      %s154 = sor.u32 %s152, %s153
      %p155 = scmp.eq.s32.totalorder %s154, 0
      %s157 = sadd.s32 %s156, 1
      %s158 = scalar_select %p155, %s156, %s157
      %p161 = pneg %p155
      %p162 = scmp.eq.s32.totalorder %s18, 1
      %p163 = por %p161, %p162
      %p164 = scmp.ne.s32.totalorder %s156, %s159
      %p165 = scmp.eq.s32.totalorder %s18, 0
      %p166 = por %p164, %p165
      %p167 = scmp.ne.s32.totalorder %s156, %s159
      %p168 = scmp.eq.s32.totalorder %s23, 1
      %p169 = por %p167, %p168
      %p170 = scmp.ne.s32.totalorder %s159, %s160
      %p171 = scmp.eq.s32.totalorder %s23, 0
      %p172 = por %p170, %p171
      %p173 = scmp.ne.s32.totalorder %s159, %s160
      %p174 = scmp.eq.s32.totalorder %s24, 1
      %p175 = por %p173, %p174
      %p177 = scmp.ne.s32.totalorder %s160, %s176
      %p178 = scmp.eq.s32.totalorder %s24, 0
      %p179 = por %p177, %p178
      %p180 = scmp.le.s32.totalorder 1, %s18
      %p181 = scmp.lt.s32.totalorder %s18, 3
      %p182 = pnand %p180, %p181
      %p183 = pneg %p182
      // Predicated region
      $region9: #{transformer_lm_forward.12} parent=5 // pred_check
        _
      $region10: #{transformer_lm_forward.12} parent=5 // pred_check_branch
        %185 = sbr.rel (%p182) target = $region12
      $region11: #{transformer_lm_forward.12} parent=5 // pred_region
        %s186 = ssub.s32 %s18, 1
      $region12: #{transformer_lm_forward.12} parent=5 // pred_fallthru
        _
      %p187 = scmp.lt.s32.totalorder %s18, 2
      // Predicated region
      $region13: #{transformer_lm_forward.12} parent=5 // pred_check
        %p188 = pneg %p187
      $region14: #{transformer_lm_forward.12} parent=5 // pred_check_branch
        %190 = sbr.rel (%p188) target = $region16
      $region15: #{transformer_lm_forward.12} parent=5 // pred_region
        // Predicated region
        $region17: #{transformer_lm_forward.12} parent=15 // pred_check
          %p191 = pneg %p68
        $region18: #{transformer_lm_forward.12} parent=15 // pred_check_branch
          %193 = sbr.rel (%p191) target = $region20
        $region19: #{transformer_lm_forward.12} parent=15 // pred_region
          %s194 = sand.u32 %s58, 1
          %s195 = scalar_lea.sflag [#allocation6], %s194
          %s196 = sand.u32 %s58, 1
          %s197 = smul.addr %s196, 16
          %s198 = scalar_lea.vmem [#allocation5], %s197
          %s199 = smul.u32 4, %s26
          %s201 = ssub.s32 256, 256
          %202 = vsyncadd %s195, %s201
          %s203 = sadd.s32 %s27, %s199
          %s204 = smul.addr %s25, 4
          %s205 = sadd.s32 %s203, %s204
          %s206 = smul.addr %s205, 64
          %s207 = scalar_lea.hbm %s0, %s206
          %s208 = sshll.u32 %s198, 4
          %s209 = int_to_ptr.vmem [resolvable:$true] %s208
          %214 = dma.hbm_to_vmem [thread:$0]  %s207, 256, %s209, %s195, 64, 64, 4
        $region20: #{transformer_lm_forward.12} parent=15 // pred_fallthru
          _
        // Predicated region
        $region21: #{transformer_lm_forward.12} parent=15 // pred_check
          %p215 = pneg %p102
        $region22: #{transformer_lm_forward.12} parent=15 // pred_check_branch
          %217 = sbr.rel (%p215) target = $region24
        $region23: #{transformer_lm_forward.12} parent=15 // pred_region
          %s218 = sand.u32 %s18, 1
          %s219 = scalar_lea.sflag [#allocation9], %s218
          %s220 = sand.u32 %s92, 1
          %s221 = smul.addr %s220, 16
          %s222 = scalar_lea.vmem [#allocation8], %s221
          %p223 = scmp.lt.s32.totalorder %s28, %s27
          %s224 = scalar_select %p223, %s28, %s27
          %s225 = smul.u32 4, %s26
          %s227 = ssub.s32 256, 256
          %228 = vsyncadd %s219, %s227
          %s229 = sadd.s32 %s224, %s225
          %s230 = smul.addr %s25, 4
          %s231 = sadd.s32 %s229, %s230
          %s232 = smul.addr %s231, 64
          %s233 = scalar_lea.hbm %s1, %s232
          %s234 = sshll.u32 %s222, 4
          %s235 = int_to_ptr.vmem [resolvable:$true] %s234
          %240 = dma.hbm_to_vmem [thread:$0]  %s233, 256, %s235, %s219, 64, 64, 4
        $region24: #{transformer_lm_forward.12} parent=15 // pred_fallthru
          _
        // Predicated region
        $region25: #{transformer_lm_forward.12} parent=15 // pred_check
          %p241 = pneg %p136
        $region26: #{transformer_lm_forward.12} parent=15 // pred_check_branch
          %243 = sbr.rel (%p241) target = $region28
        $region27: #{transformer_lm_forward.12} parent=15 // pred_region
          %s244 = sand.u32 %s18, 1
          %s245 = scalar_lea.sflag [#allocation9], %s244
          %s246 = sand.u32 %s126, 1
          %s247 = smul.addr %s246, 16
          %s248 = scalar_lea.vmem [#allocation10], %s247
          %p249 = scmp.lt.s32.totalorder %s28, %s27
          %s250 = scalar_select %p249, %s28, %s27
          %s251 = smul.u32 4, %s26
          %s253 = ssub.s32 256, 256
          %254 = vsyncadd %s245, %s253
          %s255 = sadd.s32 %s250, %s251
          %s256 = smul.addr %s25, 4
          %s257 = sadd.s32 %s255, %s256
          %s258 = smul.addr %s257, 64
          %s259 = scalar_lea.hbm %s2, %s258
          %s260 = sshll.u32 %s248, 4
          %s261 = int_to_ptr.vmem [resolvable:$true] %s260
          %266 = dma.hbm_to_vmem [thread:$0]  %s259, 256, %s261, %s245, 64, 64, 4
        $region28: #{transformer_lm_forward.12} parent=15 // pred_fallthru
          _
      $region16: #{transformer_lm_forward.12} parent=5 // pred_fallthru
        _
      %p267 = scmp.le.s32.totalorder 1, %s18
      %p268 = scmp.lt.s32.totalorder %s18, 3
      %p269 = pnand %p267, %p268
      %p270 = pneg %p269
      // Predicated region
      $region29: #{transformer_lm_forward.12} parent=5 // pred_check
        _
      $region30: #{transformer_lm_forward.12} parent=5 // pred_check_branch
        %272 = sbr.rel (%p269) target = $region32
      $region31: #{transformer_lm_forward.12} parent=5 // pred_region
        %s273 = ssub.s32 %s18, 1
        %s274 = sand.u32 %s61, 1
        %s275 = scalar_lea.sflag [#allocation6], %s274
        %s276 = sand.u32 %s61, 1
        %s277 = smul.addr %s276, 16
        %s278 = scalar_lea.vmem [#allocation5], %s277
        // Predicated region
        $region33: #{transformer_lm_forward.12} parent=31 // pred_check
          %p279 = pneg %p74
        $region34: #{transformer_lm_forward.12} parent=31 // pred_check_branch
          %281 = sbr.rel (%p279) target = $region36
        $region35: #{transformer_lm_forward.12} parent=31 // pred_region
          %282 = dma.done %s275, 256
        $region36: #{transformer_lm_forward.12} parent=31 // pred_fallthru
          _
        %s283 = sand.u32 %s23, 1
        %s284 = scalar_lea.sflag [#allocation9], %s283
        %s285 = sand.u32 %s95, 1
        %s286 = smul.addr %s285, 16
        %s287 = scalar_lea.vmem [#allocation8], %s286
        // Predicated region
        $region37: #{transformer_lm_forward.12} parent=31 // pred_check
          %p288 = pneg %p108
        $region38: #{transformer_lm_forward.12} parent=31 // pred_check_branch
          %290 = sbr.rel (%p288) target = $region40
        $region39: #{transformer_lm_forward.12} parent=31 // pred_region
          %291 = dma.done %s284, 256
        $region40: #{transformer_lm_forward.12} parent=31 // pred_fallthru
          _
        %s292 = sand.u32 %s23, 1
        %s293 = scalar_lea.sflag [#allocation9], %s292
        %s294 = sand.u32 %s129, 1
        %s295 = smul.addr %s294, 16
        %s296 = scalar_lea.vmem [#allocation10], %s295
        // Predicated region
        $region41: #{transformer_lm_forward.12} parent=31 // pred_check
          %p297 = pneg %p142
        $region42: #{transformer_lm_forward.12} parent=31 // pred_check_branch
          %299 = sbr.rel (%p297) target = $region44
        $region43: #{transformer_lm_forward.12} parent=31 // pred_region
          %300 = dma.done %s293, 256
        $region44: #{transformer_lm_forward.12} parent=31 // pred_fallthru
          _
        %s301 = sand.u32 %s61, 1
        %s302 = scalar_lea.sflag [#allocation6], %s301
        %s303 = sand.u32 %s61, 1
        %s304 = smul.addr %s303, 16
        %s305 = scalar_lea.vmem [#allocation5], %s304
        %p306 = pneg %p74
        %p307 = pneg %p71
        %s308 = sand.u32 %s23, 1
        %s309 = scalar_lea.sflag [#allocation9], %s308
        %s310 = sand.u32 %s95, 1
        %s311 = smul.addr %s310, 16
        %s312 = scalar_lea.vmem [#allocation8], %s311
        %p313 = pneg %p108
        %p314 = pneg %p105
        %s315 = sand.u32 %s23, 1
        %s316 = scalar_lea.sflag [#allocation9], %s315
        %s317 = sand.u32 %s129, 1
        %s318 = smul.addr %s317, 16
        %s319 = scalar_lea.vmem [#allocation10], %s318
        %p320 = pneg %p142
        %p321 = pneg %p139
        %p322 = pneg %p172
        %p323 = pneg %p169
        %s324 = sand.u32 %s159, 1
        %s325 = scalar_lea.sflag [#allocation7], %s324
        %s326 = sand.u32 %s159, 1
        %s327 = smul.addr %s326, 16
        %s328 = scalar_lea.vmem [#allocation11], %s327
        %s329 = smul.u32 4, %s30
        %p330 = scmp.lt.s32.totalorder %s32, %s31
        %s331 = scalar_select %p330, %s32, %s31
        %s332 = smul.u32 4, %s30
        %p333 = scmp.lt.s32.totalorder %s32, %s31
        %s334 = scalar_select %p333, %s32, %s31
        %s335 = smul.u32 4, %s30
        %s336 = smul.u32 4, %s30
        %p338 = scmp.eq.s32.totalorder %s32, 0
        // Predicated region
        $region45: #{transformer_lm_forward.12} parent=31 // pred_check
          %p339 = pneg %p338
        $region46: #{transformer_lm_forward.12} parent=31 // pred_check_branch
          %341 = sbr.rel (%p339) target = $region48
        $region47: #{transformer_lm_forward.12} parent=31 // pred_region
          %vm342 = vcmask 7168
          %343 = vst.msk [vmem:[#allocation2] sm:$0xff] %vm342, -inf
          %344 = vst.msk [vmem:[#allocation2 + $0x8] sm:$0xff] %vm342, -inf
          %345 = vst.msk [vmem:[#allocation2 + $0x10] sm:$0xff] %vm342, -inf
          %346 = vst.msk [vmem:[#allocation2 + $0x18] sm:$0xff] %vm342, -inf
          %347 = vst.msk [vmem:[#allocation3] sm:$0xff] %vm342, 0.0
          %348 = vst.msk [vmem:[#allocation3 + $0x8] sm:$0xff] %vm342, 0.0
          %349 = vst.msk [vmem:[#allocation3 + $0x10] sm:$0xff] %vm342, 0.0
          %350 = vst.msk [vmem:[#allocation3 + $0x18] sm:$0xff] %vm342, 0.0
          %vm351 = vcmask 64512
          %352 = vst.msk [vmem:[#allocation4] sm:$0xff] %vm351, 0.0
          %353 = vst.msk [vmem:[#allocation4 + $0x8] sm:$0xff] %vm351, 0.0
          %354 = vst.msk [vmem:[#allocation4 + $0x10] sm:$0xff] %vm351, 0.0
          %355 = vst.msk [vmem:[#allocation4 + $0x18] sm:$0xff] %vm351, 0.0
        $region48: #{transformer_lm_forward.12} parent=31 // pred_fallthru
          _
        %p356 = scmp.lt.s32.totalorder %s32, %s31
        // Predicated region
        $region49: #{transformer_lm_forward.12} parent=31 // pred_check
          %p357 = pneg %p356
        $region50: #{transformer_lm_forward.12} parent=31 // pred_check_branch
          %359 = sbr.rel (%p357) target = $region52
        $region51: #{transformer_lm_forward.12} parent=31 // pred_region
          %v360 = vld [vmem:[%s278] sm:$0xf]
          %v361 = vld [vmem:[%s278 + $0x4] sm:$0xf]
          %v362 = vld [vmem:[%s278 + $0x8] sm:$0xf]
          %v363 = vld [vmem:[%s278 + $0xc] sm:$0xf]
          %v364 = vld [vmem:[%s287] sm:$0xf]
          %v365 = vld [vmem:[%s287 + $0x4] sm:$0xf]
          %v366 = vld [vmem:[%s287 + $0x8] sm:$0xf]
          %v367 = vld [vmem:[%s287 + $0xc] sm:$0xf]
          %v368 = vld [vmem:[%s296] sm:$0xf]
          %v369 = vld [vmem:[%s296 + $0x4] sm:$0xf]
          %v370 = vld [vmem:[%s296 + $0x8] sm:$0xf]
          %v371 = vld [vmem:[%s296 + $0xc] sm:$0xf]
          %vm372 = vcmask 64512
          %v374 = vsel %vm372, %v360, 0
          %v377 = vsel %vm372, %v364, 0
          %379 = vmatprep.subr.bf16.mxu0 0
          %380 = vmatpush1.bf16.xpose.msra.mxu0 %v377
          %381 = vmatprep.subr.bf16.mxu0 0
          %382 = vmatpush1.bf16.xpose.msra.mxu0 0
          %383 = vmatprep.subr.bf16.mxu0 0
          %384 = vmatpush1.bf16.xpose.msra.mxu0 0
          %385 = vmatprep.subr.bf16.mxu0 0
          %386 = vmatpush1.bf16.xpose.msra.mxu0 0
          %387 = vmatprep.subr.bf16.mxu0 0
          %388 = vmatpush1.bf16.xpose.msra.mxu0 0
          %389 = vmatprep.subr.bf16.mxu0 0
          %390 = vmatpush1.bf16.xpose.msra.mxu0 0
          %391 = vmatprep.subr.bf16.mxu0 0
          %392 = vmatpush1.bf16.xpose.msra.mxu0 0
          %393 = vmatprep.subr.bf16.mxu0 0
          %394 = vmatpush1.bf16.xpose.msra.mxu0 0
          %395 = vmatprep.subr.bf16.mxu0 0
          %396 = vmatpush1.bf16.xpose.msra.mxu0 0
          %397 = vmatprep.subr.bf16.mxu0 0
          %398 = vmatpush1.bf16.xpose.msra.mxu0 0
          %399 = vmatprep.subr.bf16.mxu0 0
          %400 = vmatpush1.bf16.xpose.msra.mxu0 0
          %401 = vmatprep.subr.bf16.mxu0 0
          %402 = vmatpush1.bf16.xpose.msra.mxu0 0
          %403 = vmatprep.subr.bf16.mxu0 0
          %404 = vmatpush1.bf16.xpose.msra.mxu0 0
          %405 = vmatprep.subr.bf16.mxu0 0
          %406 = vmatpush1.bf16.xpose.msra.mxu0 0
          %407 = vmatprep.subr.bf16.mxu0 0
          %408 = vmatpush1.bf16.xpose.msra.mxu0 0
          %409 = vmatprep.subr.bf16.mxu0 0
          %410 = vmatpush1.bf16.xpose.msra.mxu0 0
          %411 = vmatprep.mubr.bf16.mxu0 0
          %412 = vmatmul.mubr.bf16.gmra.mrb[0].mxu0 %v374
          %v413 = vpop.f32.mrb[0].mxu0
          %v414 = vadd.f32 0.0, %v413
          %v415 = vpop.f32.mrb[0].mxu0
          %v416 = vpop.f32.mrb[0].mxu0
          %v417 = vpop.f32.mrb[0].mxu0
          %418 = vdwg.mxu0
          %v420 = vsel %vm372, %v361, 0
          %v423 = vsel %vm372, %v365, 0
          %425 = vmatprep.subr.bf16.mxu0 0
          %426 = vmatpush1.bf16.xpose.msra.mxu0 %v423
          %427 = vmatprep.subr.bf16.mxu0 0
          %428 = vmatpush1.bf16.xpose.msra.mxu0 0
          %429 = vmatprep.subr.bf16.mxu0 0
          %430 = vmatpush1.bf16.xpose.msra.mxu0 0
          %431 = vmatprep.subr.bf16.mxu0 0
          %432 = vmatpush1.bf16.xpose.msra.mxu0 0
          %433 = vmatprep.subr.bf16.mxu0 0
          %434 = vmatpush1.bf16.xpose.msra.mxu0 0
          %435 = vmatprep.subr.bf16.mxu0 0
          %436 = vmatpush1.bf16.xpose.msra.mxu0 0
          %437 = vmatprep.subr.bf16.mxu0 0
          %438 = vmatpush1.bf16.xpose.msra.mxu0 0
          %439 = vmatprep.subr.bf16.mxu0 0
          %440 = vmatpush1.bf16.xpose.msra.mxu0 0
          %441 = vmatprep.subr.bf16.mxu0 0
          %442 = vmatpush1.bf16.xpose.msra.mxu0 0
          %443 = vmatprep.subr.bf16.mxu0 0
          %444 = vmatpush1.bf16.xpose.msra.mxu0 0
          %445 = vmatprep.subr.bf16.mxu0 0
          %446 = vmatpush1.bf16.xpose.msra.mxu0 0
          %447 = vmatprep.subr.bf16.mxu0 0
          %448 = vmatpush1.bf16.xpose.msra.mxu0 0
          %449 = vmatprep.subr.bf16.mxu0 0
          %450 = vmatpush1.bf16.xpose.msra.mxu0 0
          %451 = vmatprep.subr.bf16.mxu0 0
          %452 = vmatpush1.bf16.xpose.msra.mxu0 0
          %453 = vmatprep.subr.bf16.mxu0 0
          %454 = vmatpush1.bf16.xpose.msra.mxu0 0
          %455 = vmatprep.subr.bf16.mxu0 0
          %456 = vmatpush1.bf16.xpose.msra.mxu0 0
          %457 = vmatprep.mubr.bf16.mxu0 0
          %458 = vmatmul.mubr.bf16.gmra.mrb[0].mxu0 %v420
          %v459 = vpop.f32.mrb[0].mxu0
          %v460 = vadd.f32 0.0, %v459
          %v461 = vpop.f32.mrb[0].mxu0
          %v462 = vpop.f32.mrb[0].mxu0
          %v463 = vpop.f32.mrb[0].mxu0
          %464 = vdwg.mxu0
          %v466 = vsel %vm372, %v362, 0
          %v469 = vsel %vm372, %v366, 0
          %471 = vmatprep.subr.bf16.mxu0 0
          %472 = vmatpush1.bf16.xpose.msra.mxu0 %v469
          %473 = vmatprep.subr.bf16.mxu0 0
          %474 = vmatpush1.bf16.xpose.msra.mxu0 0
          %475 = vmatprep.subr.bf16.mxu0 0
          %476 = vmatpush1.bf16.xpose.msra.mxu0 0
          %477 = vmatprep.subr.bf16.mxu0 0
          %478 = vmatpush1.bf16.xpose.msra.mxu0 0
          %479 = vmatprep.subr.bf16.mxu0 0
          %480 = vmatpush1.bf16.xpose.msra.mxu0 0
          %481 = vmatprep.subr.bf16.mxu0 0
          %482 = vmatpush1.bf16.xpose.msra.mxu0 0
          %483 = vmatprep.subr.bf16.mxu0 0
          %484 = vmatpush1.bf16.xpose.msra.mxu0 0
          %485 = vmatprep.subr.bf16.mxu0 0
          %486 = vmatpush1.bf16.xpose.msra.mxu0 0
          %487 = vmatprep.subr.bf16.mxu0 0
          %488 = vmatpush1.bf16.xpose.msra.mxu0 0
          %489 = vmatprep.subr.bf16.mxu0 0
          %490 = vmatpush1.bf16.xpose.msra.mxu0 0
          %491 = vmatprep.subr.bf16.mxu0 0
          %492 = vmatpush1.bf16.xpose.msra.mxu0 0
          %493 = vmatprep.subr.bf16.mxu0 0
          %494 = vmatpush1.bf16.xpose.msra.mxu0 0
          %495 = vmatprep.subr.bf16.mxu0 0
          %496 = vmatpush1.bf16.xpose.msra.mxu0 0
          %497 = vmatprep.subr.bf16.mxu0 0
          %498 = vmatpush1.bf16.xpose.msra.mxu0 0
          %499 = vmatprep.subr.bf16.mxu0 0
          %500 = vmatpush1.bf16.xpose.msra.mxu0 0
          %501 = vmatprep.subr.bf16.mxu0 0
          %502 = vmatpush1.bf16.xpose.msra.mxu0 0
          %503 = vmatprep.mubr.bf16.mxu0 0
          %504 = vmatmul.mubr.bf16.gmra.mrb[0].mxu0 %v466
          %v505 = vpop.f32.mrb[0].mxu0
          %v506 = vadd.f32 0.0, %v505
          %v507 = vpop.f32.mrb[0].mxu0
          %v508 = vpop.f32.mrb[0].mxu0
          %v509 = vpop.f32.mrb[0].mxu0
          %510 = vdwg.mxu0
          %v512 = vsel %vm372, %v363, 0
          %v515 = vsel %vm372, %v367, 0
          %517 = vmatprep.subr.bf16.mxu0 0
          %518 = vmatpush1.bf16.xpose.msra.mxu0 %v515
          %519 = vmatprep.subr.bf16.mxu0 0
          %520 = vmatpush1.bf16.xpose.msra.mxu0 0
          %521 = vmatprep.subr.bf16.mxu0 0
          %522 = vmatpush1.bf16.xpose.msra.mxu0 0
          %523 = vmatprep.subr.bf16.mxu0 0
          %524 = vmatpush1.bf16.xpose.msra.mxu0 0
          %525 = vmatprep.subr.bf16.mxu0 0
          %526 = vmatpush1.bf16.xpose.msra.mxu0 0
          %527 = vmatprep.subr.bf16.mxu0 0
          %528 = vmatpush1.bf16.xpose.msra.mxu0 0
          %529 = vmatprep.subr.bf16.mxu0 0
          %530 = vmatpush1.bf16.xpose.msra.mxu0 0
          %531 = vmatprep.subr.bf16.mxu0 0
          %532 = vmatpush1.bf16.xpose.msra.mxu0 0
          %533 = vmatprep.subr.bf16.mxu0 0
          %534 = vmatpush1.bf16.xpose.msra.mxu0 0
          %535 = vmatprep.subr.bf16.mxu0 0
          %536 = vmatpush1.bf16.xpose.msra.mxu0 0
          %537 = vmatprep.subr.bf16.mxu0 0
          %538 = vmatpush1.bf16.xpose.msra.mxu0 0
          %539 = vmatprep.subr.bf16.mxu0 0
          %540 = vmatpush1.bf16.xpose.msra.mxu0 0
          %541 = vmatprep.subr.bf16.mxu0 0
          %542 = vmatpush1.bf16.xpose.msra.mxu0 0
          %543 = vmatprep.subr.bf16.mxu0 0
          %544 = vmatpush1.bf16.xpose.msra.mxu0 0
          %545 = vmatprep.subr.bf16.mxu0 0
          %546 = vmatpush1.bf16.xpose.msra.mxu0 0
          %547 = vmatprep.subr.bf16.mxu0 0
          %548 = vmatpush1.bf16.xpose.msra.mxu0 0
          %549 = vmatprep.mubr.bf16.mxu0 0
          %550 = vmatmul.mubr.bf16.gmra.mrb[0].mxu0 %v512
          %v551 = vpop.f32.mrb[0].mxu0
          %v552 = vadd.f32 0.0, %v551
          %v553 = vpop.f32.mrb[0].mxu0
          %v554 = vpop.f32.mrb[0].mxu0
          %v555 = vpop.f32.mrb[0].mxu0
          %556 = vdwg.mxu0
          %v557 = vld [vmem:[#allocation2] sm:$0xff]
          %v558 = vld [vmem:[#allocation2 + $0x8] sm:$0xff]
          %v559 = vld [vmem:[#allocation2 + $0x10] sm:$0xff]
          %v560 = vld [vmem:[#allocation2 + $0x18] sm:$0xff]
          %v561 = vsel %vm372, %v414, -inf
          %562 = vmax.xlane.f32.xlu0 %v561
          %v563 = vpop.xlane.xlu0 %562
          %v564 = vsel %vm372, %v460, -inf
          %565 = vmax.xlane.f32.xlu0 %v564
          %v566 = vpop.xlane.xlu0 %565
          %v567 = vsel %vm372, %v506, -inf
          %568 = vmax.xlane.f32.xlu0 %v567
          %v569 = vpop.xlane.xlu0 %568
          %v570 = vsel %vm372, %v552, -inf
          %571 = vmax.xlane.f32.xlu0 %v570
          %v572 = vpop.xlane.xlu0 %571
          %v573 = vmax.f32 %v557, %v563
          %v574 = vmax.f32 %v558, %v566
          %v575 = vmax.f32 %v559, %v569
          %v576 = vmax.f32 %v560, %v572
          %v577 = vsub.f32 %v557, %v573
          %v578 = vsub.f32 %v558, %v574
          %v579 = vsub.f32 %v559, %v575
          %v580 = vsub.f32 %v560, %v576
          %v581 = vmul.f32 %v577, 1.442695
          %v582 = vpow.pop %v581
          %v583 = vmul.f32 %v578, 1.442695
          %v584 = vpow.pop %v583
          %v585 = vmul.f32 %v579, 1.442695
          %v586 = vpow.pop %v585
          %v587 = vmul.f32 %v580, 1.442695
          %v588 = vpow.pop %v587
          %590 = vset.pattern.permute.xlu0 0
          %591 = vperm.xlu0 %590, %v573
          %v592 = vpop.permute.xlu0 %591
          %595 = vset.pattern.permute.xlu0 0
          %596 = vperm.xlu0 %595, %v574
          %v597 = vpop.permute.xlu0 %596
          %600 = vset.pattern.permute.xlu0 0
          %601 = vperm.xlu0 %600, %v575
          %v602 = vpop.permute.xlu0 %601
          %605 = vset.pattern.permute.xlu0 0
          %606 = vperm.xlu0 %605, %v576
          %v607 = vpop.permute.xlu0 %606
          %v609 = vsub.f32 %v414, %v592
          %v610 = vsub.f32 %v460, %v597
          %v611 = vsub.f32 %v506, %v602
          %v612 = vsub.f32 %v552, %v607
          %v613 = vmul.f32 %v609, 1.442695
          %v614 = vpow.pop %v613
          %v615 = vmul.f32 %v610, 1.442695
          %v616 = vpow.pop %v615
          %v617 = vmul.f32 %v611, 1.442695
          %v618 = vpow.pop %v617
          %v619 = vmul.f32 %v612, 1.442695
          %v620 = vpow.pop %v619
          %v621 = vld [vmem:[#allocation3] sm:$0xff]
          %v622 = vld [vmem:[#allocation3 + $0x8] sm:$0xff]
          %v623 = vld [vmem:[#allocation3 + $0x10] sm:$0xff]
          %v624 = vld [vmem:[#allocation3 + $0x18] sm:$0xff]
          %v625 = vmul.f32 %v582, %v621
          %v626 = vmul.f32 %v584, %v622
          %v627 = vmul.f32 %v586, %v623
          %v628 = vmul.f32 %v588, %v624
          %v629 = vsel %vm372, %v614, 0.0
          %630 = vadd.xlane.f32.xlu0 %v629
          %v631 = vpop.xlane.xlu0 %630
          %v632 = vsel %vm372, %v616, 0.0
          %633 = vadd.xlane.f32.xlu0 %v632
          %v634 = vpop.xlane.xlu0 %633
          %v635 = vsel %vm372, %v618, 0.0
          %636 = vadd.xlane.f32.xlu0 %v635
          %v637 = vpop.xlane.xlu0 %636
          %v638 = vsel %vm372, %v620, 0.0
          %639 = vadd.xlane.f32.xlu0 %v638
          %v640 = vpop.xlane.xlu0 %639
          %v641 = vadd.f32 %v625, %v631
          %v642 = vadd.f32 %v626, %v634
          %v643 = vadd.f32 %v627, %v637
          %v644 = vadd.f32 %v628, %v640
          %vm645 = vcmask 7168
          %646 = vst.msk [vmem:[#allocation3] sm:$0xff] %vm645, %v641
          %647 = vst.msk [vmem:[#allocation3 + $0x8] sm:$0xff] %vm645, %v642
          %648 = vst.msk [vmem:[#allocation3 + $0x10] sm:$0xff] %vm645, %v643
          %649 = vst.msk [vmem:[#allocation3 + $0x18] sm:$0xff] %vm645, %v644
          %v650 = vld [vmem:[#allocation4] sm:$0xff]
          %v651 = vld [vmem:[#allocation4 + $0x8] sm:$0xff]
          %v652 = vld [vmem:[#allocation4 + $0x10] sm:$0xff]
          %v653 = vld [vmem:[#allocation4 + $0x18] sm:$0xff]
          %655 = vset.pattern.permute.xlu0 0
          %656 = vperm.xlu0 %655, %v582
          %v657 = vpop.permute.xlu0 %656
          %660 = vset.pattern.permute.xlu0 0
          %661 = vperm.xlu0 %660, %v584
          %v662 = vpop.permute.xlu0 %661
          %665 = vset.pattern.permute.xlu0 0
          %666 = vperm.xlu0 %665, %v586
          %v667 = vpop.permute.xlu0 %666
          %670 = vset.pattern.permute.xlu0 0
          %671 = vperm.xlu0 %670, %v588
          %v672 = vpop.permute.xlu0 %671
          %v674 = vmul.f32 %v657, %v650
          %v675 = vmul.f32 %v662, %v651
          %v676 = vmul.f32 %v667, %v652
          %v677 = vmul.f32 %v672, %v653
          %v678 = vpack.c.bf16 %v614, %v614
          %v679 = vpack.c.bf16 %v616, %v616
          %v680 = vpack.c.bf16 %v618, %v618
          %v681 = vpack.c.bf16 %v620, %v620
          %v683 = vsel %vm372, %v678, 0
          %vm685 = vcmask 1043456
          %v687 = vsel %vm685, %v368, 0
          %689 = vmatprep.subr.bf16.mxu0 0
          %690 = vmatpush1.bf16.msra.mxu0 %v687
          %691 = vmatprep.subr.bf16.mxu0 0
          %692 = vmatpush1.bf16.msra.mxu0 0
          %693 = vmatprep.subr.bf16.mxu0 0
          %694 = vmatpush1.bf16.msra.mxu0 0
          %695 = vmatprep.subr.bf16.mxu0 0
          %696 = vmatpush1.bf16.msra.mxu0 0
          %697 = vmatprep.subr.bf16.mxu0 0
          %698 = vmatpush1.bf16.msra.mxu0 0
          %699 = vmatprep.subr.bf16.mxu0 0
          %700 = vmatpush1.bf16.msra.mxu0 0
          %701 = vmatprep.subr.bf16.mxu0 0
          %702 = vmatpush1.bf16.msra.mxu0 0
          %703 = vmatprep.subr.bf16.mxu0 0
          %704 = vmatpush1.bf16.msra.mxu0 0
          %705 = vmatprep.subr.bf16.mxu0 0
          %706 = vmatpush1.bf16.msra.mxu0 0
          %707 = vmatprep.subr.bf16.mxu0 0
          %708 = vmatpush1.bf16.msra.mxu0 0
          %709 = vmatprep.subr.bf16.mxu0 0
          %710 = vmatpush1.bf16.msra.mxu0 0
          %711 = vmatprep.subr.bf16.mxu0 0
          %712 = vmatpush1.bf16.msra.mxu0 0
          %713 = vmatprep.subr.bf16.mxu0 0
          %714 = vmatpush1.bf16.msra.mxu0 0
          %715 = vmatprep.subr.bf16.mxu0 0
          %716 = vmatpush1.bf16.msra.mxu0 0
          %717 = vmatprep.subr.bf16.mxu0 0
          %718 = vmatpush1.bf16.msra.mxu0 0
          %719 = vmatprep.subr.bf16.mxu0 0
          %720 = vmatpush1.bf16.msra.mxu0 0
          %721 = vmatprep.mubr.bf16.mxu0 0
          %722 = vmatmul.mubr.bf16.gmra.mrb[0].mxu0 %v683
          %v723 = vpop.f32.mrb[0].mxu0
          %v724 = vadd.f32 0.0, %v723
          %v725 = vpop.f32.mrb[0].mxu0
          %v726 = vpop.f32.mrb[0].mxu0
          %v727 = vpop.f32.mrb[0].mxu0
          %728 = vdwg.mxu0
          %v730 = vsel %vm372, %v679, 0
          %v733 = vsel %vm685, %v369, 0
          %735 = vmatprep.subr.bf16.mxu0 0
          %736 = vmatpush1.bf16.msra.mxu0 %v733
          %737 = vmatprep.subr.bf16.mxu0 0
          %738 = vmatpush1.bf16.msra.mxu0 0
          %739 = vmatprep.subr.bf16.mxu0 0
          %740 = vmatpush1.bf16.msra.mxu0 0
          %741 = vmatprep.subr.bf16.mxu0 0
          %742 = vmatpush1.bf16.msra.mxu0 0
          %743 = vmatprep.subr.bf16.mxu0 0
          %744 = vmatpush1.bf16.msra.mxu0 0
          %745 = vmatprep.subr.bf16.mxu0 0
          %746 = vmatpush1.bf16.msra.mxu0 0
          %747 = vmatprep.subr.bf16.mxu0 0
          %748 = vmatpush1.bf16.msra.mxu0 0
          %749 = vmatprep.subr.bf16.mxu0 0
          %750 = vmatpush1.bf16.msra.mxu0 0
          %751 = vmatprep.subr.bf16.mxu0 0
          %752 = vmatpush1.bf16.msra.mxu0 0
          %753 = vmatprep.subr.bf16.mxu0 0
          %754 = vmatpush1.bf16.msra.mxu0 0
          %755 = vmatprep.subr.bf16.mxu0 0
          %756 = vmatpush1.bf16.msra.mxu0 0
          %757 = vmatprep.subr.bf16.mxu0 0
          %758 = vmatpush1.bf16.msra.mxu0 0
          %759 = vmatprep.subr.bf16.mxu0 0
          %760 = vmatpush1.bf16.msra.mxu0 0
          %761 = vmatprep.subr.bf16.mxu0 0
          %762 = vmatpush1.bf16.msra.mxu0 0
          %763 = vmatprep.subr.bf16.mxu0 0
          %764 = vmatpush1.bf16.msra.mxu0 0
          %765 = vmatprep.subr.bf16.mxu0 0
          %766 = vmatpush1.bf16.msra.mxu0 0
          %767 = vmatprep.mubr.bf16.mxu0 0
          %768 = vmatmul.mubr.bf16.gmra.mrb[0].mxu0 %v730
          %v769 = vpop.f32.mrb[0].mxu0
          %v770 = vadd.f32 0.0, %v769
          %v771 = vpop.f32.mrb[0].mxu0
          %v772 = vpop.f32.mrb[0].mxu0
          %v773 = vpop.f32.mrb[0].mxu0
          %774 = vdwg.mxu0
          %v776 = vsel %vm372, %v680, 0
          %v779 = vsel %vm685, %v370, 0
          %781 = vmatprep.subr.bf16.mxu0 0
          %782 = vmatpush1.bf16.msra.mxu0 %v779
          %783 = vmatprep.subr.bf16.mxu0 0
          %784 = vmatpush1.bf16.msra.mxu0 0
          %785 = vmatprep.subr.bf16.mxu0 0
          %786 = vmatpush1.bf16.msra.mxu0 0
          %787 = vmatprep.subr.bf16.mxu0 0
          %788 = vmatpush1.bf16.msra.mxu0 0
          %789 = vmatprep.subr.bf16.mxu0 0
          %790 = vmatpush1.bf16.msra.mxu0 0
          %791 = vmatprep.subr.bf16.mxu0 0
          %792 = vmatpush1.bf16.msra.mxu0 0
          %793 = vmatprep.subr.bf16.mxu0 0
          %794 = vmatpush1.bf16.msra.mxu0 0
          %795 = vmatprep.subr.bf16.mxu0 0
          %796 = vmatpush1.bf16.msra.mxu0 0
          %797 = vmatprep.subr.bf16.mxu0 0
          %798 = vmatpush1.bf16.msra.mxu0 0
          %799 = vmatprep.subr.bf16.mxu0 0
          %800 = vmatpush1.bf16.msra.mxu0 0
          %801 = vmatprep.subr.bf16.mxu0 0
          %802 = vmatpush1.bf16.msra.mxu0 0
          %803 = vmatprep.subr.bf16.mxu0 0
          %804 = vmatpush1.bf16.msra.mxu0 0
          %805 = vmatprep.subr.bf16.mxu0 0
          %806 = vmatpush1.bf16.msra.mxu0 0
          %807 = vmatprep.subr.bf16.mxu0 0
          %808 = vmatpush1.bf16.msra.mxu0 0
          %809 = vmatprep.subr.bf16.mxu0 0
          %810 = vmatpush1.bf16.msra.mxu0 0
          %811 = vmatprep.subr.bf16.mxu0 0
          %812 = vmatpush1.bf16.msra.mxu0 0
          %813 = vmatprep.mubr.bf16.mxu0 0
          %814 = vmatmul.mubr.bf16.gmra.mrb[0].mxu0 %v776
          %v815 = vpop.f32.mrb[0].mxu0
          %v816 = vadd.f32 0.0, %v815
          %v817 = vpop.f32.mrb[0].mxu0
          %v818 = vpop.f32.mrb[0].mxu0
          %v819 = vpop.f32.mrb[0].mxu0
          %820 = vdwg.mxu0
          %v822 = vsel %vm372, %v681, 0
          %v825 = vsel %vm685, %v371, 0
          %827 = vmatprep.subr.bf16.mxu0 0
          %828 = vmatpush1.bf16.msra.mxu0 %v825
          %829 = vmatprep.subr.bf16.mxu0 0
          %830 = vmatpush1.bf16.msra.mxu0 0
          %831 = vmatprep.subr.bf16.mxu0 0
          %832 = vmatpush1.bf16.msra.mxu0 0
          %833 = vmatprep.subr.bf16.mxu0 0
          %834 = vmatpush1.bf16.msra.mxu0 0
          %835 = vmatprep.subr.bf16.mxu0 0
          %836 = vmatpush1.bf16.msra.mxu0 0
          %837 = vmatprep.subr.bf16.mxu0 0
          %838 = vmatpush1.bf16.msra.mxu0 0
          %839 = vmatprep.subr.bf16.mxu0 0
          %840 = vmatpush1.bf16.msra.mxu0 0
          %841 = vmatprep.subr.bf16.mxu0 0
          %842 = vmatpush1.bf16.msra.mxu0 0
          %843 = vmatprep.subr.bf16.mxu0 0
          %844 = vmatpush1.bf16.msra.mxu0 0
          %845 = vmatprep.subr.bf16.mxu0 0
          %846 = vmatpush1.bf16.msra.mxu0 0
          %847 = vmatprep.subr.bf16.mxu0 0
          %848 = vmatpush1.bf16.msra.mxu0 0
          %849 = vmatprep.subr.bf16.mxu0 0
          %850 = vmatpush1.bf16.msra.mxu0 0
          %851 = vmatprep.subr.bf16.mxu0 0
          %852 = vmatpush1.bf16.msra.mxu0 0
          %853 = vmatprep.subr.bf16.mxu0 0
          %854 = vmatpush1.bf16.msra.mxu0 0
          %855 = vmatprep.subr.bf16.mxu0 0
          %856 = vmatpush1.bf16.msra.mxu0 0
          %857 = vmatprep.subr.bf16.mxu0 0
          %858 = vmatpush1.bf16.msra.mxu0 0
          %859 = vmatprep.mubr.bf16.mxu0 0
          %860 = vmatmul.mubr.bf16.gmra.mrb[0].mxu0 %v822
          %v861 = vpop.f32.mrb[0].mxu0
          %v862 = vadd.f32 0.0, %v861
          %v863 = vpop.f32.mrb[0].mxu0
          %v864 = vpop.f32.mrb[0].mxu0
          %v865 = vpop.f32.mrb[0].mxu0
          %866 = vdwg.mxu0
          %v867 = vadd.f32 %v674, %v724
          %v868 = vadd.f32 %v675, %v770
          %v869 = vadd.f32 %v676, %v816
          %v870 = vadd.f32 %v677, %v862
          %871 = vst.msk [vmem:[#allocation4] sm:$0xff] %vm372, %v867
          %872 = vst.msk [vmem:[#allocation4 + $0x8] sm:$0xff] %vm372, %v868
          %873 = vst.msk [vmem:[#allocation4 + $0x10] sm:$0xff] %vm372, %v869
          %874 = vst.msk [vmem:[#allocation4 + $0x18] sm:$0xff] %vm372, %v870
          %875 = vst.msk [vmem:[#allocation2] sm:$0xff] %vm645, %v573
          %876 = vst.msk [vmem:[#allocation2 + $0x8] sm:$0xff] %vm645, %v574
          %877 = vst.msk [vmem:[#allocation2 + $0x10] sm:$0xff] %vm645, %v575
          %878 = vst.msk [vmem:[#allocation2 + $0x18] sm:$0xff] %vm645, %v576
        $region52: #{transformer_lm_forward.12} parent=31 // pred_fallthru
          _
        %p879 = scmp.eq.s32.totalorder %s32, %s31
        // Predicated region
        $region53: #{transformer_lm_forward.12} parent=31 // pred_check
          %p880 = pneg %p879
        $region54: #{transformer_lm_forward.12} parent=31 // pred_check_branch
          %882 = sbr.rel (%p880) target = $region56
        $region55: #{transformer_lm_forward.12} parent=31 // pred_region
          %v883 = vld [vmem:[%s278] sm:$0xf]
          %v884 = vld [vmem:[%s278 + $0x4] sm:$0xf]
          %v885 = vld [vmem:[%s278 + $0x8] sm:$0xf]
          %v886 = vld [vmem:[%s278 + $0xc] sm:$0xf]
          %v887 = vld [vmem:[%s287] sm:$0xf]
          %v888 = vld [vmem:[%s287 + $0x4] sm:$0xf]
          %v889 = vld [vmem:[%s287 + $0x8] sm:$0xf]
          %v890 = vld [vmem:[%s287 + $0xc] sm:$0xf]
          %v891 = vld [vmem:[%s296] sm:$0xf]
          %v892 = vld [vmem:[%s296 + $0x4] sm:$0xf]
          %v893 = vld [vmem:[%s296 + $0x8] sm:$0xf]
          %v894 = vld [vmem:[%s296 + $0xc] sm:$0xf]
          %vm895 = vcmask 64512
          %v897 = vsel %vm895, %v883, 0
          %v900 = vsel %vm895, %v887, 0
          %902 = vmatprep.subr.bf16.mxu0 0
          %903 = vmatpush1.bf16.xpose.msra.mxu0 %v900
          %904 = vmatprep.subr.bf16.mxu0 0
          %905 = vmatpush1.bf16.xpose.msra.mxu0 0
          %906 = vmatprep.subr.bf16.mxu0 0
          %907 = vmatpush1.bf16.xpose.msra.mxu0 0
          %908 = vmatprep.subr.bf16.mxu0 0
          %909 = vmatpush1.bf16.xpose.msra.mxu0 0
          %910 = vmatprep.subr.bf16.mxu0 0
          %911 = vmatpush1.bf16.xpose.msra.mxu0 0
          %912 = vmatprep.subr.bf16.mxu0 0
          %913 = vmatpush1.bf16.xpose.msra.mxu0 0
          %914 = vmatprep.subr.bf16.mxu0 0
          %915 = vmatpush1.bf16.xpose.msra.mxu0 0
          %916 = vmatprep.subr.bf16.mxu0 0
          %917 = vmatpush1.bf16.xpose.msra.mxu0 0
          %918 = vmatprep.subr.bf16.mxu0 0
          %919 = vmatpush1.bf16.xpose.msra.mxu0 0
          %920 = vmatprep.subr.bf16.mxu0 0
          %921 = vmatpush1.bf16.xpose.msra.mxu0 0
          %922 = vmatprep.subr.bf16.mxu0 0
          %923 = vmatpush1.bf16.xpose.msra.mxu0 0
          %924 = vmatprep.subr.bf16.mxu0 0
          %925 = vmatpush1.bf16.xpose.msra.mxu0 0
          %926 = vmatprep.subr.bf16.mxu0 0
          %927 = vmatpush1.bf16.xpose.msra.mxu0 0
          %928 = vmatprep.subr.bf16.mxu0 0
          %929 = vmatpush1.bf16.xpose.msra.mxu0 0
          %930 = vmatprep.subr.bf16.mxu0 0
          %931 = vmatpush1.bf16.xpose.msra.mxu0 0
          %932 = vmatprep.subr.bf16.mxu0 0
          %933 = vmatpush1.bf16.xpose.msra.mxu0 0
          %934 = vmatprep.mubr.bf16.mxu0 0
          %935 = vmatmul.mubr.bf16.gmra.mrb[0].mxu0 %v897
          %v936 = vpop.f32.mrb[0].mxu0
          %v937 = vadd.f32 0.0, %v936
          %v938 = vpop.f32.mrb[0].mxu0
          %v939 = vpop.f32.mrb[0].mxu0
          %v940 = vpop.f32.mrb[0].mxu0
          %941 = vdwg.mxu0
          %v943 = vsel %vm895, %v884, 0
          %v946 = vsel %vm895, %v888, 0
          %948 = vmatprep.subr.bf16.mxu0 0
          %949 = vmatpush1.bf16.xpose.msra.mxu0 %v946
          %950 = vmatprep.subr.bf16.mxu0 0
          %951 = vmatpush1.bf16.xpose.msra.mxu0 0
          %952 = vmatprep.subr.bf16.mxu0 0
          %953 = vmatpush1.bf16.xpose.msra.mxu0 0
          %954 = vmatprep.subr.bf16.mxu0 0
          %955 = vmatpush1.bf16.xpose.msra.mxu0 0
          %956 = vmatprep.subr.bf16.mxu0 0
          %957 = vmatpush1.bf16.xpose.msra.mxu0 0
          %958 = vmatprep.subr.bf16.mxu0 0
          %959 = vmatpush1.bf16.xpose.msra.mxu0 0
          %960 = vmatprep.subr.bf16.mxu0 0
          %961 = vmatpush1.bf16.xpose.msra.mxu0 0
          %962 = vmatprep.subr.bf16.mxu0 0
          %963 = vmatpush1.bf16.xpose.msra.mxu0 0
          %964 = vmatprep.subr.bf16.mxu0 0
          %965 = vmatpush1.bf16.xpose.msra.mxu0 0
          %966 = vmatprep.subr.bf16.mxu0 0
          %967 = vmatpush1.bf16.xpose.msra.mxu0 0
          %968 = vmatprep.subr.bf16.mxu0 0
          %969 = vmatpush1.bf16.xpose.msra.mxu0 0
          %970 = vmatprep.subr.bf16.mxu0 0
          %971 = vmatpush1.bf16.xpose.msra.mxu0 0
          %972 = vmatprep.subr.bf16.mxu0 0
          %973 = vmatpush1.bf16.xpose.msra.mxu0 0
          %974 = vmatprep.subr.bf16.mxu0 0
          %975 = vmatpush1.bf16.xpose.msra.mxu0 0
          %976 = vmatprep.subr.bf16.mxu0 0
          %977 = vmatpush1.bf16.xpose.msra.mxu0 0
          %978 = vmatprep.subr.bf16.mxu0 0
          %979 = vmatpush1.bf16.xpose.msra.mxu0 0
          %980 = vmatprep.mubr.bf16.mxu0 0
          %981 = vmatmul.mubr.bf16.gmra.mrb[0].mxu0 %v943
          %v982 = vpop.f32.mrb[0].mxu0
          %v983 = vadd.f32 0.0, %v982
          %v984 = vpop.f32.mrb[0].mxu0
          %v985 = vpop.f32.mrb[0].mxu0
          %v986 = vpop.f32.mrb[0].mxu0
          %987 = vdwg.mxu0
          %v989 = vsel %vm895, %v885, 0
          %v992 = vsel %vm895, %v889, 0
          %994 = vmatprep.subr.bf16.mxu0 0
          %995 = vmatpush1.bf16.xpose.msra.mxu0 %v992
          %996 = vmatprep.subr.bf16.mxu0 0
          %997 = vmatpush1.bf16.xpose.msra.mxu0 0
          %998 = vmatprep.subr.bf16.mxu0 0
          %999 = vmatpush1.bf16.xpose.msra.mxu0 0
          %1000 = vmatprep.subr.bf16.mxu0 0
          %1001 = vmatpush1.bf16.xpose.msra.mxu0 0
          %1002 = vmatprep.subr.bf16.mxu0 0
          %1003 = vmatpush1.bf16.xpose.msra.mxu0 0
          %1004 = vmatprep.subr.bf16.mxu0 0
          %1005 = vmatpush1.bf16.xpose.msra.mxu0 0
          %1006 = vmatprep.subr.bf16.mxu0 0
          %1007 = vmatpush1.bf16.xpose.msra.mxu0 0
          %1008 = vmatprep.subr.bf16.mxu0 0
          %1009 = vmatpush1.bf16.xpose.msra.mxu0 0
          %1010 = vmatprep.subr.bf16.mxu0 0
          %1011 = vmatpush1.bf16.xpose.msra.mxu0 0
          %1012 = vmatprep.subr.bf16.mxu0 0
          %1013 = vmatpush1.bf16.xpose.msra.mxu0 0
          %1014 = vmatprep.subr.bf16.mxu0 0
          %1015 = vmatpush1.bf16.xpose.msra.mxu0 0
          %1016 = vmatprep.subr.bf16.mxu0 0
          %1017 = vmatpush1.bf16.xpose.msra.mxu0 0
          %1018 = vmatprep.subr.bf16.mxu0 0
          %1019 = vmatpush1.bf16.xpose.msra.mxu0 0
          %1020 = vmatprep.subr.bf16.mxu0 0
          %1021 = vmatpush1.bf16.xpose.msra.mxu0 0
          %1022 = vmatprep.subr.bf16.mxu0 0
          %1023 = vmatpush1.bf16.xpose.msra.mxu0 0
          %1024 = vmatprep.subr.bf16.mxu0 0
          %1025 = vmatpush1.bf16.xpose.msra.mxu0 0
          %1026 = vmatprep.mubr.bf16.mxu0 0
          %1027 = vmatmul.mubr.bf16.gmra.mrb[0].mxu0 %v989
          %v1028 = vpop.f32.mrb[0].mxu0
          %v1029 = vadd.f32 0.0, %v1028
          %v1030 = vpop.f32.mrb[0].mxu0
          %v1031 = vpop.f32.mrb[0].mxu0
          %v1032 = vpop.f32.mrb[0].mxu0
          %1033 = vdwg.mxu0
          %v1035 = vsel %vm895, %v886, 0
          %v1038 = vsel %vm895, %v890, 0
          %1040 = vmatprep.subr.bf16.mxu0 0
          %1041 = vmatpush1.bf16.xpose.msra.mxu0 %v1038
          %1042 = vmatprep.subr.bf16.mxu0 0
          %1043 = vmatpush1.bf16.xpose.msra.mxu0 0
          %1044 = vmatprep.subr.bf16.mxu0 0
          %1045 = vmatpush1.bf16.xpose.msra.mxu0 0
          %1046 = vmatprep.subr.bf16.mxu0 0
          %1047 = vmatpush1.bf16.xpose.msra.mxu0 0
          %1048 = vmatprep.subr.bf16.mxu0 0
          %1049 = vmatpush1.bf16.xpose.msra.mxu0 0
          %1050 = vmatprep.subr.bf16.mxu0 0
          %1051 = vmatpush1.bf16.xpose.msra.mxu0 0
          %1052 = vmatprep.subr.bf16.mxu0 0
          %1053 = vmatpush1.bf16.xpose.msra.mxu0 0
          %1054 = vmatprep.subr.bf16.mxu0 0
          %1055 = vmatpush1.bf16.xpose.msra.mxu0 0
          %1056 = vmatprep.subr.bf16.mxu0 0
          %1057 = vmatpush1.bf16.xpose.msra.mxu0 0
          %1058 = vmatprep.subr.bf16.mxu0 0
          %1059 = vmatpush1.bf16.xpose.msra.mxu0 0
          %1060 = vmatprep.subr.bf16.mxu0 0
          %1061 = vmatpush1.bf16.xpose.msra.mxu0 0
          %1062 = vmatprep.subr.bf16.mxu0 0
          %1063 = vmatpush1.bf16.xpose.msra.mxu0 0
          %1064 = vmatprep.subr.bf16.mxu0 0
          %1065 = vmatpush1.bf16.xpose.msra.mxu0 0
          %1066 = vmatprep.subr.bf16.mxu0 0
          %1067 = vmatpush1.bf16.xpose.msra.mxu0 0
          %1068 = vmatprep.subr.bf16.mxu0 0
          %1069 = vmatpush1.bf16.xpose.msra.mxu0 0
          %1070 = vmatprep.subr.bf16.mxu0 0
          %1071 = vmatpush1.bf16.xpose.msra.mxu0 0
          %1072 = vmatprep.mubr.bf16.mxu0 0
          %1073 = vmatmul.mubr.bf16.gmra.mrb[0].mxu0 %v1035
          %v1074 = vpop.f32.mrb[0].mxu0
          %v1075 = vadd.f32 0.0, %v1074
          %v1076 = vpop.f32.mrb[0].mxu0
          %v1077 = vpop.f32.mrb[0].mxu0
          %v1078 = vpop.f32.mrb[0].mxu0
          %1079 = vdwg.mxu0
          %s1080 = smul.u32 %s31, 8
          %v1081 = vlaneseq
          %v1082 = vshrl.u32 %v1081, 7
          %v1083 = vstv %s1080
          %v1084 = vadd.s32 %v1083, %v1082
          %s1085 = smul.u32 %s32, 8
          %v1086 = vlaneseq
          %v1087 = vand.u32 %v1086, 127
          %v1088 = vstv %s1085
          %v1089 = vadd.s32 %v1088, %v1087
          %vm1090 = vcmp.gt.s32.totalorder %v1089, %v1084
          %v1091 = vsel %vm1090, -1e+30, %v937
          %v1092 = vsel %vm1090, -1e+30, %v983
          %v1093 = vsel %vm1090, -1e+30, %v1029
          %v1094 = vsel %vm1090, -1e+30, %v1075
          %v1095 = vld [vmem:[#allocation2] sm:$0xff]
          %v1096 = vld [vmem:[#allocation2 + $0x8] sm:$0xff]
          %v1097 = vld [vmem:[#allocation2 + $0x10] sm:$0xff]
          %v1098 = vld [vmem:[#allocation2 + $0x18] sm:$0xff]
          %v1099 = vsel %vm895, %v1091, -inf
          %1100 = vmax.xlane.f32.xlu0 %v1099
          %v1101 = vpop.xlane.xlu0 %1100
          %v1102 = vsel %vm895, %v1092, -inf
          %1103 = vmax.xlane.f32.xlu0 %v1102
          %v1104 = vpop.xlane.xlu0 %1103
          %v1105 = vsel %vm895, %v1093, -inf
          %1106 = vmax.xlane.f32.xlu0 %v1105
          %v1107 = vpop.xlane.xlu0 %1106
          %v1108 = vsel %vm895, %v1094, -inf
          %1109 = vmax.xlane.f32.xlu0 %v1108
          %v1110 = vpop.xlane.xlu0 %1109
          %v1111 = vmax.f32 %v1095, %v1101
          %v1112 = vmax.f32 %v1096, %v1104
          %v1113 = vmax.f32 %v1097, %v1107
          %v1114 = vmax.f32 %v1098, %v1110
          %v1115 = vsub.f32 %v1095, %v1111
          %v1116 = vsub.f32 %v1096, %v1112
          %v1117 = vsub.f32 %v1097, %v1113
          %v1118 = vsub.f32 %v1098, %v1114
          %v1119 = vmul.f32 %v1115, 1.442695
          %v1120 = vpow.pop %v1119
          %v1121 = vmul.f32 %v1116, 1.442695
          %v1122 = vpow.pop %v1121
          %v1123 = vmul.f32 %v1117, 1.442695
          %v1124 = vpow.pop %v1123
          %v1125 = vmul.f32 %v1118, 1.442695
          %v1126 = vpow.pop %v1125
          %1128 = vset.pattern.permute.xlu0 0
          %1129 = vperm.xlu0 %1128, %v1111
          %v1130 = vpop.permute.xlu0 %1129
          %1133 = vset.pattern.permute.xlu0 0
          %1134 = vperm.xlu0 %1133, %v1112
          %v1135 = vpop.permute.xlu0 %1134
          %1138 = vset.pattern.permute.xlu0 0
          %1139 = vperm.xlu0 %1138, %v1113
          %v1140 = vpop.permute.xlu0 %1139
          %1143 = vset.pattern.permute.xlu0 0
          %1144 = vperm.xlu0 %1143, %v1114
          %v1145 = vpop.permute.xlu0 %1144
          %v1147 = vsub.f32 %v1091, %v1130
          %v1148 = vsub.f32 %v1092, %v1135
          %v1149 = vsub.f32 %v1093, %v1140
          %v1150 = vsub.f32 %v1094, %v1145
          %v1151 = vmul.f32 %v1147, 1.442695
          %v1152 = vpow.pop %v1151
          %v1153 = vmul.f32 %v1148, 1.442695
          %v1154 = vpow.pop %v1153
          %v1155 = vmul.f32 %v1149, 1.442695
          %v1156 = vpow.pop %v1155
          %v1157 = vmul.f32 %v1150, 1.442695
          %v1158 = vpow.pop %v1157
          %v1159 = vld [vmem:[#allocation3] sm:$0xff]
          %v1160 = vld [vmem:[#allocation3 + $0x8] sm:$0xff]
          %v1161 = vld [vmem:[#allocation3 + $0x10] sm:$0xff]
          %v1162 = vld [vmem:[#allocation3 + $0x18] sm:$0xff]
          %v1163 = vmul.f32 %v1120, %v1159
          %v1164 = vmul.f32 %v1122, %v1160
          %v1165 = vmul.f32 %v1124, %v1161
          %v1166 = vmul.f32 %v1126, %v1162
          %v1167 = vsel %vm895, %v1152, 0.0
          %1168 = vadd.xlane.f32.xlu0 %v1167
          %v1169 = vpop.xlane.xlu0 %1168
          %v1170 = vsel %vm895, %v1154, 0.0
          %1171 = vadd.xlane.f32.xlu0 %v1170
          %v1172 = vpop.xlane.xlu0 %1171
          %v1173 = vsel %vm895, %v1156, 0.0
          %1174 = vadd.xlane.f32.xlu0 %v1173
          %v1175 = vpop.xlane.xlu0 %1174
          %v1176 = vsel %vm895, %v1158, 0.0
          %1177 = vadd.xlane.f32.xlu0 %v1176
          %v1178 = vpop.xlane.xlu0 %1177
          %v1179 = vadd.f32 %v1163, %v1169
          %v1180 = vadd.f32 %v1164, %v1172
          %v1181 = vadd.f32 %v1165, %v1175
          %v1182 = vadd.f32 %v1166, %v1178
          %vm1183 = vcmask 7168
          %1184 = vst.msk [vmem:[#allocation3] sm:$0xff] %vm1183, %v1179
          %1185 = vst.msk [vmem:[#allocation3 + $0x8] sm:$0xff] %vm1183, %v1180
          %1186 = vst.msk [vmem:[#allocation3 + $0x10] sm:$0xff] %vm1183, %v1181
          %1187 = vst.msk [vmem:[#allocation3 + $0x18] sm:$0xff] %vm1183, %v1182
          %v1188 = vld [vmem:[#allocation4] sm:$0xff]
          %v1189 = vld [vmem:[#allocation4 + $0x8] sm:$0xff]
          %v1190 = vld [vmem:[#allocation4 + $0x10] sm:$0xff]
          %v1191 = vld [vmem:[#allocation4 + $0x18] sm:$0xff]
          %1193 = vset.pattern.permute.xlu0 0
          %1194 = vperm.xlu0 %1193, %v1120
          %v1195 = vpop.permute.xlu0 %1194
          %1198 = vset.pattern.permute.xlu0 0
          %1199 = vperm.xlu0 %1198, %v1122
          %v1200 = vpop.permute.xlu0 %1199
          %1203 = vset.pattern.permute.xlu0 0
          %1204 = vperm.xlu0 %1203, %v1124
          %v1205 = vpop.permute.xlu0 %1204
          %1208 = vset.pattern.permute.xlu0 0
          %1209 = vperm.xlu0 %1208, %v1126
          %v1210 = vpop.permute.xlu0 %1209
          %v1212 = vmul.f32 %v1195, %v1188
          %v1213 = vmul.f32 %v1200, %v1189
          %v1214 = vmul.f32 %v1205, %v1190
          %v1215 = vmul.f32 %v1210, %v1191
          %v1216 = vpack.c.bf16 %v1152, %v1152
          %v1217 = vpack.c.bf16 %v1154, %v1154
          %v1218 = vpack.c.bf16 %v1156, %v1156
          %v1219 = vpack.c.bf16 %v1158, %v1158
          %v1221 = vsel %vm895, %v1216, 0
          %vm1223 = vcmask 1043456
          %v1225 = vsel %vm1223, %v891, 0
          %1227 = vmatprep.subr.bf16.mxu0 0
          %1228 = vmatpush1.bf16.msra.mxu0 %v1225
          %1229 = vmatprep.subr.bf16.mxu0 0
          %1230 = vmatpush1.bf16.msra.mxu0 0
          %1231 = vmatprep.subr.bf16.mxu0 0
          %1232 = vmatpush1.bf16.msra.mxu0 0
          %1233 = vmatprep.subr.bf16.mxu0 0
          %1234 = vmatpush1.bf16.msra.mxu0 0
          %1235 = vmatprep.subr.bf16.mxu0 0
          %1236 = vmatpush1.bf16.msra.mxu0 0
          %1237 = vmatprep.subr.bf16.mxu0 0
          %1238 = vmatpush1.bf16.msra.mxu0 0
          %1239 = vmatprep.subr.bf16.mxu0 0
          %1240 = vmatpush1.bf16.msra.mxu0 0
          %1241 = vmatprep.subr.bf16.mxu0 0
          %1242 = vmatpush1.bf16.msra.mxu0 0
          %1243 = vmatprep.subr.bf16.mxu0 0
          %1244 = vmatpush1.bf16.msra.mxu0 0
          %1245 = vmatprep.subr.bf16.mxu0 0
          %1246 = vmatpush1.bf16.msra.mxu0 0
          %1247 = vmatprep.subr.bf16.mxu0 0
          %1248 = vmatpush1.bf16.msra.mxu0 0
          %1249 = vmatprep.subr.bf16.mxu0 0
          %1250 = vmatpush1.bf16.msra.mxu0 0
          %1251 = vmatprep.subr.bf16.mxu0 0
          %1252 = vmatpush1.bf16.msra.mxu0 0
          %1253 = vmatprep.subr.bf16.mxu0 0
          %1254 = vmatpush1.bf16.msra.mxu0 0
          %1255 = vmatprep.subr.bf16.mxu0 0
          %1256 = vmatpush1.bf16.msra.mxu0 0
          %1257 = vmatprep.subr.bf16.mxu0 0
          %1258 = vmatpush1.bf16.msra.mxu0 0
          %1259 = vmatprep.mubr.bf16.mxu0 0
          %1260 = vmatmul.mubr.bf16.gmra.mrb[0].mxu0 %v1221
          %v1261 = vpop.f32.mrb[0].mxu0
          %v1262 = vadd.f32 0.0, %v1261
          %v1263 = vpop.f32.mrb[0].mxu0
          %v1264 = vpop.f32.mrb[0].mxu0
          %v1265 = vpop.f32.mrb[0].mxu0
          %1266 = vdwg.mxu0
          %v1268 = vsel %vm895, %v1217, 0
          %v1271 = vsel %vm1223, %v892, 0
          %1273 = vmatprep.subr.bf16.mxu0 0
          %1274 = vmatpush1.bf16.msra.mxu0 %v1271
          %1275 = vmatprep.subr.bf16.mxu0 0
          %1276 = vmatpush1.bf16.msra.mxu0 0
          %1277 = vmatprep.subr.bf16.mxu0 0
          %1278 = vmatpush1.bf16.msra.mxu0 0
          %1279 = vmatprep.subr.bf16.mxu0 0
          %1280 = vmatpush1.bf16.msra.mxu0 0
          %1281 = vmatprep.subr.bf16.mxu0 0
          %1282 = vmatpush1.bf16.msra.mxu0 0
          %1283 = vmatprep.subr.bf16.mxu0 0
          %1284 = vmatpush1.bf16.msra.mxu0 0
          %1285 = vmatprep.subr.bf16.mxu0 0
          %1286 = vmatpush1.bf16.msra.mxu0 0
          %1287 = vmatprep.subr.bf16.mxu0 0
          %1288 = vmatpush1.bf16.msra.mxu0 0
          %1289 = vmatprep.subr.bf16.mxu0 0
          %1290 = vmatpush1.bf16.msra.mxu0 0
          %1291 = vmatprep.subr.bf16.mxu0 0
          %1292 = vmatpush1.bf16.msra.mxu0 0
          %1293 = vmatprep.subr.bf16.mxu0 0
          %1294 = vmatpush1.bf16.msra.mxu0 0
          %1295 = vmatprep.subr.bf16.mxu0 0
          %1296 = vmatpush1.bf16.msra.mxu0 0
          %1297 = vmatprep.subr.bf16.mxu0 0
          %1298 = vmatpush1.bf16.msra.mxu0 0
          %1299 = vmatprep.subr.bf16.mxu0 0
          %1300 = vmatpush1.bf16.msra.mxu0 0
          %1301 = vmatprep.subr.bf16.mxu0 0
          %1302 = vmatpush1.bf16.msra.mxu0 0
          %1303 = vmatprep.subr.bf16.mxu0 0
          %1304 = vmatpush1.bf16.msra.mxu0 0
          %1305 = vmatprep.mubr.bf16.mxu0 0
          %1306 = vmatmul.mubr.bf16.gmra.mrb[0].mxu0 %v1268
          %v1307 = vpop.f32.mrb[0].mxu0
          %v1308 = vadd.f32 0.0, %v1307
          %v1309 = vpop.f32.mrb[0].mxu0
          %v1310 = vpop.f32.mrb[0].mxu0
          %v1311 = vpop.f32.mrb[0].mxu0
          %1312 = vdwg.mxu0
          %v1314 = vsel %vm895, %v1218, 0
          %v1317 = vsel %vm1223, %v893, 0
          %1319 = vmatprep.subr.bf16.mxu0 0
          %1320 = vmatpush1.bf16.msra.mxu0 %v1317
          %1321 = vmatprep.subr.bf16.mxu0 0
          %1322 = vmatpush1.bf16.msra.mxu0 0
          %1323 = vmatprep.subr.bf16.mxu0 0
          %1324 = vmatpush1.bf16.msra.mxu0 0
          %1325 = vmatprep.subr.bf16.mxu0 0
          %1326 = vmatpush1.bf16.msra.mxu0 0
          %1327 = vmatprep.subr.bf16.mxu0 0
          %1328 = vmatpush1.bf16.msra.mxu0 0
          %1329 = vmatprep.subr.bf16.mxu0 0
          %1330 = vmatpush1.bf16.msra.mxu0 0
          %1331 = vmatprep.subr.bf16.mxu0 0
          %1332 = vmatpush1.bf16.msra.mxu0 0
          %1333 = vmatprep.subr.bf16.mxu0 0
          %1334 = vmatpush1.bf16.msra.mxu0 0
          %1335 = vmatprep.subr.bf16.mxu0 0
          %1336 = vmatpush1.bf16.msra.mxu0 0
          %1337 = vmatprep.subr.bf16.mxu0 0
          %1338 = vmatpush1.bf16.msra.mxu0 0
          %1339 = vmatprep.subr.bf16.mxu0 0
          %1340 = vmatpush1.bf16.msra.mxu0 0
          %1341 = vmatprep.subr.bf16.mxu0 0
          %1342 = vmatpush1.bf16.msra.mxu0 0
          %1343 = vmatprep.subr.bf16.mxu0 0
          %1344 = vmatpush1.bf16.msra.mxu0 0
          %1345 = vmatprep.subr.bf16.mxu0 0
          %1346 = vmatpush1.bf16.msra.mxu0 0
          %1347 = vmatprep.subr.bf16.mxu0 0
          %1348 = vmatpush1.bf16.msra.mxu0 0
          %1349 = vmatprep.subr.bf16.mxu0 0
          %1350 = vmatpush1.bf16.msra.mxu0 0
          %1351 = vmatprep.mubr.bf16.mxu0 0
          %1352 = vmatmul.mubr.bf16.gmra.mrb[0].mxu0 %v1314
          %v1353 = vpop.f32.mrb[0].mxu0
          %v1354 = vadd.f32 0.0, %v1353
          %v1355 = vpop.f32.mrb[0].mxu0
          %v1356 = vpop.f32.mrb[0].mxu0
          %v1357 = vpop.f32.mrb[0].mxu0
          %1358 = vdwg.mxu0
          %v1360 = vsel %vm895, %v1219, 0
          %v1363 = vsel %vm1223, %v894, 0
          %1365 = vmatprep.subr.bf16.mxu0 0
          %1366 = vmatpush1.bf16.msra.mxu0 %v1363
          %1367 = vmatprep.subr.bf16.mxu0 0
          %1368 = vmatpush1.bf16.msra.mxu0 0
          %1369 = vmatprep.subr.bf16.mxu0 0
          %1370 = vmatpush1.bf16.msra.mxu0 0
          %1371 = vmatprep.subr.bf16.mxu0 0
          %1372 = vmatpush1.bf16.msra.mxu0 0
          %1373 = vmatprep.subr.bf16.mxu0 0
          %1374 = vmatpush1.bf16.msra.mxu0 0
          %1375 = vmatprep.subr.bf16.mxu0 0
          %1376 = vmatpush1.bf16.msra.mxu0 0
          %1377 = vmatprep.subr.bf16.mxu0 0
          %1378 = vmatpush1.bf16.msra.mxu0 0
          %1379 = vmatprep.subr.bf16.mxu0 0
          %1380 = vmatpush1.bf16.msra.mxu0 0
          %1381 = vmatprep.subr.bf16.mxu0 0
          %1382 = vmatpush1.bf16.msra.mxu0 0
          %1383 = vmatprep.subr.bf16.mxu0 0
          %1384 = vmatpush1.bf16.msra.mxu0 0
          %1385 = vmatprep.subr.bf16.mxu0 0
          %1386 = vmatpush1.bf16.msra.mxu0 0
          %1387 = vmatprep.subr.bf16.mxu0 0
          %1388 = vmatpush1.bf16.msra.mxu0 0
          %1389 = vmatprep.subr.bf16.mxu0 0
          %1390 = vmatpush1.bf16.msra.mxu0 0
          %1391 = vmatprep.subr.bf16.mxu0 0
          %1392 = vmatpush1.bf16.msra.mxu0 0
          %1393 = vmatprep.subr.bf16.mxu0 0
          %1394 = vmatpush1.bf16.msra.mxu0 0
          %1395 = vmatprep.subr.bf16.mxu0 0
          %1396 = vmatpush1.bf16.msra.mxu0 0
          %1397 = vmatprep.mubr.bf16.mxu0 0
          %1398 = vmatmul.mubr.bf16.gmra.mrb[0].mxu0 %v1360
          %v1399 = vpop.f32.mrb[0].mxu0
          %v1400 = vadd.f32 0.0, %v1399
          %v1401 = vpop.f32.mrb[0].mxu0
          %v1402 = vpop.f32.mrb[0].mxu0
          %v1403 = vpop.f32.mrb[0].mxu0
          %1404 = vdwg.mxu0
          %v1405 = vadd.f32 %v1212, %v1262
          %v1406 = vadd.f32 %v1213, %v1308
          %v1407 = vadd.f32 %v1214, %v1354
          %v1408 = vadd.f32 %v1215, %v1400
          %1409 = vst.msk [vmem:[#allocation4] sm:$0xff] %vm895, %v1405
          %1410 = vst.msk [vmem:[#allocation4 + $0x8] sm:$0xff] %vm895, %v1406
          %1411 = vst.msk [vmem:[#allocation4 + $0x10] sm:$0xff] %vm895, %v1407
          %1412 = vst.msk [vmem:[#allocation4 + $0x18] sm:$0xff] %vm895, %v1408
          %1413 = vst.msk [vmem:[#allocation2] sm:$0xff] %vm1183, %v1111
          %1414 = vst.msk [vmem:[#allocation2 + $0x8] sm:$0xff] %vm1183, %v1112
          %1415 = vst.msk [vmem:[#allocation2 + $0x10] sm:$0xff] %vm1183, %v1113
          %1416 = vst.msk [vmem:[#allocation2 + $0x18] sm:$0xff] %vm1183, %v1114
        $region56: #{transformer_lm_forward.12} parent=31 // pred_fallthru
          _
        // Predicated region
        $region57: #{transformer_lm_forward.12} parent=31 // pred_check
          %p1417 = pneg %p338
        $region58: #{transformer_lm_forward.12} parent=31 // pred_check_branch
          %1419 = sbr.rel (%p1417) target = $region60
        $region59: #{transformer_lm_forward.12} parent=31 // pred_region
          %v1420 = vld [vmem:[#allocation4] sm:$0xff]
          %v1421 = vld [vmem:[#allocation4 + $0x8] sm:$0xff]
          %v1422 = vld [vmem:[#allocation4 + $0x10] sm:$0xff]
          %v1423 = vld [vmem:[#allocation4 + $0x18] sm:$0xff]
          %v1424 = vld [vmem:[#allocation3] sm:$0xff]
          %v1425 = vld [vmem:[#allocation3 + $0x8] sm:$0xff]
          %v1426 = vld [vmem:[#allocation3 + $0x10] sm:$0xff]
          %v1427 = vld [vmem:[#allocation3 + $0x18] sm:$0xff]
          %v1428 = vrcp.pop %v1424
          %v1429 = vrcp.pop %v1425
          %v1430 = vrcp.pop %v1426
          %v1431 = vrcp.pop %v1427
          %1433 = vset.pattern.permute.xlu0 0
          %1434 = vperm.xlu0 %1433, %v1428
          %v1435 = vpop.permute.xlu0 %1434
          %1438 = vset.pattern.permute.xlu0 0
          %1439 = vperm.xlu0 %1438, %v1429
          %v1440 = vpop.permute.xlu0 %1439
          %1443 = vset.pattern.permute.xlu0 0
          %1444 = vperm.xlu0 %1443, %v1430
          %v1445 = vpop.permute.xlu0 %1444
          %1448 = vset.pattern.permute.xlu0 0
          %1449 = vperm.xlu0 %1448, %v1431
          %v1450 = vpop.permute.xlu0 %1449
          %v1452 = vmul.f32 %v1420, %v1435
          %v1453 = vmul.f32 %v1421, %v1440
          %v1454 = vmul.f32 %v1422, %v1445
          %v1455 = vmul.f32 %v1423, %v1450
          %v1456 = vpack.c.bf16 %v1452, %v1452
          %v1457 = vpack.c.bf16 %v1453, %v1453
          %v1458 = vpack.c.bf16 %v1454, %v1454
          %v1459 = vpack.c.bf16 %v1455, %v1455
          %vm1460 = vcmask 60416
          %1461 = vst.msk [vmem:[%s328] sm:$0xf] %vm1460, %v1456
          %1462 = vst.msk [vmem:[%s328 + $0x4] sm:$0xf] %vm1460, %v1457
          %1463 = vst.msk [vmem:[%s328 + $0x8] sm:$0xf] %vm1460, %v1458
          %1464 = vst.msk [vmem:[%s328 + $0xc] sm:$0xf] %vm1460, %v1459
        $region60: #{transformer_lm_forward.12} parent=31 // pred_fallthru
          _
        %s1465 = sand.u32 %s159, 1
        %s1466 = scalar_lea.sflag [#allocation7], %s1465
        %s1467 = sand.u32 %s159, 1
        %s1468 = smul.addr %s1467, 16
        %s1469 = scalar_lea.vmem [#allocation11], %s1468
        // Predicated region
        $region61: #{transformer_lm_forward.12} parent=31 // pred_check
          %p1470 = pneg %p169
        $region62: #{transformer_lm_forward.12} parent=31 // pred_check_branch
          %1472 = sbr.rel (%p1470) target = $region64
        $region63: #{transformer_lm_forward.12} parent=31 // pred_region
          %s1473 = smul.u32 4, %s30
          %s1475 = ssub.s32 256, 256
          %1476 = vsyncadd %s1466, %s1475
          %s1477 = sadd.s32 %s31, %s1473
          %s1478 = smul.addr %s29, 4
          %s1479 = sadd.s32 %s1477, %s1478
          %s1480 = smul.addr %s1479, 64
          %s1481 = scalar_lea.hbm %s3, %s1480
          %s1482 = sshll.u32 %s1469, 4
          %s1483 = int_to_ptr.vmem [resolvable:$true] %s1482
          %1488 = dma.vmem_to_hbm [thread:$0]  %s1483, 256, %s1481, %s1466, 64, 64, 4
        $region64: #{transformer_lm_forward.12} parent=31 // pred_fallthru
          _
      $region32: #{transformer_lm_forward.12} parent=5 // pred_fallthru
        _
      %p1489 = scmp.le.s32.totalorder 2, %s18
      // Predicated region
      $region65: #{transformer_lm_forward.12} parent=5 // pred_check
        %p1490 = pneg %p1489
      $region66: #{transformer_lm_forward.12} parent=5 // pred_check_branch
        %1492 = sbr.rel (%p1490) target = $region68
      $region67: #{transformer_lm_forward.12} parent=5 // pred_region
        %s1493 = ssub.s32 %s18, 2
        // Predicated region
        $region69: #{transformer_lm_forward.12} parent=67 // pred_check
          %p1494 = pneg %p175
        $region70: #{transformer_lm_forward.12} parent=67 // pred_check_branch
          %1496 = sbr.rel (%p1494) target = $region72
        $region71: #{transformer_lm_forward.12} parent=67 // pred_region
          %s1497 = sand.u32 %s160, 1
          %s1498 = scalar_lea.sflag [#allocation7], %s1497
          %s1499 = sand.u32 %s160, 1
          %s1500 = smul.addr %s1499, 16
          %s1501 = scalar_lea.vmem [#allocation11], %s1500
          %1502 = dma.done %s1498, 256
        $region72: #{transformer_lm_forward.12} parent=67 // pred_fallthru
          _
      $region68: #{transformer_lm_forward.12} parent=5 // pred_fallthru
        _
    $region6: #{transformer_lm_forward.12} parent=1 // loop_footer
      %s22 = sadd.s32 1, %s18
    $region7: #{transformer_lm_forward.12} parent=1 // loop_footer_branch
      %17 = sbr.rel target = $region3
    $region8: #{transformer_lm_forward.12} parent=1 // loop_exit
      _
    %1503 = vsyncpa [#allocation6], 1
    %s1504 = scalar_lea.sflag [#allocation6], 1
    %1505 = vsyncpa %s1504, 1
    %1506 = vsyncpa [#allocation9], 1
    %s1507 = scalar_lea.sflag [#allocation9], 1
    %1508 = vsyncpa %s1507, 1
    %1509 = vsyncpa [#allocation7], 1
    %s1510 = scalar_lea.sflag [#allocation7], 1
    %1511 = vsyncpa %s1510, 1

// kernel: transformer_lm_forward.19
$region0: #{transformer_lm_forward.19}
  #allocation0 [shape = 'u32[]', space=smem, size = 0x4, offset = 0x4, fixed_abs, tag = 'smem constant byte address 0x4 - core index']
  #allocation1 [shape = 'u32[144,128]{1,0:T(1,128)}', space=vmem, size = 0x12000, scoped, tag = 'internal scratch']
  %s0 = inlined_call_operand.hbm [shape: bf16[2,8,32], index: 0, kind: input, shape index: {}]
  %s1 = inlined_call_operand.hbm [shape: bf16[32,64], index: 1, kind: input, shape index: {}]
  %s2 = inlined_call_operand.hbm [shape: f32[2,8,64], index: 2, kind: output, shape index: {}]
  %s3 = sld [smem:[#allocation0]]
  $region49: #{transformer_lm_forward.19} parent=0
    _
  %s5 = ssub.s32 1, %s3
  %s6 = scalar_select 0, %s5, %s3
  $region1: #{transformer_lm_forward.19} parent=0
    #allocation2 [shape = 'u8[4096]{0}', space=vmem, size = 0x1000, scoped, tag = 'input window, operand 0']
    #allocation3 [shape = 's32[2]{0}', space=sflag, size = 0x8, scoped, tag = 'scoped memory for transformer_lm_forward.19']
    #allocation4 [shape = 's32[2]{0}', space=sflag, size = 0x8, scoped, tag = 'scoped memory for transformer_lm_forward.19']
    #allocation5 [shape = 'u8[8192]{0}', space=vmem, size = 0x2000, scoped, tag = 'input window, operand 1, single buffered']
    #allocation6 [shape = 's32[1]{0}', space=sflag, size = 0x4, scoped, tag = 'scoped memory for transformer_lm_forward.19']
    #allocation7 [shape = 'u8[8192]{0}', space=vmem, size = 0x2000, scoped, tag = 'output window, operand 0']
    %7 = vsyncpa [#allocation3], 0
    %s8 = scalar_lea.sflag [#allocation3], 1
    %9 = vsyncpa %s8, 0
    %10 = vsyncpa [#allocation6], 0
    %11 = vsyncpa [#allocation4], 0
    %s12 = scalar_lea.sflag [#allocation4], 1
    %13 = vsyncpa %s12, 0
    loop: start=0, step=1, limit=4
    $region2: #{transformer_lm_forward.19} parent=1 // loop_pre_header
      _
    $region3: #{transformer_lm_forward.19} parent=1 // loop_header
      %s15 = sphi 0, %s19
      %p16 = scmp.ge.s32.totalorder %s15, 4
      %s22 = sphi 0, %s41
      %s23 = sphi 0, %s37
      %s24 = sphi 0, %s33
      %s25 = sphi 0, %s22
      %s26 = sphi 0, %s23
      %s27 = sphi 0, %s24
      %s28 = sphi 0, %s25
      %s29 = sphi 0, %s26
      %s30 = sphi 0, %s27
      %s46 = sphi 0, %s48
      %s49 = sphi 0, %s46
      %s50 = sphi 0, %s49
      %s66 = sphi 0, %s50
      %s72 = sphi 0, %s74
      %s75 = sphi 0, %s72
      %s76 = sphi 0, %s75
      %s92 = sphi 0, %s76
      %s102 = sphi 0, %s104
      %s105 = sphi 0, %s102
      %s106 = sphi 0, %s105
      %s122 = sphi 0, %s106
    $region4: #{transformer_lm_forward.19} parent=1 // loop_header_branch
      %18 = sbr.rel (%p16) target = $region8
    $region5: #{transformer_lm_forward.19} parent=1 // loop_body
      %s20 = ssub.s32 %s15, 1
      %s21 = ssub.s32 %s15, 2
      %s31 = sadd.s32 1, %s24
      %p32 = scmp.ge.s32.totalorder %s31, 1
      %s33 = scalar_select %p32, 0, %s31
      %s34 = sadd.s32 1, %s23
      %s35 = scalar_select %p32, %s34, %s23
      %p36 = scmp.ge.s32.totalorder %s35, 2
      %s37 = scalar_select %p36, 0, %s35
      %s38 = sadd.s32 1, %s22
      %s39 = scalar_select %p36, %s38, %s22
      %p40 = scmp.ge.s32.totalorder %s39, 1
      %s41 = scalar_select %p40, 0, %s39
      %s42 = ssub.s32 %s23, %s37
      %s43 = ssub.s32 %s24, %s33
      %s44 = sor.u32 %s42, %s43
      %p45 = scmp.eq.s32.totalorder %s44, 0
      %s47 = sadd.s32 %s46, 1
      %s48 = scalar_select %p45, %s46, %s47
      %p51 = pneg %p45
      %p52 = scmp.eq.s32.totalorder %s15, 1
      %p53 = por %p51, %p52
      %p54 = scmp.ne.s32.totalorder %s46, %s49
      %p55 = scmp.eq.s32.totalorder %s15, 0
      %p56 = por %p54, %p55
      %p57 = scmp.ne.s32.totalorder %s46, %s49
      %p58 = scmp.eq.s32.totalorder %s20, 1
      %p59 = por %p57, %p58
      %p60 = scmp.ne.s32.totalorder %s49, %s50
      %p61 = scmp.eq.s32.totalorder %s20, 0
      %p62 = por %p60, %p61
      %p63 = scmp.ne.s32.totalorder %s49, %s50
      %p64 = scmp.eq.s32.totalorder %s21, 1
      %p65 = por %p63, %p64
      %p67 = scmp.ne.s32.totalorder %s50, %s66
      %p68 = scmp.eq.s32.totalorder %s21, 0
      %p69 = por %p67, %p68
      %s70 = ssub.s32 %s22, %s41
      %p71 = scmp.eq.s32.totalorder %s70, 0
      %s73 = sadd.s32 %s72, 1
      %s74 = scalar_select %p71, %s72, %s73
      %p77 = pneg %p71
      %p78 = scmp.eq.s32.totalorder %s15, 1
      %p79 = por %p77, %p78
      %p80 = scmp.ne.s32.totalorder %s72, %s75
      %p81 = scmp.eq.s32.totalorder %s15, 0
      %p82 = por %p80, %p81
      %p83 = scmp.ne.s32.totalorder %s72, %s75
      %p84 = scmp.eq.s32.totalorder %s20, 1
      %p85 = por %p83, %p84
      %p86 = scmp.ne.s32.totalorder %s75, %s76
      %p87 = scmp.eq.s32.totalorder %s20, 0
      %p88 = por %p86, %p87
      %p89 = scmp.ne.s32.totalorder %s75, %s76
      %p90 = scmp.eq.s32.totalorder %s21, 1
      %p91 = por %p89, %p90
      %p93 = scmp.ne.s32.totalorder %s76, %s92
      %p94 = scmp.eq.s32.totalorder %s21, 0
      %p95 = por %p93, %p94
      %s96 = ssub.s32 %s23, %s37
      %s97 = ssub.s32 %s24, %s33
      %s98 = sor.u32 %s96, %s97
      %s99 = ssub.s32 %s22, %s41
      %s100 = sor.u32 %s98, %s99
      %p101 = scmp.eq.s32.totalorder %s100, 0
      %s103 = sadd.s32 %s102, 1
      %s104 = scalar_select %p101, %s102, %s103
      %p107 = pneg %p101
      %p108 = scmp.eq.s32.totalorder %s15, 1
      %p109 = por %p107, %p108
      %p110 = scmp.ne.s32.totalorder %s102, %s105
      %p111 = scmp.eq.s32.totalorder %s15, 0
      %p112 = por %p110, %p111
      %p113 = scmp.ne.s32.totalorder %s102, %s105
      %p114 = scmp.eq.s32.totalorder %s20, 1
      %p115 = por %p113, %p114
      %p116 = scmp.ne.s32.totalorder %s105, %s106
      %p117 = scmp.eq.s32.totalorder %s20, 0
      %p118 = por %p116, %p117
      %p119 = scmp.ne.s32.totalorder %s105, %s106
      %p120 = scmp.eq.s32.totalorder %s21, 1
      %p121 = por %p119, %p120
      %p123 = scmp.ne.s32.totalorder %s106, %s122
      %p124 = scmp.eq.s32.totalorder %s21, 0
      %p125 = por %p123, %p124
      %p126 = scmp.le.s32.totalorder 1, %s15
      %p127 = scmp.lt.s32.totalorder %s15, 3
      %p128 = pnand %p126, %p127
      %p129 = pneg %p128
      // Predicated region
      $region9: #{transformer_lm_forward.19} parent=5 // pred_check
        _
      $region10: #{transformer_lm_forward.19} parent=5 // pred_check_branch
        %131 = sbr.rel (%p128) target = $region12
      $region11: #{transformer_lm_forward.19} parent=5 // pred_region
        %s132 = ssub.s32 %s15, 1
        // Predicated region
        $region13: #{transformer_lm_forward.19} parent=11 // pred_check
          %p133 = pneg %p88
        $region14: #{transformer_lm_forward.19} parent=11 // pred_check_branch
          %135 = sbr.rel (%p133) target = $region16
        $region15: #{transformer_lm_forward.19} parent=11 // pred_region
          %s137 = ssub.s32 256, 256
          %138 = vsyncadd [#allocation6], %s137
          %s139 = smul.addr %s25, 64
          %s140 = scalar_lea.hbm %s1, %s139
          %s141 = sshll.u32 [#allocation5], 4
          %s142 = int_to_ptr.vmem [resolvable:$true] %s141
          %147 = dma.hbm_to_vmem [thread:$0]  %s140, 256, %s142, [#allocation6], 64, 64, 4
        $region16: #{transformer_lm_forward.19} parent=11 // pred_fallthru
          _
      $region12: #{transformer_lm_forward.19} parent=5 // pred_fallthru
        _
      %p148 = scmp.lt.s32.totalorder %s15, 2
      // Predicated region
      $region17: #{transformer_lm_forward.19} parent=5 // pred_check
        %p149 = pneg %p148
      $region18: #{transformer_lm_forward.19} parent=5 // pred_check_branch
        %151 = sbr.rel (%p149) target = $region20
      $region19: #{transformer_lm_forward.19} parent=5 // pred_region
        // Predicated region
        $region21: #{transformer_lm_forward.19} parent=19 // pred_check
          %p152 = pneg %p56
        $region22: #{transformer_lm_forward.19} parent=19 // pred_check_branch
          %154 = sbr.rel (%p152) target = $region24
        $region23: #{transformer_lm_forward.19} parent=19 // pred_region
          %s155 = sand.u32 %s46, 1
          %s156 = scalar_lea.sflag [#allocation3], %s155
          %s157 = sand.u32 %s46, 1
          %s158 = smul.addr %s157, 4
          %s159 = scalar_lea.vmem [#allocation2], %s158
          %s161 = ssub.s32 64, 64
          %162 = vsyncadd %s156, %s161
          %s163 = sadd.s32 %s24, %s23
          %s164 = smul.addr %s163, 64
          %s165 = scalar_lea.hbm %s0, %s164
          %s167 = sshll.u32 %s159, 4
          %s168 = int_to_ptr.vmem [resolvable:$true] %s167
          %170 = dma.hbm_to_vmem [thread:$0]  %s165, 64, %s168, %s156
        $region24: #{transformer_lm_forward.19} parent=19 // pred_fallthru
          _
      $region20: #{transformer_lm_forward.19} parent=5 // pred_fallthru
        _
      %p171 = scmp.le.s32.totalorder 1, %s15
      %p172 = scmp.lt.s32.totalorder %s15, 3
      %p173 = pnand %p171, %p172
      %p174 = pneg %p173
      // Predicated region
      $region25: #{transformer_lm_forward.19} parent=5 // pred_check
        _
      $region26: #{transformer_lm_forward.19} parent=5 // pred_check_branch
        %176 = sbr.rel (%p173) target = $region28
      $region27: #{transformer_lm_forward.19} parent=5 // pred_region
        %s177 = ssub.s32 %s15, 1
        %s178 = sand.u32 %s49, 1
        %s179 = scalar_lea.sflag [#allocation3], %s178
        %s180 = sand.u32 %s49, 1
        %s181 = smul.addr %s180, 4
        %s182 = scalar_lea.vmem [#allocation2], %s181
        // Predicated region
        $region29: #{transformer_lm_forward.19} parent=27 // pred_check
          %p183 = pneg %p62
        $region30: #{transformer_lm_forward.19} parent=27 // pred_check_branch
          %185 = sbr.rel (%p183) target = $region32
        $region31: #{transformer_lm_forward.19} parent=27 // pred_region
          %186 = dma.done %s179, 64
        $region32: #{transformer_lm_forward.19} parent=27 // pred_fallthru
          _
        // Predicated region
        $region33: #{transformer_lm_forward.19} parent=27 // pred_check
          %p187 = pneg %p88
        $region34: #{transformer_lm_forward.19} parent=27 // pred_check_branch
          %189 = sbr.rel (%p187) target = $region36
        $region35: #{transformer_lm_forward.19} parent=27 // pred_region
          %190 = dma.done [#allocation6], 256
        $region36: #{transformer_lm_forward.19} parent=27 // pred_fallthru
          _
        %s191 = sand.u32 %s49, 1
        %s192 = scalar_lea.sflag [#allocation3], %s191
        %s193 = sand.u32 %s49, 1
        %s194 = smul.addr %s193, 4
        %s195 = scalar_lea.vmem [#allocation2], %s194
        %p196 = pneg %p62
        %p197 = pneg %p59
        %p198 = pneg %p88
        %p199 = pneg %p85
        %p200 = pneg %p118
        %p201 = pneg %p115
        %s202 = sand.u32 %s105, 1
        %s203 = scalar_lea.sflag [#allocation4], %s202
        %s204 = sand.u32 %s105, 1
        %s205 = smul.addr %s204, 8
        %s206 = scalar_lea.vmem [#allocation7], %s205
        %v208 = vld [vmem:[%s182] sm:$0xf]
        %v209 = vld [vmem:[#allocation5] sm:$0xf]
        %v210 = vld [vmem:[#allocation5 + $0x4] sm:$0xf]
        %v211 = vld [vmem:[#allocation5 + $0x8] sm:$0xf]
        %v212 = vld [vmem:[#allocation5 + $0xc] sm:$0xf]
        %v217 = vunpack.c.l.b16 %v209
        %v218 = vunpack.c.l.b16 %v210
        %v219 = vunpack.c.l.b16 %v211
        %v220 = vunpack.c.l.b16 %v212
        %v221 = vpack.c.b16 %v218, %v217
        %v222 = vpack.c.b16 %v220, %v219
        %vm225 = vcmask 261120
        %v227 = vsel %vm225, %v208, 0
        %229 = vmatprep.subr.bf16.mxu0 0
        %230 = vmatpush1.bf16.msra.mxu0 %v221
        %231 = vmatprep.subr.bf16.mxu0 0
        %232 = vmatpush1.bf16.msra.mxu0 %v222
        %233 = vmatprep.subr.bf16.mxu0 0
        %234 = vmatpush1.bf16.msra.mxu0 0
        %235 = vmatprep.subr.bf16.mxu0 0
        %236 = vmatpush1.bf16.msra.mxu0 0
        %237 = vmatprep.subr.bf16.mxu0 0
        %238 = vmatpush1.bf16.msra.mxu0 0
        %239 = vmatprep.subr.bf16.mxu0 0
        %240 = vmatpush1.bf16.msra.mxu0 0
        %241 = vmatprep.subr.bf16.mxu0 0
        %242 = vmatpush1.bf16.msra.mxu0 0
        %243 = vmatprep.subr.bf16.mxu0 0
        %244 = vmatpush1.bf16.msra.mxu0 0
        %245 = vmatprep.subr.bf16.mxu0 0
        %246 = vmatpush1.bf16.msra.mxu0 0
        %247 = vmatprep.subr.bf16.mxu0 0
        %248 = vmatpush1.bf16.msra.mxu0 0
        %249 = vmatprep.subr.bf16.mxu0 0
        %250 = vmatpush1.bf16.msra.mxu0 0
        %251 = vmatprep.subr.bf16.mxu0 0
        %252 = vmatpush1.bf16.msra.mxu0 0
        %253 = vmatprep.subr.bf16.mxu0 0
        %254 = vmatpush1.bf16.msra.mxu0 0
        %255 = vmatprep.subr.bf16.mxu0 0
        %256 = vmatpush1.bf16.msra.mxu0 0
        %257 = vmatprep.subr.bf16.mxu0 0
        %258 = vmatpush1.bf16.msra.mxu0 0
        %259 = vmatprep.subr.bf16.mxu0 0
        %260 = vmatpush1.bf16.msra.mxu0 0
        %261 = vmatprep.mubr.bf16.mxu0 0
        %262 = vmatmul.mubr.bf16.gmra.mrb[0].mxu0 %v227
        %v263 = vpop.f32.mrb[0].mxu0
        %v264 = vadd.f32 0.0, %v263
        %v265 = vpop.f32.mrb[0].mxu0
        %v266 = vpop.f32.mrb[0].mxu0
        %v267 = vpop.f32.mrb[0].mxu0
        %268 = vdwg.mxu0
        %vm269 = vcmask 523264
        %270 = vst.msk [vmem:[%s206] sm:$0xff] %vm269, %v264
        %s271 = sand.u32 %s105, 1
        %s272 = scalar_lea.sflag [#allocation4], %s271
        %s273 = sand.u32 %s105, 1
        %s274 = smul.addr %s273, 8
        %s275 = scalar_lea.vmem [#allocation7], %s274
        // Predicated region
        $region37: #{transformer_lm_forward.19} parent=27 // pred_check
          %p276 = pneg %p115
        $region38: #{transformer_lm_forward.19} parent=27 // pred_check_branch
          %278 = sbr.rel (%p276) target = $region40
        $region39: #{transformer_lm_forward.19} parent=27 // pred_region
          %s280 = ssub.s32 128, 128
          %281 = vsyncadd %s272, %s280
          %s282 = sadd.s32 %s25, %s27
          %s283 = sadd.s32 %s282, %s26
          %s284 = smul.addr %s283, 128
          %s285 = scalar_lea.hbm %s2, %s284
          %s287 = sshll.u32 %s275, 4
          %s288 = int_to_ptr.vmem [resolvable:$true] %s287
          %290 = dma.vmem_to_hbm [thread:$0]  %s288, 128, %s285, %s272
        $region40: #{transformer_lm_forward.19} parent=27 // pred_fallthru
          _
      $region28: #{transformer_lm_forward.19} parent=5 // pred_fallthru
        _
      %p291 = scmp.le.s32.totalorder 2, %s15
      // Predicated region
      $region41: #{transformer_lm_forward.19} parent=5 // pred_check
        %p292 = pneg %p291
      $region42: #{transformer_lm_forward.19} parent=5 // pred_check_branch
        %294 = sbr.rel (%p292) target = $region44
      $region43: #{transformer_lm_forward.19} parent=5 // pred_region
        %s295 = ssub.s32 %s15, 2
        // Predicated region
        $region45: #{transformer_lm_forward.19} parent=43 // pred_check
          %p296 = pneg %p121
        $region46: #{transformer_lm_forward.19} parent=43 // pred_check_branch
          %298 = sbr.rel (%p296) target = $region48
        $region47: #{transformer_lm_forward.19} parent=43 // pred_region
          %s299 = sand.u32 %s106, 1
          %s300 = scalar_lea.sflag [#allocation4], %s299
          %s301 = sand.u32 %s106, 1
          %s302 = smul.addr %s301, 8
          %s303 = scalar_lea.vmem [#allocation7], %s302
          %304 = dma.done %s300, 128
        $region48: #{transformer_lm_forward.19} parent=43 // pred_fallthru
          _
      $region44: #{transformer_lm_forward.19} parent=5 // pred_fallthru
        _
    $region6: #{transformer_lm_forward.19} parent=1 // loop_footer
      %s19 = sadd.s32 1, %s15
    $region7: #{transformer_lm_forward.19} parent=1 // loop_footer_branch
      %14 = sbr.rel target = $region3
    $region8: #{transformer_lm_forward.19} parent=1 // loop_exit
      _
    %305 = vsyncpa [#allocation3], 1
    %s306 = scalar_lea.sflag [#allocation3], 1
    %307 = vsyncpa %s306, 1
    %308 = vsyncpa [#allocation6], 1
    %309 = vsyncpa [#allocation4], 1
    %s310 = scalar_lea.sflag [#allocation4], 1
    %311 = vsyncpa %s310, 1

</llo_original>
